<compile_context>
chip_gen: v6e
topology: v6e:2x2x1
jax: 0.10.0
libtpu: 0.0.40
codegen_flags: <defaults>
</compile_context>

<pallas_src>
import functools

import jax
import jax.numpy as jnp
import numpy as np
from jax.experimental import pallas as pl
from jax.experimental.pallas import tpu as pltpu

K_IN = 28 * 28       # 784 flattened pixels
K_PAD = 896          # 7 * 128 : lane-aligned contraction dim for layer 1
H1 = 1024
H2 = 256
N_OUT = 3
N_PAD = 128          # lane-aligned output width (sliced back to 3 in the wrapper)
NEG_SLOPE = 0.2


def _round_up(n, m):
    return (n + m - 1) // m * m


def discriminator_kernel(x_ref, w1_ref, b1_ref, w2_ref, b2_ref, w3_ref, b3_ref, out_ref):
    """Fused 3-layer MLP forward with LeakyReLU(0.2) between layers.

    x_ref: (TM, 896) bf16 batch tile.  Weights bf16, biases f32, accumulation f32.
    """
    x = x_ref[...]

    # Layer 1: (TM,896) @ (896,1024) + (1,1024)
    h1 = jnp.dot(x, w1_ref[...], preferred_element_type=jnp.float32) + b1_ref[...]
    h1 = jnp.maximum(h1, NEG_SLOPE * h1)                       # LeakyReLU(0.2)

    # Layer 2: (TM,1024) @ (1024,256) + (1,256)
    h2 = jnp.dot(h1.astype(jnp.bfloat16), w2_ref[...],
                 preferred_element_type=jnp.float32) + b2_ref[...]
    h2 = jnp.maximum(h2, NEG_SLOPE * h2)                       # LeakyReLU(0.2)

    # Layer 3: (TM,256) @ (256,128 padded) + (1,128 padded)
    out = jnp.dot(h2.astype(jnp.bfloat16), w3_ref[...],
                  preferred_element_type=jnp.float32) + b3_ref[...]
    out_ref[...] = out.astype(out_ref.dtype)


def init_params(key):
    """Torch-style init (U[-1/sqrt(fan_in), 1/sqrt(fan_in)]), f32, weights as (in, out)."""
    dims = [(K_IN, H1), (H1, H2), (H2, N_OUT)]
    params = []
    keys = jax.random.split(key, 2 * len(dims))
    for i, (fan_in, fan_out) in enumerate(dims):
        bound = 1.0 / np.sqrt(fan_in)
        w = jax.random.uniform(keys[2 * i], (fan_in, fan_out),
                               minval=-bound, maxval=bound, dtype=jnp.float32)
        b = jax.random.uniform(keys[2 * i + 1], (fan_out,),
                               minval=-bound, maxval=bound, dtype=jnp.float32)
        params.extend([w, b])
    return tuple(params)


def prepare_params(params):
    """Pad + cast the f32 (in,out)-layout params for the kernel.

    Weights -> bf16 with K padded to 896 (zero rows) and final N padded to 128 (zero cols);
    biases -> f32 shaped (1, N) (final bias zero-padded to 128).
    """
    w1, b1, w2, b2, w3, b3 = params
    w1p = jnp.pad(w1, ((0, K_PAD - K_IN), (0, 0))).astype(jnp.bfloat16)
    w2p = w2.astype(jnp.bfloat16)
    w3p = jnp.pad(w3, ((0, 0), (0, N_PAD - N_OUT))).astype(jnp.bfloat16)
    b1p = b1.reshape(1, H1).astype(jnp.float32)
    b2p = b2.reshape(1, H2).astype(jnp.float32)
    b3p = jnp.pad(b3.reshape(1, N_OUT), ((0, 0), (0, N_PAD - N_OUT))).astype(jnp.float32)
    return w1p, b1p, w2p, b2p, w3p, b3p


@functools.partial(jax.jit, static_argnums=())
def discriminator_forward(img, prepared):
    """img: (B, 1, 28, 28) NCHW.  Returns (B, 3) validity logits (f32)."""
    b = img.shape[0]
    w1, b1, w2, b2, w3, b3 = prepared

    x = img.reshape(b, -1).astype(jnp.float32)                 # (B, 784), == img.view(B, -1)
    x = jnp.pad(x, ((0, 0), (0, K_PAD - K_IN)))                # lane-align K: 784 -> 896

    # Batch tile: MXU-aligned 256 for big batches, minimal 8-aligned tile for small ones.
    tm = 256 if b >= 256 else _round_up(b, 8)
    bp = _round_up(b, tm)
    if bp != b:
        x = jnp.pad(x, ((0, bp - b), (0, 0)))
    x = x.astype(jnp.bfloat16)

    grid = (bp // tm,)
    batched = lambda i: (i, 0)        # activation / output tiles march over the batch
    resident = lambda i: (0, 0)       # weights & biases: same block every step -> DMA'd once

    flops = 2 * b * (K_IN * H1 + H1 * H2 + H2 * N_OUT)
    bytes_accessed = ((w1.size + w2.size + w3.size) * 2            # bf16 weights
                      + (b1.size + b2.size + b3.size) * 4          # f32 biases
                      + bp * K_PAD * 2 + bp * N_PAD * 4)           # x in, out

    out = pl.pallas_call(
        discriminator_kernel,
        out_shape=jax.ShapeDtypeStruct((bp, N_PAD), jnp.float32),
        grid=grid,
        in_specs=[
            pl.BlockSpec((tm, K_PAD), batched),     # x tile
            pl.BlockSpec((K_PAD, H1), resident),    # w1
            pl.BlockSpec((1, H1), resident),        # b1
            pl.BlockSpec((H1, H2), resident),       # w2
            pl.BlockSpec((1, H2), resident),        # b2
            pl.BlockSpec((H2, N_PAD), resident),    # w3 (padded)
            pl.BlockSpec((1, N_PAD), resident),     # b3 (padded)
        ],
        out_specs=pl.BlockSpec((tm, N_PAD), batched),
        compiler_params=pltpu.CompilerParams(
            dimension_semantics=("parallel",)),
        cost_estimate=pl.CostEstimate(
            flops=flops, transcendentals=0, bytes_accessed=bytes_accessed),
    )(x, w1, b1, w2, b2, w3, b3)

    return out[:b, :N_OUT]


def reference_forward_f32(img, params):
    """Pure-JAX f32 reference of the original PyTorch module."""
    w1, b1, w2, b2, w3, b3 = params
    x = img.reshape(img.shape[0], -1).astype(jnp.float32)
    h1 = x @ w1 + b1
    h1 = jnp.where(h1 > 0, h1, NEG_SLOPE * h1)
    h2 = h1 @ w2 + b2
    h2 = jnp.where(h2 > 0, h2, NEG_SLOPE * h2)
    return h2 @ w3 + b3


def reference_forward_bf16(img, params):
    """Pure-JAX reference matching the kernel's bf16-weight / f32-accumulate precision."""
    w1, b1, w2, b2, w3, b3 = params
    x = img.reshape(img.shape[0], -1).astype(jnp.bfloat16)
    h1 = jnp.dot(x, w1.astype(jnp.bfloat16), preferred_element_type=jnp.float32) + b1
    h1 = jnp.maximum(h1, NEG_SLOPE * h1)
    h2 = jnp.dot(h1.astype(jnp.bfloat16), w2.astype(jnp.bfloat16),
                 preferred_element_type=jnp.float32) + b2
    h2 = jnp.maximum(h2, NEG_SLOPE * h2)
    return jnp.dot(h2.astype(jnp.bfloat16), w3.astype(jnp.bfloat16),
                   preferred_element_type=jnp.float32) + b3


if __name__ == "__main__":
    key = jax.random.PRNGKey(0)
    k_params, k_img = jax.random.split(key)

    params = init_params(k_params)
    prepared = prepare_params(params)

    # Small batch of MNIST-shaped NCHW inputs (the 28*28 flatten in the module implies this).
    img = jax.random.normal(k_img, (8, 1, 28, 28), dtype=jnp.float32)

    out = discriminator_forward(img, prepared)
    out = jax.block_until_ready(out)
    assert out.shape == (8, 3)

    # Tight check against a reference with identical (bf16 weight, f32 accumulate) precision.
    ref_bf16 = reference_forward_bf16(img, params)
    np.testing.assert_allclose(np.asarray(out), np.asarray(ref_bf16), rtol=1e-2, atol=1e-2)

    # Looser semantic check against the full-f32 reference (bf16 weight quantization error).
    ref_f32 = reference_forward_f32(img, params)
    np.testing.assert_allclose(np.asarray(out), np.asarray(ref_f32), rtol=5e-2, atol=5e-2)

    print("KERNEL_OK")
</pallas_src>

<mosaic_0001>
module attributes {stable_mosaic.version = 11 : i64} {
  func.func @discriminator_kernel(%arg0: i32, %arg1: memref<8x896xbf16, #tpu.memory_space<vmem>>, %arg2: memref<896x1024xbf16, #tpu.memory_space<vmem>>, %arg3: memref<1x1024xf32, #tpu.memory_space<vmem>>, %arg4: memref<1024x256xbf16, #tpu.memory_space<vmem>>, %arg5: memref<1x256xf32, #tpu.memory_space<vmem>>, %arg6: memref<256x128xbf16, #tpu.memory_space<vmem>>, %arg7: memref<1x128xf32, #tpu.memory_space<vmem>>, %arg8: memref<8x128xf32, #tpu.memory_space<vmem>>) attributes {dimension_semantics = [#tpu.dimension_semantics<parallel>], iteration_bounds = array<i64: 1>, scalar_prefetch = 0 : i64, scratch_operands = 0 : i64, tpu.core_type = #tpu.core_type<tc>, window_params = [{transform_indices = @transform_0, window_bounds = array<i64: 8, 896>}, {pipeline_mode = #tpu.pipeline_mode<synchronous>, transform_indices = @transform_1, window_bounds = array<i64: 896, 1024>}, {pipeline_mode = #tpu.pipeline_mode<synchronous>, transform_indices = @transform_2, window_bounds = array<i64: 1, 1024>}, {pipeline_mode = #tpu.pipeline_mode<synchronous>, transform_indices = @transform_3, window_bounds = array<i64: 1024, 256>}, {pipeline_mode = #tpu.pipeline_mode<synchronous>, transform_indices = @transform_4, window_bounds = array<i64: 1, 256>}, {pipeline_mode = #tpu.pipeline_mode<synchronous>, transform_indices = @transform_5, window_bounds = array<i64: 256, 128>}, {pipeline_mode = #tpu.pipeline_mode<synchronous>, transform_indices = @transform_6, window_bounds = array<i64: 1, 128>}, {transform_indices = @transform_7, window_bounds = array<i64: 8, 128>}]} {
    %c0 = arith.constant 0 : index
    %c0_0 = arith.constant 0 : index
    %0 = vector.load %arg1[%c0, %c0_0] : memref<8x896xbf16, #tpu.memory_space<vmem>>, vector<8x896xbf16>
    %c0_1 = arith.constant 0 : index
    %c0_2 = arith.constant 0 : index
    %1 = vector.load %arg2[%c0_1, %c0_2] : memref<896x1024xbf16, #tpu.memory_space<vmem>>, vector<896x1024xbf16>
    %cst = arith.constant dense<0.000000e+00> : vector<8x1024xf32>
    %2 = tpu.matmul %0, %1, %cst {dimension_numbers = #tpu.dot_dimension_numbers<[1], [0], [0], [1], [0, 0, 1, 1], [], []>} : vector<8x896xbf16>, vector<896x1024xbf16>, vector<8x1024xf32> -> vector<8x1024xf32>
    %c0_3 = arith.constant 0 : index
    %c0_4 = arith.constant 0 : index
    %3 = vector.load %arg3[%c0_3, %c0_4] : memref<1x1024xf32, #tpu.memory_space<vmem>>, vector<1x1024xf32>
    %4 = vector.broadcast %3 : vector<1x1024xf32> to vector<8x1024xf32>
    %5 = arith.addf %2, %4 : vector<8x1024xf32>
    %cst_5 = arith.constant 2.000000e-01 : f32
    %6 = vector.broadcast %cst_5 : f32 to vector<8x1024xf32>
    %7 = arith.mulf %6, %5 : vector<8x1024xf32>
    %8 = arith.maximumf %5, %7 : vector<8x1024xf32>
    %9 = arith.truncf %8 : vector<8x1024xf32> to vector<8x1024xbf16>
    %c0_6 = arith.constant 0 : index
    %c0_7 = arith.constant 0 : index
    %10 = vector.load %arg4[%c0_6, %c0_7] : memref<1024x256xbf16, #tpu.memory_space<vmem>>, vector<1024x256xbf16>
    %cst_8 = arith.constant dense<0.000000e+00> : vector<8x256xf32>
    %11 = tpu.matmul %9, %10, %cst_8 {dimension_numbers = #tpu.dot_dimension_numbers<[1], [0], [0], [1], [0, 0, 1, 1], [], []>} : vector<8x1024xbf16>, vector<1024x256xbf16>, vector<8x256xf32> -> vector<8x256xf32>
    %c0_9 = arith.constant 0 : index
    %c0_10 = arith.constant 0 : index
    %12 = vector.load %arg5[%c0_9, %c0_10] : memref<1x256xf32, #tpu.memory_space<vmem>>, vector<1x256xf32>
    %13 = vector.broadcast %12 : vector<1x256xf32> to vector<8x256xf32>
    %14 = arith.addf %11, %13 : vector<8x256xf32>
    %cst_11 = arith.constant 2.000000e-01 : f32
    %15 = vector.broadcast %cst_11 : f32 to vector<8x256xf32>
    %16 = arith.mulf %15, %14 : vector<8x256xf32>
    %17 = arith.maximumf %14, %16 : vector<8x256xf32>
    %18 = arith.truncf %17 : vector<8x256xf32> to vector<8x256xbf16>
    %c0_12 = arith.constant 0 : index
    %c0_13 = arith.constant 0 : index
    %19 = vector.load %arg6[%c0_12, %c0_13] : memref<256x128xbf16, #tpu.memory_space<vmem>>, vector<256x128xbf16>
    %cst_14 = arith.constant dense<0.000000e+00> : vector<8x128xf32>
    %20 = tpu.matmul %18, %19, %cst_14 {dimension_numbers = #tpu.dot_dimension_numbers<[1], [0], [0], [1], [0, 0, 1, 1], [], []>} : vector<8x256xbf16>, vector<256x128xbf16>, vector<8x128xf32> -> vector<8x128xf32>
    %c0_15 = arith.constant 0 : index
    %c0_16 = arith.constant 0 : index
    %21 = vector.load %arg7[%c0_15, %c0_16] : memref<1x128xf32, #tpu.memory_space<vmem>>, vector<1x128xf32>
    %22 = vector.broadcast %21 : vector<1x128xf32> to vector<8x128xf32>
    %23 = arith.addf %20, %22 : vector<8x128xf32>
    %c0_17 = arith.constant 0 : index
    %c0_18 = arith.constant 0 : index
    %24 = vector.load %arg8[%c0_17, %c0_18] : memref<8x128xf32, #tpu.memory_space<vmem>>, vector<8x128xf32>
    tpu.vector_store %arg8[%c0_17, %c0_18], %23 {strides = array<i32>} : memref<8x128xf32, #tpu.memory_space<vmem>>, vector<8x128xf32>,
    return
  }
  func.func @transform_0(%arg0: i32) -> (i32, i32) {
    %c0_i32 = arith.constant 0 : i32
    %c0_i32_0 = arith.constant 0 : i32
    return %arg0, %c0_i32 : i32, i32
  }
  func.func @transform_1(%arg0: i32) -> (i32, i32) {
    %c0_i32 = arith.constant 0 : i32
    %c0_i32_0 = arith.constant 0 : i32
    %c0_i32_1 = arith.constant 0 : i32
    return %c0_i32, %c0_i32_0 : i32, i32
  }
  func.func @transform_2(%arg0: i32) -> (i32, i32) {
    %c0_i32 = arith.constant 0 : i32
    %c0_i32_0 = arith.constant 0 : i32
    %c0_i32_1 = arith.constant 0 : i32
    return %c0_i32, %c0_i32_0 : i32, i32
  }
  func.func @transform_3(%arg0: i32) -> (i32, i32) {
    %c0_i32 = arith.constant 0 : i32
    %c0_i32_0 = arith.constant 0 : i32
    %c0_i32_1 = arith.constant 0 : i32
    return %c0_i32, %c0_i32_0 : i32, i32
  }
  func.func @transform_4(%arg0: i32) -> (i32, i32) {
    %c0_i32 = arith.constant 0 : i32
    %c0_i32_0 = arith.constant 0 : i32
    %c0_i32_1 = arith.constant 0 : i32
    return %c0_i32, %c0_i32_0 : i32, i32
  }
  func.func @transform_5(%arg0: i32) -> (i32, i32) {
    %c0_i32 = arith.constant 0 : i32
    %c0_i32_0 = arith.constant 0 : i32
    %c0_i32_1 = arith.constant 0 : i32
    return %c0_i32, %c0_i32_0 : i32, i32
  }
  func.func @transform_6(%arg0: i32) -> (i32, i32) {
    %c0_i32 = arith.constant 0 : i32
    %c0_i32_0 = arith.constant 0 : i32
    %c0_i32_1 = arith.constant 0 : i32
    return %c0_i32, %c0_i32_0 : i32, i32
  }
  func.func @transform_7(%arg0: i32) -> (i32, i32) {
    %c0_i32 = arith.constant 0 : i32
    %c0_i32_0 = arith.constant 0 : i32
    return %arg0, %c0_i32 : i32, i32
  }
}

</mosaic_0001>

<llo_original>
// kernel: discriminator_forward.1
$region0: #{discriminator_forward.1}
  #allocation0 [shape = 'u32[]', space=smem, size = 0x4, offset = 0x4, fixed_abs, tag = 'smem constant byte address 0x4 - core index']
  #allocation1 [shape = 'u32[144,128]{1,0:T(1,128)}', space=vmem, size = 0x12000, scoped, tag = 'internal scratch']
  %s0 = inlined_call_operand.vmem [shape: bf16[8,896], index: 0, kind: input, shape index: {}]
  %s1 = inlined_call_operand.hbm [shape: bf16[896,1024], index: 1, kind: input, shape index: {}]
  %s2 = inlined_call_operand.hbm [shape: f32[1,1024], index: 2, kind: input, shape index: {}]
  %s3 = inlined_call_operand.hbm [shape: bf16[1024,256], index: 3, kind: input, shape index: {}]
  %s4 = inlined_call_operand.hbm [shape: f32[1,256], index: 4, kind: input, shape index: {}]
  %s5 = inlined_call_operand.hbm [shape: bf16[256,128], index: 5, kind: input, shape index: {}]
  %s6 = inlined_call_operand.hbm [shape: f32[1,128], index: 6, kind: input, shape index: {}]
  %s7 = inlined_call_operand.vmem [shape: f32[8,128], index: 7, kind: output, shape index: {}]
  %s8 = sld [smem:[#allocation0]]
  $region62: #{discriminator_forward.1} parent=0
    _
  %s10 = ssub.s32 1, %s8
  %s11 = scalar_select 0, %s10, %s8
  $region1: #{discriminator_forward.1} parent=0
    #allocation2 [shape = 'u8[1835008]{0}', space=vmem, size = 0x1c0000, scoped, tag = 'input window, operand 1, single buffered']
    #allocation3 [shape = 's32[1]{0}', space=sflag, size = 0x4, scoped, tag = 'scoped memory for discriminator_forward.1']
    #allocation4 [shape = 'u8[4096]{0}', space=vmem, size = 0x1000, scoped, tag = 'input window, operand 2, single buffered']
    #allocation5 [shape = 's32[1]{0}', space=sflag, size = 0x4, scoped, tag = 'scoped memory for discriminator_forward.1']
    #allocation6 [shape = 'u8[524288]{0}', space=vmem, size = 0x80000, scoped, tag = 'input window, operand 3, single buffered']
    #allocation7 [shape = 'u8[1024]{0}', space=vmem, size = 0x400, scoped, tag = 'input window, operand 4, single buffered']
    #allocation8 [shape = 's32[1]{0}', space=sflag, size = 0x4, scoped, tag = 'scoped memory for discriminator_forward.1']
    #allocation9 [shape = 'u8[65536]{0}', space=vmem, size = 0x10000, scoped, tag = 'input window, operand 5, single buffered']
    #allocation10 [shape = 'u8[512]{0}', space=vmem, size = 0x400, scoped, tag = 'input window, operand 6, single buffered']
    #allocation11 [shape = 's32[1]{0}', space=sflag, size = 0x4, scoped, tag = 'scoped memory for discriminator_forward.1']
    %12 = vsyncpa [#allocation3], 0
    %13 = vsyncpa [#allocation5], 0
    %14 = vsyncpa [#allocation8], 0
    %15 = vsyncpa [#allocation11], 0
    // Predicated region
    $region2: #{discriminator_forward.1} parent=1 // pred_check
      _
    $region3: #{discriminator_forward.1} parent=1 // pred_check_branch
      %17 = sbr.rel (0) target = $region5
    $region4: #{discriminator_forward.1} parent=1 // pred_region
      _
    $region5: #{discriminator_forward.1} parent=1 // pred_fallthru
      _
    // Predicated region
    $region6: #{discriminator_forward.1} parent=1 // pred_check
      _
    $region7: #{discriminator_forward.1} parent=1 // pred_check_branch
      %19 = sbr.rel (0) target = $region9
    $region8: #{discriminator_forward.1} parent=1 // pred_region
      %s21 = ssub.s32 57344, 57344
      %22 = vsyncadd [#allocation3], %s21
      %s23 = sshll.u32 [#allocation2], 4
      %s24 = int_to_ptr.vmem [resolvable:$true] %s23
      %29 = dma.hbm_to_vmem [thread:$0]  %s1, 57344, %s24, [#allocation3], 512, 512, 32
    $region9: #{discriminator_forward.1} parent=1 // pred_fallthru
      _
    // Predicated region
    $region10: #{discriminator_forward.1} parent=1 // pred_check
      _
    $region11: #{discriminator_forward.1} parent=1 // pred_check_branch
      %31 = sbr.rel (0) target = $region13
    $region12: #{discriminator_forward.1} parent=1 // pred_region
      %s33 = ssub.s32 128, 128
      %34 = vsyncadd [#allocation5], %s33
      %s36 = sshll.u32 [#allocation4], 4
      %s37 = int_to_ptr.vmem [resolvable:$true] %s36
      %39 = dma.hbm_to_vmem [thread:$0]  %s2, 128, %s37, [#allocation5]
    $region13: #{discriminator_forward.1} parent=1 // pred_fallthru
      _
    // Predicated region
    $region14: #{discriminator_forward.1} parent=1 // pred_check
      _
    $region15: #{discriminator_forward.1} parent=1 // pred_check_branch
      %41 = sbr.rel (0) target = $region17
    $region16: #{discriminator_forward.1} parent=1 // pred_region
      %s43 = ssub.s32 16384, 16384
      %44 = vsyncadd [#allocation5], %s43
      %s45 = sshll.u32 [#allocation6], 4
      %s46 = int_to_ptr.vmem [resolvable:$true] %s45
      %51 = dma.hbm_to_vmem [thread:$0]  %s3, 16384, %s46, [#allocation5], 128, 128, 8
    $region17: #{discriminator_forward.1} parent=1 // pred_fallthru
      _
    // Predicated region
    $region18: #{discriminator_forward.1} parent=1 // pred_check
      _
    $region19: #{discriminator_forward.1} parent=1 // pred_check_branch
      %53 = sbr.rel (0) target = $region21
    $region20: #{discriminator_forward.1} parent=1 // pred_region
      %s55 = ssub.s32 32, 32
      %56 = vsyncadd [#allocation8], %s55
      %s58 = sshll.u32 [#allocation7], 4
      %s59 = int_to_ptr.vmem [resolvable:$true] %s58
      %61 = dma.hbm_to_vmem [thread:$0]  %s4, 32, %s59, [#allocation8]
    $region21: #{discriminator_forward.1} parent=1 // pred_fallthru
      _
    // Predicated region
    $region22: #{discriminator_forward.1} parent=1 // pred_check
      _
    $region23: #{discriminator_forward.1} parent=1 // pred_check_branch
      %63 = sbr.rel (0) target = $region25
    $region24: #{discriminator_forward.1} parent=1 // pred_region
      %s65 = ssub.s32 2048, 2048
      %66 = vsyncadd [#allocation8], %s65
      %s67 = sshll.u32 [#allocation9], 4
      %s68 = int_to_ptr.vmem [resolvable:$true] %s67
      %73 = dma.hbm_to_vmem [thread:$0]  %s5, 2048, %s68, [#allocation8], 64, 64, 4
    $region25: #{discriminator_forward.1} parent=1 // pred_fallthru
      _
    // Predicated region
    $region26: #{discriminator_forward.1} parent=1 // pred_check
      _
    $region27: #{discriminator_forward.1} parent=1 // pred_check_branch
      %75 = sbr.rel (0) target = $region29
    $region28: #{discriminator_forward.1} parent=1 // pred_region
      %s77 = ssub.s32 16, 16
      %78 = vsyncadd [#allocation11], %s77
      %s80 = sshll.u32 [#allocation10], 4
      %s81 = int_to_ptr.vmem [resolvable:$true] %s80
      %83 = dma.hbm_to_vmem [thread:$0]  %s6, 16, %s81, [#allocation11]
    $region29: #{discriminator_forward.1} parent=1 // pred_fallthru
      _
    // Predicated region
    $region30: #{discriminator_forward.1} parent=1 // pred_check
      _
    $region31: #{discriminator_forward.1} parent=1 // pred_check_branch
      %85 = sbr.rel (0) target = $region33
    $region32: #{discriminator_forward.1} parent=1 // pred_region
      %86 = dma.done [#allocation3], 57344
    $region33: #{discriminator_forward.1} parent=1 // pred_fallthru
      _
    // Predicated region
    $region34: #{discriminator_forward.1} parent=1 // pred_check
      _
    $region35: #{discriminator_forward.1} parent=1 // pred_check_branch
      %88 = sbr.rel (0) target = $region37
    $region36: #{discriminator_forward.1} parent=1 // pred_region
      %89 = dma.done [#allocation5], 128
    $region37: #{discriminator_forward.1} parent=1 // pred_fallthru
      _
    // Predicated region
    $region38: #{discriminator_forward.1} parent=1 // pred_check
      _
    $region39: #{discriminator_forward.1} parent=1 // pred_check_branch
      %91 = sbr.rel (0) target = $region41
    $region40: #{discriminator_forward.1} parent=1 // pred_region
      %92 = dma.done [#allocation5], 16384
    $region41: #{discriminator_forward.1} parent=1 // pred_fallthru
      _
    // Predicated region
    $region42: #{discriminator_forward.1} parent=1 // pred_check
      _
    $region43: #{discriminator_forward.1} parent=1 // pred_check_branch
      %94 = sbr.rel (0) target = $region45
    $region44: #{discriminator_forward.1} parent=1 // pred_region
      %95 = dma.done [#allocation8], 32
    $region45: #{discriminator_forward.1} parent=1 // pred_fallthru
      _
    // Predicated region
    $region46: #{discriminator_forward.1} parent=1 // pred_check
      _
    $region47: #{discriminator_forward.1} parent=1 // pred_check_branch
      %97 = sbr.rel (0) target = $region49
    $region48: #{discriminator_forward.1} parent=1 // pred_region
      %98 = dma.done [#allocation8], 2048
    $region49: #{discriminator_forward.1} parent=1 // pred_fallthru
      _
    // Predicated region
    $region50: #{discriminator_forward.1} parent=1 // pred_check
      _
    $region51: #{discriminator_forward.1} parent=1 // pred_check_branch
      %100 = sbr.rel (0) target = $region53
    $region52: #{discriminator_forward.1} parent=1 // pred_region
      %101 = dma.done [#allocation11], 16
    $region53: #{discriminator_forward.1} parent=1 // pred_fallthru
      _
    %v103 = vld [vmem:[%s0] sm:$0xff]
    %v104 = vld [vmem:[%s0 + $0x8] sm:$0xff]
    %v105 = vld [vmem:[%s0 + $0x10] sm:$0xff]
    %v106 = vld [vmem:[%s0 + $0x18] sm:$0xf]
    %v107 = vld [vmem:[#allocation2] sm:$0xff]
    %v108 = vld [vmem:[#allocation2 + $0x8] sm:$0xff]
    %v109 = vld [vmem:[#allocation2 + $0x10] sm:$0xff]
    %v110 = vld [vmem:[#allocation2 + $0x18] sm:$0xff]
    %v111 = vld [vmem:[#allocation2 + $0x20] sm:$0xff]
    %v112 = vld [vmem:[#allocation2 + $0x28] sm:$0xff]
    %v113 = vld [vmem:[#allocation2 + $0x30] sm:$0xff]
    %v114 = vld [vmem:[#allocation2 + $0x38] sm:$0xff]
    %v115 = vld [vmem:[#allocation2 + $0x40] sm:$0xff]
    %v116 = vld [vmem:[#allocation2 + $0x48] sm:$0xff]
    %v117 = vld [vmem:[#allocation2 + $0x50] sm:$0xff]
    %v118 = vld [vmem:[#allocation2 + $0x58] sm:$0xff]
    %v119 = vld [vmem:[#allocation2 + $0x60] sm:$0xff]
    %v120 = vld [vmem:[#allocation2 + $0x68] sm:$0xff]
    %v121 = vld [vmem:[#allocation2 + $0x70] sm:$0xff]
    %v122 = vld [vmem:[#allocation2 + $0x78] sm:$0xff]
    %v123 = vld [vmem:[#allocation2 + $0x80] sm:$0xff]
    %v124 = vld [vmem:[#allocation2 + $0x88] sm:$0xff]
    %v125 = vld [vmem:[#allocation2 + $0x90] sm:$0xff]
    %v126 = vld [vmem:[#allocation2 + $0x98] sm:$0xff]
    %v127 = vld [vmem:[#allocation2 + $0xa0] sm:$0xff]
    %v128 = vld [vmem:[#allocation2 + $0xa8] sm:$0xff]
    %v129 = vld [vmem:[#allocation2 + $0xb0] sm:$0xff]
    %v130 = vld [vmem:[#allocation2 + $0xb8] sm:$0xff]
    %v131 = vld [vmem:[#allocation2 + $0xc0] sm:$0xff]
    %v132 = vld [vmem:[#allocation2 + $0xc8] sm:$0xff]
    %v133 = vld [vmem:[#allocation2 + $0xd0] sm:$0xff]
    %v134 = vld [vmem:[#allocation2 + $0xd8] sm:$0xff]
    %v135 = vld [vmem:[#allocation2 + $0xe0] sm:$0xff]
    %v136 = vld [vmem:[#allocation2 + $0xe8] sm:$0xff]
    %v137 = vld [vmem:[#allocation2 + $0xf0] sm:$0xff]
    %v138 = vld [vmem:[#allocation2 + $0xf8] sm:$0xff]
    %v139 = vld [vmem:[#allocation2 + $0x100] sm:$0xff]
    %v140 = vld [vmem:[#allocation2 + $0x108] sm:$0xff]
    %v141 = vld [vmem:[#allocation2 + $0x110] sm:$0xff]
    %v142 = vld [vmem:[#allocation2 + $0x118] sm:$0xff]
    %v143 = vld [vmem:[#allocation2 + $0x120] sm:$0xff]
    %v144 = vld [vmem:[#allocation2 + $0x128] sm:$0xff]
    %v145 = vld [vmem:[#allocation2 + $0x130] sm:$0xff]
    %v146 = vld [vmem:[#allocation2 + $0x138] sm:$0xff]
    %v147 = vld [vmem:[#allocation2 + $0x140] sm:$0xff]
    %v148 = vld [vmem:[#allocation2 + $0x148] sm:$0xff]
    %v149 = vld [vmem:[#allocation2 + $0x150] sm:$0xff]
    %v150 = vld [vmem:[#allocation2 + $0x158] sm:$0xff]
    %v151 = vld [vmem:[#allocation2 + $0x160] sm:$0xff]
    %v152 = vld [vmem:[#allocation2 + $0x168] sm:$0xff]
    %v153 = vld [vmem:[#allocation2 + $0x170] sm:$0xff]
    %v154 = vld [vmem:[#allocation2 + $0x178] sm:$0xff]
    %v155 = vld [vmem:[#allocation2 + $0x180] sm:$0xff]
    %v156 = vld [vmem:[#allocation2 + $0x188] sm:$0xff]
    %v157 = vld [vmem:[#allocation2 + $0x190] sm:$0xff]
    %v158 = vld [vmem:[#allocation2 + $0x198] sm:$0xff]
    %v159 = vld [vmem:[#allocation2 + $0x1a0] sm:$0xff]
    %v160 = vld [vmem:[#allocation2 + $0x1a8] sm:$0xff]
    %v161 = vld [vmem:[#allocation2 + $0x1b0] sm:$0xff]
    %v162 = vld [vmem:[#allocation2 + $0x1b8] sm:$0xff]
    %v163 = vld [vmem:[#allocation2 + $0x1c0] sm:$0xff]
    %v164 = vld [vmem:[#allocation2 + $0x1c8] sm:$0xff]
    %v165 = vld [vmem:[#allocation2 + $0x1d0] sm:$0xff]
    %v166 = vld [vmem:[#allocation2 + $0x1d8] sm:$0xff]
    %v167 = vld [vmem:[#allocation2 + $0x1e0] sm:$0xff]
    %v168 = vld [vmem:[#allocation2 + $0x1e8] sm:$0xff]
    %v169 = vld [vmem:[#allocation2 + $0x1f0] sm:$0xff]
    %v170 = vld [vmem:[#allocation2 + $0x1f8] sm:$0xff]
    %v171 = vld [vmem:[#allocation2 + $0x200] sm:$0xff]
    %v172 = vld [vmem:[#allocation2 + $0x208] sm:$0xff]
    %v173 = vld [vmem:[#allocation2 + $0x210] sm:$0xff]
    %v174 = vld [vmem:[#allocation2 + $0x218] sm:$0xff]
    %v175 = vld [vmem:[#allocation2 + $0x220] sm:$0xff]
    %v176 = vld [vmem:[#allocation2 + $0x228] sm:$0xff]
    %v177 = vld [vmem:[#allocation2 + $0x230] sm:$0xff]
    %v178 = vld [vmem:[#allocation2 + $0x238] sm:$0xff]
    %v179 = vld [vmem:[#allocation2 + $0x240] sm:$0xff]
    %v180 = vld [vmem:[#allocation2 + $0x248] sm:$0xff]
    %v181 = vld [vmem:[#allocation2 + $0x250] sm:$0xff]
    %v182 = vld [vmem:[#allocation2 + $0x258] sm:$0xff]
    %v183 = vld [vmem:[#allocation2 + $0x260] sm:$0xff]
    %v184 = vld [vmem:[#allocation2 + $0x268] sm:$0xff]
    %v185 = vld [vmem:[#allocation2 + $0x270] sm:$0xff]
    %v186 = vld [vmem:[#allocation2 + $0x278] sm:$0xff]
    %v187 = vld [vmem:[#allocation2 + $0x280] sm:$0xff]
    %v188 = vld [vmem:[#allocation2 + $0x288] sm:$0xff]
    %v189 = vld [vmem:[#allocation2 + $0x290] sm:$0xff]
    %v190 = vld [vmem:[#allocation2 + $0x298] sm:$0xff]
    %v191 = vld [vmem:[#allocation2 + $0x2a0] sm:$0xff]
    %v192 = vld [vmem:[#allocation2 + $0x2a8] sm:$0xff]
    %v193 = vld [vmem:[#allocation2 + $0x2b0] sm:$0xff]
    %v194 = vld [vmem:[#allocation2 + $0x2b8] sm:$0xff]
    %v195 = vld [vmem:[#allocation2 + $0x2c0] sm:$0xff]
    %v196 = vld [vmem:[#allocation2 + $0x2c8] sm:$0xff]
    %v197 = vld [vmem:[#allocation2 + $0x2d0] sm:$0xff]
    %v198 = vld [vmem:[#allocation2 + $0x2d8] sm:$0xff]
    %v199 = vld [vmem:[#allocation2 + $0x2e0] sm:$0xff]
    %v200 = vld [vmem:[#allocation2 + $0x2e8] sm:$0xff]
    %v201 = vld [vmem:[#allocation2 + $0x2f0] sm:$0xff]
    %v202 = vld [vmem:[#allocation2 + $0x2f8] sm:$0xff]
    %v203 = vld [vmem:[#allocation2 + $0x300] sm:$0xff]
    %v204 = vld [vmem:[#allocation2 + $0x308] sm:$0xff]
    %v205 = vld [vmem:[#allocation2 + $0x310] sm:$0xff]
    %v206 = vld [vmem:[#allocation2 + $0x318] sm:$0xff]
    %v207 = vld [vmem:[#allocation2 + $0x320] sm:$0xff]
    %v208 = vld [vmem:[#allocation2 + $0x328] sm:$0xff]
    %v209 = vld [vmem:[#allocation2 + $0x330] sm:$0xff]
    %v210 = vld [vmem:[#allocation2 + $0x338] sm:$0xff]
    %v211 = vld [vmem:[#allocation2 + $0x340] sm:$0xff]
    %v212 = vld [vmem:[#allocation2 + $0x348] sm:$0xff]
    %v213 = vld [vmem:[#allocation2 + $0x350] sm:$0xff]
    %v214 = vld [vmem:[#allocation2 + $0x358] sm:$0xff]
    %v215 = vld [vmem:[#allocation2 + $0x360] sm:$0xff]
    %v216 = vld [vmem:[#allocation2 + $0x368] sm:$0xff]
    %v217 = vld [vmem:[#allocation2 + $0x370] sm:$0xff]
    %v218 = vld [vmem:[#allocation2 + $0x378] sm:$0xff]
    %v219 = vld [vmem:[#allocation2 + $0x380] sm:$0xff]
    %v220 = vld [vmem:[#allocation2 + $0x388] sm:$0xff]
    %v221 = vld [vmem:[#allocation2 + $0x390] sm:$0xff]
    %v222 = vld [vmem:[#allocation2 + $0x398] sm:$0xff]
    %v223 = vld [vmem:[#allocation2 + $0x3a0] sm:$0xff]
    %v224 = vld [vmem:[#allocation2 + $0x3a8] sm:$0xff]
    %v225 = vld [vmem:[#allocation2 + $0x3b0] sm:$0xff]
    %v226 = vld [vmem:[#allocation2 + $0x3b8] sm:$0xff]
    %v227 = vld [vmem:[#allocation2 + $0x3c0] sm:$0xff]
    %v228 = vld [vmem:[#allocation2 + $0x3c8] sm:$0xff]
    %v229 = vld [vmem:[#allocation2 + $0x3d0] sm:$0xff]
    %v230 = vld [vmem:[#allocation2 + $0x3d8] sm:$0xff]
    %v231 = vld [vmem:[#allocation2 + $0x3e0] sm:$0xff]
    %v232 = vld [vmem:[#allocation2 + $0x3e8] sm:$0xff]
    %v233 = vld [vmem:[#allocation2 + $0x3f0] sm:$0xff]
    %v234 = vld [vmem:[#allocation2 + $0x3f8] sm:$0xff]
    %v235 = vld [vmem:[#allocation2 + $0x400] sm:$0xff]
    %v236 = vld [vmem:[#allocation2 + $0x408] sm:$0xff]
    %v237 = vld [vmem:[#allocation2 + $0x410] sm:$0xff]
    %v238 = vld [vmem:[#allocation2 + $0x418] sm:$0xff]
    %v239 = vld [vmem:[#allocation2 + $0x420] sm:$0xff]
    %v240 = vld [vmem:[#allocation2 + $0x428] sm:$0xff]
    %v241 = vld [vmem:[#allocation2 + $0x430] sm:$0xff]
    %v242 = vld [vmem:[#allocation2 + $0x438] sm:$0xff]
    %v243 = vld [vmem:[#allocation2 + $0x440] sm:$0xff]
    %v244 = vld [vmem:[#allocation2 + $0x448] sm:$0xff]
    %v245 = vld [vmem:[#allocation2 + $0x450] sm:$0xff]
    %v246 = vld [vmem:[#allocation2 + $0x458] sm:$0xff]
    %v247 = vld [vmem:[#allocation2 + $0x460] sm:$0xff]
    %v248 = vld [vmem:[#allocation2 + $0x468] sm:$0xff]
    %v249 = vld [vmem:[#allocation2 + $0x470] sm:$0xff]
    %v250 = vld [vmem:[#allocation2 + $0x478] sm:$0xff]
    %v251 = vld [vmem:[#allocation2 + $0x480] sm:$0xff]
    %v252 = vld [vmem:[#allocation2 + $0x488] sm:$0xff]
    %v253 = vld [vmem:[#allocation2 + $0x490] sm:$0xff]
    %v254 = vld [vmem:[#allocation2 + $0x498] sm:$0xff]
    %v255 = vld [vmem:[#allocation2 + $0x4a0] sm:$0xff]
    %v256 = vld [vmem:[#allocation2 + $0x4a8] sm:$0xff]
    %v257 = vld [vmem:[#allocation2 + $0x4b0] sm:$0xff]
    %v258 = vld [vmem:[#allocation2 + $0x4b8] sm:$0xff]
    %v259 = vld [vmem:[#allocation2 + $0x4c0] sm:$0xff]
    %v260 = vld [vmem:[#allocation2 + $0x4c8] sm:$0xff]
    %v261 = vld [vmem:[#allocation2 + $0x4d0] sm:$0xff]
    %v262 = vld [vmem:[#allocation2 + $0x4d8] sm:$0xff]
    %v263 = vld [vmem:[#allocation2 + $0x4e0] sm:$0xff]
    %v264 = vld [vmem:[#allocation2 + $0x4e8] sm:$0xff]
    %v265 = vld [vmem:[#allocation2 + $0x4f0] sm:$0xff]
    %v266 = vld [vmem:[#allocation2 + $0x4f8] sm:$0xff]
    %v267 = vld [vmem:[#allocation2 + $0x500] sm:$0xff]
    %v268 = vld [vmem:[#allocation2 + $0x508] sm:$0xff]
    %v269 = vld [vmem:[#allocation2 + $0x510] sm:$0xff]
    %v270 = vld [vmem:[#allocation2 + $0x518] sm:$0xff]
    %v271 = vld [vmem:[#allocation2 + $0x520] sm:$0xff]
    %v272 = vld [vmem:[#allocation2 + $0x528] sm:$0xff]
    %v273 = vld [vmem:[#allocation2 + $0x530] sm:$0xff]
    %v274 = vld [vmem:[#allocation2 + $0x538] sm:$0xff]
    %v275 = vld [vmem:[#allocation2 + $0x540] sm:$0xff]
    %v276 = vld [vmem:[#allocation2 + $0x548] sm:$0xff]
    %v277 = vld [vmem:[#allocation2 + $0x550] sm:$0xff]
    %v278 = vld [vmem:[#allocation2 + $0x558] sm:$0xff]
    %v279 = vld [vmem:[#allocation2 + $0x560] sm:$0xff]
    %v280 = vld [vmem:[#allocation2 + $0x568] sm:$0xff]
    %v281 = vld [vmem:[#allocation2 + $0x570] sm:$0xff]
    %v282 = vld [vmem:[#allocation2 + $0x578] sm:$0xff]
    %v283 = vld [vmem:[#allocation2 + $0x580] sm:$0xff]
    %v284 = vld [vmem:[#allocation2 + $0x588] sm:$0xff]
    %v285 = vld [vmem:[#allocation2 + $0x590] sm:$0xff]
    %v286 = vld [vmem:[#allocation2 + $0x598] sm:$0xff]
    %v287 = vld [vmem:[#allocation2 + $0x5a0] sm:$0xff]
    %v288 = vld [vmem:[#allocation2 + $0x5a8] sm:$0xff]
    %v289 = vld [vmem:[#allocation2 + $0x5b0] sm:$0xff]
    %v290 = vld [vmem:[#allocation2 + $0x5b8] sm:$0xff]
    %v291 = vld [vmem:[#allocation2 + $0x5c0] sm:$0xff]
    %v292 = vld [vmem:[#allocation2 + $0x5c8] sm:$0xff]
    %v293 = vld [vmem:[#allocation2 + $0x5d0] sm:$0xff]
    %v294 = vld [vmem:[#allocation2 + $0x5d8] sm:$0xff]
    %v295 = vld [vmem:[#allocation2 + $0x5e0] sm:$0xff]
    %v296 = vld [vmem:[#allocation2 + $0x5e8] sm:$0xff]
    %v297 = vld [vmem:[#allocation2 + $0x5f0] sm:$0xff]
    %v298 = vld [vmem:[#allocation2 + $0x5f8] sm:$0xff]
    %v299 = vld [vmem:[#allocation2 + $0x600] sm:$0xff]
    %v300 = vld [vmem:[#allocation2 + $0x608] sm:$0xff]
    %v301 = vld [vmem:[#allocation2 + $0x610] sm:$0xff]
    %v302 = vld [vmem:[#allocation2 + $0x618] sm:$0xff]
    %v303 = vld [vmem:[#allocation2 + $0x620] sm:$0xff]
    %v304 = vld [vmem:[#allocation2 + $0x628] sm:$0xff]
    %v305 = vld [vmem:[#allocation2 + $0x630] sm:$0xff]
    %v306 = vld [vmem:[#allocation2 + $0x638] sm:$0xff]
    %v307 = vld [vmem:[#allocation2 + $0x640] sm:$0xff]
    %v308 = vld [vmem:[#allocation2 + $0x648] sm:$0xff]
    %v309 = vld [vmem:[#allocation2 + $0x650] sm:$0xff]
    %v310 = vld [vmem:[#allocation2 + $0x658] sm:$0xff]
    %v311 = vld [vmem:[#allocation2 + $0x660] sm:$0xff]
    %v312 = vld [vmem:[#allocation2 + $0x668] sm:$0xff]
    %v313 = vld [vmem:[#allocation2 + $0x670] sm:$0xff]
    %v314 = vld [vmem:[#allocation2 + $0x678] sm:$0xff]
    %v315 = vld [vmem:[#allocation2 + $0x680] sm:$0xff]
    %v316 = vld [vmem:[#allocation2 + $0x688] sm:$0xff]
    %v317 = vld [vmem:[#allocation2 + $0x690] sm:$0xff]
    %v318 = vld [vmem:[#allocation2 + $0x698] sm:$0xff]
    %v319 = vld [vmem:[#allocation2 + $0x6a0] sm:$0xff]
    %v320 = vld [vmem:[#allocation2 + $0x6a8] sm:$0xff]
    %v321 = vld [vmem:[#allocation2 + $0x6b0] sm:$0xff]
    %v322 = vld [vmem:[#allocation2 + $0x6b8] sm:$0xff]
    %v323 = vld [vmem:[#allocation2 + $0x6c0] sm:$0xff]
    %v324 = vld [vmem:[#allocation2 + $0x6c8] sm:$0xff]
    %v325 = vld [vmem:[#allocation2 + $0x6d0] sm:$0xff]
    %v326 = vld [vmem:[#allocation2 + $0x6d8] sm:$0xff]
    %v327 = vld [vmem:[#allocation2 + $0x6e0] sm:$0xff]
    %v328 = vld [vmem:[#allocation2 + $0x6e8] sm:$0xff]
    %v329 = vld [vmem:[#allocation2 + $0x6f0] sm:$0xff]
    %v330 = vld [vmem:[#allocation2 + $0x6f8] sm:$0xff]
    %v331 = vld [vmem:[#allocation2 + $0x700] sm:$0xff]
    %v332 = vld [vmem:[#allocation2 + $0x708] sm:$0xff]
    %v333 = vld [vmem:[#allocation2 + $0x710] sm:$0xff]
    %v334 = vld [vmem:[#allocation2 + $0x718] sm:$0xff]
    %v335 = vld [vmem:[#allocation2 + $0x720] sm:$0xff]
    %v336 = vld [vmem:[#allocation2 + $0x728] sm:$0xff]
    %v337 = vld [vmem:[#allocation2 + $0x730] sm:$0xff]
    %v338 = vld [vmem:[#allocation2 + $0x738] sm:$0xff]
    %v339 = vld [vmem:[#allocation2 + $0x740] sm:$0xff]
    %v340 = vld [vmem:[#allocation2 + $0x748] sm:$0xff]
    %v341 = vld [vmem:[#allocation2 + $0x750] sm:$0xff]
    %v342 = vld [vmem:[#allocation2 + $0x758] sm:$0xff]
    %v343 = vld [vmem:[#allocation2 + $0x760] sm:$0xff]
    %v344 = vld [vmem:[#allocation2 + $0x768] sm:$0xff]
    %v345 = vld [vmem:[#allocation2 + $0x770] sm:$0xff]
    %v346 = vld [vmem:[#allocation2 + $0x778] sm:$0xff]
    %v347 = vld [vmem:[#allocation2 + $0x780] sm:$0xff]
    %v348 = vld [vmem:[#allocation2 + $0x788] sm:$0xff]
    %v349 = vld [vmem:[#allocation2 + $0x790] sm:$0xff]
    %v350 = vld [vmem:[#allocation2 + $0x798] sm:$0xff]
    %v351 = vld [vmem:[#allocation2 + $0x7a0] sm:$0xff]
    %v352 = vld [vmem:[#allocation2 + $0x7a8] sm:$0xff]
    %v353 = vld [vmem:[#allocation2 + $0x7b0] sm:$0xff]
    %v354 = vld [vmem:[#allocation2 + $0x7b8] sm:$0xff]
    %v355 = vld [vmem:[#allocation2 + $0x7c0] sm:$0xff]
    %v356 = vld [vmem:[#allocation2 + $0x7c8] sm:$0xff]
    %v357 = vld [vmem:[#allocation2 + $0x7d0] sm:$0xff]
    %v358 = vld [vmem:[#allocation2 + $0x7d8] sm:$0xff]
    %v359 = vld [vmem:[#allocation2 + $0x7e0] sm:$0xff]
    %v360 = vld [vmem:[#allocation2 + $0x7e8] sm:$0xff]
    %v361 = vld [vmem:[#allocation2 + $0x7f0] sm:$0xff]
    %v362 = vld [vmem:[#allocation2 + $0x7f8] sm:$0xff]
    %v363 = vld [vmem:[#allocation2 + $0x800] sm:$0xff]
    %v364 = vld [vmem:[#allocation2 + $0x808] sm:$0xff]
    %v365 = vld [vmem:[#allocation2 + $0x810] sm:$0xff]
    %v366 = vld [vmem:[#allocation2 + $0x818] sm:$0xff]
    %v367 = vld [vmem:[#allocation2 + $0x820] sm:$0xff]
    %v368 = vld [vmem:[#allocation2 + $0x828] sm:$0xff]
    %v369 = vld [vmem:[#allocation2 + $0x830] sm:$0xff]
    %v370 = vld [vmem:[#allocation2 + $0x838] sm:$0xff]
    %v371 = vld [vmem:[#allocation2 + $0x840] sm:$0xff]
    %v372 = vld [vmem:[#allocation2 + $0x848] sm:$0xff]
    %v373 = vld [vmem:[#allocation2 + $0x850] sm:$0xff]
    %v374 = vld [vmem:[#allocation2 + $0x858] sm:$0xff]
    %v375 = vld [vmem:[#allocation2 + $0x860] sm:$0xff]
    %v376 = vld [vmem:[#allocation2 + $0x868] sm:$0xff]
    %v377 = vld [vmem:[#allocation2 + $0x870] sm:$0xff]
    %v378 = vld [vmem:[#allocation2 + $0x878] sm:$0xff]
    %v379 = vld [vmem:[#allocation2 + $0x880] sm:$0xff]
    %v380 = vld [vmem:[#allocation2 + $0x888] sm:$0xff]
    %v381 = vld [vmem:[#allocation2 + $0x890] sm:$0xff]
    %v382 = vld [vmem:[#allocation2 + $0x898] sm:$0xff]
    %v383 = vld [vmem:[#allocation2 + $0x8a0] sm:$0xff]
    %v384 = vld [vmem:[#allocation2 + $0x8a8] sm:$0xff]
    %v385 = vld [vmem:[#allocation2 + $0x8b0] sm:$0xff]
    %v386 = vld [vmem:[#allocation2 + $0x8b8] sm:$0xff]
    %v387 = vld [vmem:[#allocation2 + $0x8c0] sm:$0xff]
    %v388 = vld [vmem:[#allocation2 + $0x8c8] sm:$0xff]
    %v389 = vld [vmem:[#allocation2 + $0x8d0] sm:$0xff]
    %v390 = vld [vmem:[#allocation2 + $0x8d8] sm:$0xff]
    %v391 = vld [vmem:[#allocation2 + $0x8e0] sm:$0xff]
    %v392 = vld [vmem:[#allocation2 + $0x8e8] sm:$0xff]
    %v393 = vld [vmem:[#allocation2 + $0x8f0] sm:$0xff]
    %v394 = vld [vmem:[#allocation2 + $0x8f8] sm:$0xff]
    %v395 = vld [vmem:[#allocation2 + $0x900] sm:$0xff]
    %v396 = vld [vmem:[#allocation2 + $0x908] sm:$0xff]
    %v397 = vld [vmem:[#allocation2 + $0x910] sm:$0xff]
    %v398 = vld [vmem:[#allocation2 + $0x918] sm:$0xff]
    %v399 = vld [vmem:[#allocation2 + $0x920] sm:$0xff]
    %v400 = vld [vmem:[#allocation2 + $0x928] sm:$0xff]
    %v401 = vld [vmem:[#allocation2 + $0x930] sm:$0xff]
    %v402 = vld [vmem:[#allocation2 + $0x938] sm:$0xff]
    %v403 = vld [vmem:[#allocation2 + $0x940] sm:$0xff]
    %v404 = vld [vmem:[#allocation2 + $0x948] sm:$0xff]
    %v405 = vld [vmem:[#allocation2 + $0x950] sm:$0xff]
    %v406 = vld [vmem:[#allocation2 + $0x958] sm:$0xff]
    %v407 = vld [vmem:[#allocation2 + $0x960] sm:$0xff]
    %v408 = vld [vmem:[#allocation2 + $0x968] sm:$0xff]
    %v409 = vld [vmem:[#allocation2 + $0x970] sm:$0xff]
    %v410 = vld [vmem:[#allocation2 + $0x978] sm:$0xff]
    %v411 = vld [vmem:[#allocation2 + $0x980] sm:$0xff]
    %v412 = vld [vmem:[#allocation2 + $0x988] sm:$0xff]
    %v413 = vld [vmem:[#allocation2 + $0x990] sm:$0xff]
    %v414 = vld [vmem:[#allocation2 + $0x998] sm:$0xff]
    %v415 = vld [vmem:[#allocation2 + $0x9a0] sm:$0xff]
    %v416 = vld [vmem:[#allocation2 + $0x9a8] sm:$0xff]
    %v417 = vld [vmem:[#allocation2 + $0x9b0] sm:$0xff]
    %v418 = vld [vmem:[#allocation2 + $0x9b8] sm:$0xff]
    %v419 = vld [vmem:[#allocation2 + $0x9c0] sm:$0xff]
    %v420 = vld [vmem:[#allocation2 + $0x9c8] sm:$0xff]
    %v421 = vld [vmem:[#allocation2 + $0x9d0] sm:$0xff]
    %v422 = vld [vmem:[#allocation2 + $0x9d8] sm:$0xff]
    %v423 = vld [vmem:[#allocation2 + $0x9e0] sm:$0xff]
    %v424 = vld [vmem:[#allocation2 + $0x9e8] sm:$0xff]
    %v425 = vld [vmem:[#allocation2 + $0x9f0] sm:$0xff]
    %v426 = vld [vmem:[#allocation2 + $0x9f8] sm:$0xff]
    %v427 = vld [vmem:[#allocation2 + $0xa00] sm:$0xff]
    %v428 = vld [vmem:[#allocation2 + $0xa08] sm:$0xff]
    %v429 = vld [vmem:[#allocation2 + $0xa10] sm:$0xff]
    %v430 = vld [vmem:[#allocation2 + $0xa18] sm:$0xff]
    %v431 = vld [vmem:[#allocation2 + $0xa20] sm:$0xff]
    %v432 = vld [vmem:[#allocation2 + $0xa28] sm:$0xff]
    %v433 = vld [vmem:[#allocation2 + $0xa30] sm:$0xff]
    %v434 = vld [vmem:[#allocation2 + $0xa38] sm:$0xff]
    %v435 = vld [vmem:[#allocation2 + $0xa40] sm:$0xff]
    %v436 = vld [vmem:[#allocation2 + $0xa48] sm:$0xff]
    %v437 = vld [vmem:[#allocation2 + $0xa50] sm:$0xff]
    %v438 = vld [vmem:[#allocation2 + $0xa58] sm:$0xff]
    %v439 = vld [vmem:[#allocation2 + $0xa60] sm:$0xff]
    %v440 = vld [vmem:[#allocation2 + $0xa68] sm:$0xff]
    %v441 = vld [vmem:[#allocation2 + $0xa70] sm:$0xff]
    %v442 = vld [vmem:[#allocation2 + $0xa78] sm:$0xff]
    %v443 = vld [vmem:[#allocation2 + $0xa80] sm:$0xff]
    %v444 = vld [vmem:[#allocation2 + $0xa88] sm:$0xff]
    %v445 = vld [vmem:[#allocation2 + $0xa90] sm:$0xff]
    %v446 = vld [vmem:[#allocation2 + $0xa98] sm:$0xff]
    %v447 = vld [vmem:[#allocation2 + $0xaa0] sm:$0xff]
    %v448 = vld [vmem:[#allocation2 + $0xaa8] sm:$0xff]
    %v449 = vld [vmem:[#allocation2 + $0xab0] sm:$0xff]
    %v450 = vld [vmem:[#allocation2 + $0xab8] sm:$0xff]
    %v451 = vld [vmem:[#allocation2 + $0xac0] sm:$0xff]
    %v452 = vld [vmem:[#allocation2 + $0xac8] sm:$0xff]
    %v453 = vld [vmem:[#allocation2 + $0xad0] sm:$0xff]
    %v454 = vld [vmem:[#allocation2 + $0xad8] sm:$0xff]
    %v455 = vld [vmem:[#allocation2 + $0xae0] sm:$0xff]
    %v456 = vld [vmem:[#allocation2 + $0xae8] sm:$0xff]
    %v457 = vld [vmem:[#allocation2 + $0xaf0] sm:$0xff]
    %v458 = vld [vmem:[#allocation2 + $0xaf8] sm:$0xff]
    %v459 = vld [vmem:[#allocation2 + $0xb00] sm:$0xff]
    %v460 = vld [vmem:[#allocation2 + $0xb08] sm:$0xff]
    %v461 = vld [vmem:[#allocation2 + $0xb10] sm:$0xff]
    %v462 = vld [vmem:[#allocation2 + $0xb18] sm:$0xff]
    %v463 = vld [vmem:[#allocation2 + $0xb20] sm:$0xff]
    %v464 = vld [vmem:[#allocation2 + $0xb28] sm:$0xff]
    %v465 = vld [vmem:[#allocation2 + $0xb30] sm:$0xff]
    %v466 = vld [vmem:[#allocation2 + $0xb38] sm:$0xff]
    %v467 = vld [vmem:[#allocation2 + $0xb40] sm:$0xff]
    %v468 = vld [vmem:[#allocation2 + $0xb48] sm:$0xff]
    %v469 = vld [vmem:[#allocation2 + $0xb50] sm:$0xff]
    %v470 = vld [vmem:[#allocation2 + $0xb58] sm:$0xff]
    %v471 = vld [vmem:[#allocation2 + $0xb60] sm:$0xff]
    %v472 = vld [vmem:[#allocation2 + $0xb68] sm:$0xff]
    %v473 = vld [vmem:[#allocation2 + $0xb70] sm:$0xff]
    %v474 = vld [vmem:[#allocation2 + $0xb78] sm:$0xff]
    %v475 = vld [vmem:[#allocation2 + $0xb80] sm:$0xff]
    %v476 = vld [vmem:[#allocation2 + $0xb88] sm:$0xff]
    %v477 = vld [vmem:[#allocation2 + $0xb90] sm:$0xff]
    %v478 = vld [vmem:[#allocation2 + $0xb98] sm:$0xff]
    %v479 = vld [vmem:[#allocation2 + $0xba0] sm:$0xff]
    %v480 = vld [vmem:[#allocation2 + $0xba8] sm:$0xff]
    %v481 = vld [vmem:[#allocation2 + $0xbb0] sm:$0xff]
    %v482 = vld [vmem:[#allocation2 + $0xbb8] sm:$0xff]
    %v483 = vld [vmem:[#allocation2 + $0xbc0] sm:$0xff]
    %v484 = vld [vmem:[#allocation2 + $0xbc8] sm:$0xff]
    %v485 = vld [vmem:[#allocation2 + $0xbd0] sm:$0xff]
    %v486 = vld [vmem:[#allocation2 + $0xbd8] sm:$0xff]
    %v487 = vld [vmem:[#allocation2 + $0xbe0] sm:$0xff]
    %v488 = vld [vmem:[#allocation2 + $0xbe8] sm:$0xff]
    %v489 = vld [vmem:[#allocation2 + $0xbf0] sm:$0xff]
    %v490 = vld [vmem:[#allocation2 + $0xbf8] sm:$0xff]
    %v491 = vld [vmem:[#allocation2 + $0xc00] sm:$0xff]
    %v492 = vld [vmem:[#allocation2 + $0xc08] sm:$0xff]
    %v493 = vld [vmem:[#allocation2 + $0xc10] sm:$0xff]
    %v494 = vld [vmem:[#allocation2 + $0xc18] sm:$0xff]
    %v495 = vld [vmem:[#allocation2 + $0xc20] sm:$0xff]
    %v496 = vld [vmem:[#allocation2 + $0xc28] sm:$0xff]
    %v497 = vld [vmem:[#allocation2 + $0xc30] sm:$0xff]
    %v498 = vld [vmem:[#allocation2 + $0xc38] sm:$0xff]
    %v499 = vld [vmem:[#allocation2 + $0xc40] sm:$0xff]
    %v500 = vld [vmem:[#allocation2 + $0xc48] sm:$0xff]
    %v501 = vld [vmem:[#allocation2 + $0xc50] sm:$0xff]
    %v502 = vld [vmem:[#allocation2 + $0xc58] sm:$0xff]
    %v503 = vld [vmem:[#allocation2 + $0xc60] sm:$0xff]
    %v504 = vld [vmem:[#allocation2 + $0xc68] sm:$0xff]
    %v505 = vld [vmem:[#allocation2 + $0xc70] sm:$0xff]
    %v506 = vld [vmem:[#allocation2 + $0xc78] sm:$0xff]
    %v507 = vld [vmem:[#allocation2 + $0xc80] sm:$0xff]
    %v508 = vld [vmem:[#allocation2 + $0xc88] sm:$0xff]
    %v509 = vld [vmem:[#allocation2 + $0xc90] sm:$0xff]
    %v510 = vld [vmem:[#allocation2 + $0xc98] sm:$0xff]
    %v511 = vld [vmem:[#allocation2 + $0xca0] sm:$0xff]
    %v512 = vld [vmem:[#allocation2 + $0xca8] sm:$0xff]
    %v513 = vld [vmem:[#allocation2 + $0xcb0] sm:$0xff]
    %v514 = vld [vmem:[#allocation2 + $0xcb8] sm:$0xff]
    %v515 = vld [vmem:[#allocation2 + $0xcc0] sm:$0xff]
    %v516 = vld [vmem:[#allocation2 + $0xcc8] sm:$0xff]
    %v517 = vld [vmem:[#allocation2 + $0xcd0] sm:$0xff]
    %v518 = vld [vmem:[#allocation2 + $0xcd8] sm:$0xff]
    %v519 = vld [vmem:[#allocation2 + $0xce0] sm:$0xff]
    %v520 = vld [vmem:[#allocation2 + $0xce8] sm:$0xff]
    %v521 = vld [vmem:[#allocation2 + $0xcf0] sm:$0xff]
    %v522 = vld [vmem:[#allocation2 + $0xcf8] sm:$0xff]
    %v523 = vld [vmem:[#allocation2 + $0xd00] sm:$0xff]
    %v524 = vld [vmem:[#allocation2 + $0xd08] sm:$0xff]
    %v525 = vld [vmem:[#allocation2 + $0xd10] sm:$0xff]
    %v526 = vld [vmem:[#allocation2 + $0xd18] sm:$0xff]
    %v527 = vld [vmem:[#allocation2 + $0xd20] sm:$0xff]
    %v528 = vld [vmem:[#allocation2 + $0xd28] sm:$0xff]
    %v529 = vld [vmem:[#allocation2 + $0xd30] sm:$0xff]
    %v530 = vld [vmem:[#allocation2 + $0xd38] sm:$0xff]
    %v531 = vld [vmem:[#allocation2 + $0xd40] sm:$0xff]
    %v532 = vld [vmem:[#allocation2 + $0xd48] sm:$0xff]
    %v533 = vld [vmem:[#allocation2 + $0xd50] sm:$0xff]
    %v534 = vld [vmem:[#allocation2 + $0xd58] sm:$0xff]
    %v535 = vld [vmem:[#allocation2 + $0xd60] sm:$0xff]
    %v536 = vld [vmem:[#allocation2 + $0xd68] sm:$0xff]
    %v537 = vld [vmem:[#allocation2 + $0xd70] sm:$0xff]
    %v538 = vld [vmem:[#allocation2 + $0xd78] sm:$0xff]
    %v539 = vld [vmem:[#allocation2 + $0xd80] sm:$0xff]
    %v540 = vld [vmem:[#allocation2 + $0xd88] sm:$0xff]
    %v541 = vld [vmem:[#allocation2 + $0xd90] sm:$0xff]
    %v542 = vld [vmem:[#allocation2 + $0xd98] sm:$0xff]
    %v543 = vld [vmem:[#allocation2 + $0xda0] sm:$0xff]
    %v544 = vld [vmem:[#allocation2 + $0xda8] sm:$0xff]
    %v545 = vld [vmem:[#allocation2 + $0xdb0] sm:$0xff]
    %v546 = vld [vmem:[#allocation2 + $0xdb8] sm:$0xff]
    %v547 = vld [vmem:[#allocation2 + $0xdc0] sm:$0xff]
    %v548 = vld [vmem:[#allocation2 + $0xdc8] sm:$0xff]
    %v549 = vld [vmem:[#allocation2 + $0xdd0] sm:$0xff]
    %v550 = vld [vmem:[#allocation2 + $0xdd8] sm:$0xff]
    %v551 = vld [vmem:[#allocation2 + $0xde0] sm:$0xff]
    %v552 = vld [vmem:[#allocation2 + $0xde8] sm:$0xff]
    %v553 = vld [vmem:[#allocation2 + $0xdf0] sm:$0xff]
    %v554 = vld [vmem:[#allocation2 + $0xdf8] sm:$0xff]
    %v555 = vld [vmem:[#allocation4] sm:$0xff]
    %v557 = vlaneseq
    %v558 = vshrl.u32 %v557, 7
    %v559 = vsub.s32 0, %v558
    %v560 = vrot.slane %v555, %v559
    %v561 = vlaneseq
    %v562 = vshrl.u32 %v561, 7
    %v563 = vsub.s32 1, %v562
    %v564 = vrot.slane %v555, %v563
    %v565 = vlaneseq
    %v566 = vshrl.u32 %v565, 7
    %v567 = vsub.s32 2, %v566
    %v568 = vrot.slane %v555, %v567
    %v569 = vlaneseq
    %v570 = vshrl.u32 %v569, 7
    %v571 = vsub.s32 3, %v570
    %v572 = vrot.slane %v555, %v571
    %v573 = vlaneseq
    %v574 = vshrl.u32 %v573, 7
    %v575 = vsub.s32 4, %v574
    %v576 = vrot.slane %v555, %v575
    %v577 = vlaneseq
    %v578 = vshrl.u32 %v577, 7
    %v579 = vsub.s32 5, %v578
    %v580 = vrot.slane %v555, %v579
    %v581 = vlaneseq
    %v582 = vshrl.u32 %v581, 7
    %v583 = vsub.s32 6, %v582
    %v584 = vrot.slane %v555, %v583
    %v585 = vlaneseq
    %v586 = vshrl.u32 %v585, 7
    %v587 = vsub.s32 7, %v586
    %v588 = vrot.slane %v555, %v587
    %v601 = vunpack.c.l.b16 %v103
    %v602 = vunpack.c.h.b16 %v103
    %v603 = vunpack.c.l.b16 %v104
    %v604 = vunpack.c.h.b16 %v104
    %v605 = vunpack.c.l.b16 %v105
    %v606 = vunpack.c.h.b16 %v105
    %v607 = vunpack.c.l.b16 %v106
    %v608 = vpack.c.b16 %v601, %v601
    %v609 = vpack.c.b16 %v602, %v602
    %v610 = vpack.c.b16 %v603, %v603
    %v611 = vpack.c.b16 %v604, %v604
    %v612 = vpack.c.b16 %v605, %v605
    %v613 = vpack.c.b16 %v606, %v606
    %v614 = vpack.c.b16 %v607, %v607
    %v1070 = vunpack.c.l.b16 %v107
    %v1071 = vunpack.c.h.b16 %v107
    %v1072 = vunpack.c.l.b16 %v108
    %v1073 = vunpack.c.h.b16 %v108
    %v1074 = vunpack.c.l.b16 %v109
    %v1075 = vunpack.c.h.b16 %v109
    %v1076 = vunpack.c.l.b16 %v110
    %v1077 = vunpack.c.h.b16 %v110
    %v1078 = vunpack.c.l.b16 %v111
    %v1079 = vunpack.c.h.b16 %v111
    %v1080 = vunpack.c.l.b16 %v112
    %v1081 = vunpack.c.h.b16 %v112
    %v1082 = vunpack.c.l.b16 %v113
    %v1083 = vunpack.c.h.b16 %v113
    %v1084 = vunpack.c.l.b16 %v114
    %v1085 = vunpack.c.h.b16 %v114
    %v1086 = vunpack.c.l.b16 %v115
    %v1087 = vunpack.c.h.b16 %v115
    %v1088 = vunpack.c.l.b16 %v116
    %v1089 = vunpack.c.h.b16 %v116
    %v1090 = vunpack.c.l.b16 %v117
    %v1091 = vunpack.c.h.b16 %v117
    %v1092 = vunpack.c.l.b16 %v118
    %v1093 = vunpack.c.h.b16 %v118
    %v1094 = vunpack.c.l.b16 %v119
    %v1095 = vunpack.c.h.b16 %v119
    %v1096 = vunpack.c.l.b16 %v120
    %v1097 = vunpack.c.h.b16 %v120
    %v1098 = vunpack.c.l.b16 %v121
    %v1099 = vunpack.c.h.b16 %v121
    %v1100 = vunpack.c.l.b16 %v122
    %v1101 = vunpack.c.h.b16 %v122
    %v1102 = vunpack.c.l.b16 %v123
    %v1103 = vunpack.c.h.b16 %v123
    %v1104 = vunpack.c.l.b16 %v124
    %v1105 = vunpack.c.h.b16 %v124
    %v1106 = vunpack.c.l.b16 %v125
    %v1107 = vunpack.c.h.b16 %v125
    %v1108 = vunpack.c.l.b16 %v126
    %v1109 = vunpack.c.h.b16 %v126
    %v1110 = vunpack.c.l.b16 %v127
    %v1111 = vunpack.c.h.b16 %v127
    %v1112 = vunpack.c.l.b16 %v128
    %v1113 = vunpack.c.h.b16 %v128
    %v1114 = vunpack.c.l.b16 %v129
    %v1115 = vunpack.c.h.b16 %v129
    %v1116 = vunpack.c.l.b16 %v130
    %v1117 = vunpack.c.h.b16 %v130
    %v1118 = vunpack.c.l.b16 %v131
    %v1119 = vunpack.c.h.b16 %v131
    %v1120 = vunpack.c.l.b16 %v132
    %v1121 = vunpack.c.h.b16 %v132
    %v1122 = vunpack.c.l.b16 %v133
    %v1123 = vunpack.c.h.b16 %v133
    %v1124 = vunpack.c.l.b16 %v134
    %v1125 = vunpack.c.h.b16 %v134
    %v1126 = vunpack.c.l.b16 %v135
    %v1127 = vunpack.c.h.b16 %v135
    %v1128 = vunpack.c.l.b16 %v136
    %v1129 = vunpack.c.h.b16 %v136
    %v1130 = vunpack.c.l.b16 %v137
    %v1131 = vunpack.c.h.b16 %v137
    %v1132 = vunpack.c.l.b16 %v138
    %v1133 = vunpack.c.h.b16 %v138
    %v1134 = vunpack.c.l.b16 %v139
    %v1135 = vunpack.c.h.b16 %v139
    %v1136 = vunpack.c.l.b16 %v140
    %v1137 = vunpack.c.h.b16 %v140
    %v1138 = vunpack.c.l.b16 %v141
    %v1139 = vunpack.c.h.b16 %v141
    %v1140 = vunpack.c.l.b16 %v142
    %v1141 = vunpack.c.h.b16 %v142
    %v1142 = vunpack.c.l.b16 %v143
    %v1143 = vunpack.c.h.b16 %v143
    %v1144 = vunpack.c.l.b16 %v144
    %v1145 = vunpack.c.h.b16 %v144
    %v1146 = vunpack.c.l.b16 %v145
    %v1147 = vunpack.c.h.b16 %v145
    %v1148 = vunpack.c.l.b16 %v146
    %v1149 = vunpack.c.h.b16 %v146
    %v1150 = vunpack.c.l.b16 %v147
    %v1151 = vunpack.c.h.b16 %v147
    %v1152 = vunpack.c.l.b16 %v148
    %v1153 = vunpack.c.h.b16 %v148
    %v1154 = vunpack.c.l.b16 %v149
    %v1155 = vunpack.c.h.b16 %v149
    %v1156 = vunpack.c.l.b16 %v150
    %v1157 = vunpack.c.h.b16 %v150
    %v1158 = vunpack.c.l.b16 %v151
    %v1159 = vunpack.c.h.b16 %v151
    %v1160 = vunpack.c.l.b16 %v152
    %v1161 = vunpack.c.h.b16 %v152
    %v1162 = vunpack.c.l.b16 %v153
    %v1163 = vunpack.c.h.b16 %v153
    %v1164 = vunpack.c.l.b16 %v154
    %v1165 = vunpack.c.h.b16 %v154
    %v1166 = vunpack.c.l.b16 %v155
    %v1167 = vunpack.c.h.b16 %v155
    %v1168 = vunpack.c.l.b16 %v156
    %v1169 = vunpack.c.h.b16 %v156
    %v1170 = vunpack.c.l.b16 %v157
    %v1171 = vunpack.c.h.b16 %v157
    %v1172 = vunpack.c.l.b16 %v158
    %v1173 = vunpack.c.h.b16 %v158
    %v1174 = vunpack.c.l.b16 %v159
    %v1175 = vunpack.c.h.b16 %v159
    %v1176 = vunpack.c.l.b16 %v160
    %v1177 = vunpack.c.h.b16 %v160
    %v1178 = vunpack.c.l.b16 %v161
    %v1179 = vunpack.c.h.b16 %v161
    %v1180 = vunpack.c.l.b16 %v162
    %v1181 = vunpack.c.h.b16 %v162
    %v1182 = vunpack.c.l.b16 %v163
    %v1183 = vunpack.c.h.b16 %v163
    %v1184 = vunpack.c.l.b16 %v164
    %v1185 = vunpack.c.h.b16 %v164
    %v1186 = vunpack.c.l.b16 %v165
    %v1187 = vunpack.c.h.b16 %v165
    %v1188 = vunpack.c.l.b16 %v166
    %v1189 = vunpack.c.h.b16 %v166
    %v1190 = vunpack.c.l.b16 %v167
    %v1191 = vunpack.c.h.b16 %v167
    %v1192 = vunpack.c.l.b16 %v168
    %v1193 = vunpack.c.h.b16 %v168
    %v1194 = vunpack.c.l.b16 %v169
    %v1195 = vunpack.c.h.b16 %v169
    %v1196 = vunpack.c.l.b16 %v170
    %v1197 = vunpack.c.h.b16 %v170
    %v1198 = vunpack.c.l.b16 %v171
    %v1199 = vunpack.c.h.b16 %v171
    %v1200 = vunpack.c.l.b16 %v172
    %v1201 = vunpack.c.h.b16 %v172
    %v1202 = vunpack.c.l.b16 %v173
    %v1203 = vunpack.c.h.b16 %v173
    %v1204 = vunpack.c.l.b16 %v174
    %v1205 = vunpack.c.h.b16 %v174
    %v1206 = vunpack.c.l.b16 %v175
    %v1207 = vunpack.c.h.b16 %v175
    %v1208 = vunpack.c.l.b16 %v176
    %v1209 = vunpack.c.h.b16 %v176
    %v1210 = vunpack.c.l.b16 %v177
    %v1211 = vunpack.c.h.b16 %v177
    %v1212 = vunpack.c.l.b16 %v178
    %v1213 = vunpack.c.h.b16 %v178
    %v1214 = vunpack.c.l.b16 %v179
    %v1215 = vunpack.c.h.b16 %v179
    %v1216 = vunpack.c.l.b16 %v180
    %v1217 = vunpack.c.h.b16 %v180
    %v1218 = vunpack.c.l.b16 %v181
    %v1219 = vunpack.c.h.b16 %v181
    %v1220 = vunpack.c.l.b16 %v182
    %v1221 = vunpack.c.h.b16 %v182
    %v1222 = vunpack.c.l.b16 %v183
    %v1223 = vunpack.c.h.b16 %v183
    %v1224 = vunpack.c.l.b16 %v184
    %v1225 = vunpack.c.h.b16 %v184
    %v1226 = vunpack.c.l.b16 %v185
    %v1227 = vunpack.c.h.b16 %v185
    %v1228 = vunpack.c.l.b16 %v186
    %v1229 = vunpack.c.h.b16 %v186
    %v1230 = vunpack.c.l.b16 %v187
    %v1231 = vunpack.c.h.b16 %v187
    %v1232 = vunpack.c.l.b16 %v188
    %v1233 = vunpack.c.h.b16 %v188
    %v1234 = vunpack.c.l.b16 %v189
    %v1235 = vunpack.c.h.b16 %v189
    %v1236 = vunpack.c.l.b16 %v190
    %v1237 = vunpack.c.h.b16 %v190
    %v1238 = vunpack.c.l.b16 %v191
    %v1239 = vunpack.c.h.b16 %v191
    %v1240 = vunpack.c.l.b16 %v192
    %v1241 = vunpack.c.h.b16 %v192
    %v1242 = vunpack.c.l.b16 %v193
    %v1243 = vunpack.c.h.b16 %v193
    %v1244 = vunpack.c.l.b16 %v194
    %v1245 = vunpack.c.h.b16 %v194
    %v1246 = vunpack.c.l.b16 %v195
    %v1247 = vunpack.c.h.b16 %v195
    %v1248 = vunpack.c.l.b16 %v196
    %v1249 = vunpack.c.h.b16 %v196
    %v1250 = vunpack.c.l.b16 %v197
    %v1251 = vunpack.c.h.b16 %v197
    %v1252 = vunpack.c.l.b16 %v198
    %v1253 = vunpack.c.h.b16 %v198
    %v1254 = vunpack.c.l.b16 %v199
    %v1255 = vunpack.c.h.b16 %v199
    %v1256 = vunpack.c.l.b16 %v200
    %v1257 = vunpack.c.h.b16 %v200
    %v1258 = vunpack.c.l.b16 %v201
    %v1259 = vunpack.c.h.b16 %v201
    %v1260 = vunpack.c.l.b16 %v202
    %v1261 = vunpack.c.h.b16 %v202
    %v1262 = vunpack.c.l.b16 %v203
    %v1263 = vunpack.c.h.b16 %v203
    %v1264 = vunpack.c.l.b16 %v204
    %v1265 = vunpack.c.h.b16 %v204
    %v1266 = vunpack.c.l.b16 %v205
    %v1267 = vunpack.c.h.b16 %v205
    %v1268 = vunpack.c.l.b16 %v206
    %v1269 = vunpack.c.h.b16 %v206
    %v1270 = vunpack.c.l.b16 %v207
    %v1271 = vunpack.c.h.b16 %v207
    %v1272 = vunpack.c.l.b16 %v208
    %v1273 = vunpack.c.h.b16 %v208
    %v1274 = vunpack.c.l.b16 %v209
    %v1275 = vunpack.c.h.b16 %v209
    %v1276 = vunpack.c.l.b16 %v210
    %v1277 = vunpack.c.h.b16 %v210
    %v1278 = vunpack.c.l.b16 %v211
    %v1279 = vunpack.c.h.b16 %v211
    %v1280 = vunpack.c.l.b16 %v212
    %v1281 = vunpack.c.h.b16 %v212
    %v1282 = vunpack.c.l.b16 %v213
    %v1283 = vunpack.c.h.b16 %v213
    %v1284 = vunpack.c.l.b16 %v214
    %v1285 = vunpack.c.h.b16 %v214
    %v1286 = vunpack.c.l.b16 %v215
    %v1287 = vunpack.c.h.b16 %v215
    %v1288 = vunpack.c.l.b16 %v216
    %v1289 = vunpack.c.h.b16 %v216
    %v1290 = vunpack.c.l.b16 %v217
    %v1291 = vunpack.c.h.b16 %v217
    %v1292 = vunpack.c.l.b16 %v218
    %v1293 = vunpack.c.h.b16 %v218
    %v1294 = vunpack.c.l.b16 %v219
    %v1295 = vunpack.c.h.b16 %v219
    %v1296 = vunpack.c.l.b16 %v220
    %v1297 = vunpack.c.h.b16 %v220
    %v1298 = vunpack.c.l.b16 %v221
    %v1299 = vunpack.c.h.b16 %v221
    %v1300 = vunpack.c.l.b16 %v222
    %v1301 = vunpack.c.h.b16 %v222
    %v1302 = vunpack.c.l.b16 %v223
    %v1303 = vunpack.c.h.b16 %v223
    %v1304 = vunpack.c.l.b16 %v224
    %v1305 = vunpack.c.h.b16 %v224
    %v1306 = vunpack.c.l.b16 %v225
    %v1307 = vunpack.c.h.b16 %v225
    %v1308 = vunpack.c.l.b16 %v226
    %v1309 = vunpack.c.h.b16 %v226
    %v1310 = vunpack.c.l.b16 %v227
    %v1311 = vunpack.c.h.b16 %v227
    %v1312 = vunpack.c.l.b16 %v228
    %v1313 = vunpack.c.h.b16 %v228
    %v1314 = vunpack.c.l.b16 %v229
    %v1315 = vunpack.c.h.b16 %v229
    %v1316 = vunpack.c.l.b16 %v230
    %v1317 = vunpack.c.h.b16 %v230
    %v1318 = vunpack.c.l.b16 %v231
    %v1319 = vunpack.c.h.b16 %v231
    %v1320 = vunpack.c.l.b16 %v232
    %v1321 = vunpack.c.h.b16 %v232
    %v1322 = vunpack.c.l.b16 %v233
    %v1323 = vunpack.c.h.b16 %v233
    %v1324 = vunpack.c.l.b16 %v234
    %v1325 = vunpack.c.h.b16 %v234
    %v1326 = vunpack.c.l.b16 %v235
    %v1327 = vunpack.c.h.b16 %v235
    %v1328 = vunpack.c.l.b16 %v236
    %v1329 = vunpack.c.h.b16 %v236
    %v1330 = vunpack.c.l.b16 %v237
    %v1331 = vunpack.c.h.b16 %v237
    %v1332 = vunpack.c.l.b16 %v238
    %v1333 = vunpack.c.h.b16 %v238
    %v1334 = vunpack.c.l.b16 %v239
    %v1335 = vunpack.c.h.b16 %v239
    %v1336 = vunpack.c.l.b16 %v240
    %v1337 = vunpack.c.h.b16 %v240
    %v1338 = vunpack.c.l.b16 %v241
    %v1339 = vunpack.c.h.b16 %v241
    %v1340 = vunpack.c.l.b16 %v242
    %v1341 = vunpack.c.h.b16 %v242
    %v1342 = vunpack.c.l.b16 %v243
    %v1343 = vunpack.c.h.b16 %v243
    %v1344 = vunpack.c.l.b16 %v244
    %v1345 = vunpack.c.h.b16 %v244
    %v1346 = vunpack.c.l.b16 %v245
    %v1347 = vunpack.c.h.b16 %v245
    %v1348 = vunpack.c.l.b16 %v246
    %v1349 = vunpack.c.h.b16 %v246
    %v1350 = vunpack.c.l.b16 %v247
    %v1351 = vunpack.c.h.b16 %v247
    %v1352 = vunpack.c.l.b16 %v248
    %v1353 = vunpack.c.h.b16 %v248
    %v1354 = vunpack.c.l.b16 %v249
    %v1355 = vunpack.c.h.b16 %v249
    %v1356 = vunpack.c.l.b16 %v250
    %v1357 = vunpack.c.h.b16 %v250
    %v1358 = vunpack.c.l.b16 %v251
    %v1359 = vunpack.c.h.b16 %v251
    %v1360 = vunpack.c.l.b16 %v252
    %v1361 = vunpack.c.h.b16 %v252
    %v1362 = vunpack.c.l.b16 %v253
    %v1363 = vunpack.c.h.b16 %v253
    %v1364 = vunpack.c.l.b16 %v254
    %v1365 = vunpack.c.h.b16 %v254
    %v1366 = vunpack.c.l.b16 %v255
    %v1367 = vunpack.c.h.b16 %v255
    %v1368 = vunpack.c.l.b16 %v256
    %v1369 = vunpack.c.h.b16 %v256
    %v1370 = vunpack.c.l.b16 %v257
    %v1371 = vunpack.c.h.b16 %v257
    %v1372 = vunpack.c.l.b16 %v258
    %v1373 = vunpack.c.h.b16 %v258
    %v1374 = vunpack.c.l.b16 %v259
    %v1375 = vunpack.c.h.b16 %v259
    %v1376 = vunpack.c.l.b16 %v260
    %v1377 = vunpack.c.h.b16 %v260
    %v1378 = vunpack.c.l.b16 %v261
    %v1379 = vunpack.c.h.b16 %v261
    %v1380 = vunpack.c.l.b16 %v262
    %v1381 = vunpack.c.h.b16 %v262
    %v1382 = vunpack.c.l.b16 %v263
    %v1383 = vunpack.c.h.b16 %v263
    %v1384 = vunpack.c.l.b16 %v264
    %v1385 = vunpack.c.h.b16 %v264
    %v1386 = vunpack.c.l.b16 %v265
    %v1387 = vunpack.c.h.b16 %v265
    %v1388 = vunpack.c.l.b16 %v266
    %v1389 = vunpack.c.h.b16 %v266
    %v1390 = vunpack.c.l.b16 %v267
    %v1391 = vunpack.c.h.b16 %v267
    %v1392 = vunpack.c.l.b16 %v268
    %v1393 = vunpack.c.h.b16 %v268
    %v1394 = vunpack.c.l.b16 %v269
    %v1395 = vunpack.c.h.b16 %v269
    %v1396 = vunpack.c.l.b16 %v270
    %v1397 = vunpack.c.h.b16 %v270
    %v1398 = vunpack.c.l.b16 %v271
    %v1399 = vunpack.c.h.b16 %v271
    %v1400 = vunpack.c.l.b16 %v272
    %v1401 = vunpack.c.h.b16 %v272
    %v1402 = vunpack.c.l.b16 %v273
    %v1403 = vunpack.c.h.b16 %v273
    %v1404 = vunpack.c.l.b16 %v274
    %v1405 = vunpack.c.h.b16 %v274
    %v1406 = vunpack.c.l.b16 %v275
    %v1407 = vunpack.c.h.b16 %v275
    %v1408 = vunpack.c.l.b16 %v276
    %v1409 = vunpack.c.h.b16 %v276
    %v1410 = vunpack.c.l.b16 %v277
    %v1411 = vunpack.c.h.b16 %v277
    %v1412 = vunpack.c.l.b16 %v278
    %v1413 = vunpack.c.h.b16 %v278
    %v1414 = vunpack.c.l.b16 %v279
    %v1415 = vunpack.c.h.b16 %v279
    %v1416 = vunpack.c.l.b16 %v280
    %v1417 = vunpack.c.h.b16 %v280
    %v1418 = vunpack.c.l.b16 %v281
    %v1419 = vunpack.c.h.b16 %v281
    %v1420 = vunpack.c.l.b16 %v282
    %v1421 = vunpack.c.h.b16 %v282
    %v1422 = vunpack.c.l.b16 %v283
    %v1423 = vunpack.c.h.b16 %v283
    %v1424 = vunpack.c.l.b16 %v284
    %v1425 = vunpack.c.h.b16 %v284
    %v1426 = vunpack.c.l.b16 %v285
    %v1427 = vunpack.c.h.b16 %v285
    %v1428 = vunpack.c.l.b16 %v286
    %v1429 = vunpack.c.h.b16 %v286
    %v1430 = vunpack.c.l.b16 %v287
    %v1431 = vunpack.c.h.b16 %v287
    %v1432 = vunpack.c.l.b16 %v288
    %v1433 = vunpack.c.h.b16 %v288
    %v1434 = vunpack.c.l.b16 %v289
    %v1435 = vunpack.c.h.b16 %v289
    %v1436 = vunpack.c.l.b16 %v290
    %v1437 = vunpack.c.h.b16 %v290
    %v1438 = vunpack.c.l.b16 %v291
    %v1439 = vunpack.c.h.b16 %v291
    %v1440 = vunpack.c.l.b16 %v292
    %v1441 = vunpack.c.h.b16 %v292
    %v1442 = vunpack.c.l.b16 %v293
    %v1443 = vunpack.c.h.b16 %v293
    %v1444 = vunpack.c.l.b16 %v294
    %v1445 = vunpack.c.h.b16 %v294
    %v1446 = vunpack.c.l.b16 %v295
    %v1447 = vunpack.c.h.b16 %v295
    %v1448 = vunpack.c.l.b16 %v296
    %v1449 = vunpack.c.h.b16 %v296
    %v1450 = vunpack.c.l.b16 %v297
    %v1451 = vunpack.c.h.b16 %v297
    %v1452 = vunpack.c.l.b16 %v298
    %v1453 = vunpack.c.h.b16 %v298
    %v1454 = vunpack.c.l.b16 %v299
    %v1455 = vunpack.c.h.b16 %v299
    %v1456 = vunpack.c.l.b16 %v300
    %v1457 = vunpack.c.h.b16 %v300
    %v1458 = vunpack.c.l.b16 %v301
    %v1459 = vunpack.c.h.b16 %v301
    %v1460 = vunpack.c.l.b16 %v302
    %v1461 = vunpack.c.h.b16 %v302
    %v1462 = vunpack.c.l.b16 %v303
    %v1463 = vunpack.c.h.b16 %v303
    %v1464 = vunpack.c.l.b16 %v304
    %v1465 = vunpack.c.h.b16 %v304
    %v1466 = vunpack.c.l.b16 %v305
    %v1467 = vunpack.c.h.b16 %v305
    %v1468 = vunpack.c.l.b16 %v306
    %v1469 = vunpack.c.h.b16 %v306
    %v1470 = vunpack.c.l.b16 %v307
    %v1471 = vunpack.c.h.b16 %v307
    %v1472 = vunpack.c.l.b16 %v308
    %v1473 = vunpack.c.h.b16 %v308
    %v1474 = vunpack.c.l.b16 %v309
    %v1475 = vunpack.c.h.b16 %v309
    %v1476 = vunpack.c.l.b16 %v310
    %v1477 = vunpack.c.h.b16 %v310
    %v1478 = vunpack.c.l.b16 %v311
    %v1479 = vunpack.c.h.b16 %v311
    %v1480 = vunpack.c.l.b16 %v312
    %v1481 = vunpack.c.h.b16 %v312
    %v1482 = vunpack.c.l.b16 %v313
    %v1483 = vunpack.c.h.b16 %v313
    %v1484 = vunpack.c.l.b16 %v314
    %v1485 = vunpack.c.h.b16 %v314
    %v1486 = vunpack.c.l.b16 %v315
    %v1487 = vunpack.c.h.b16 %v315
    %v1488 = vunpack.c.l.b16 %v316
    %v1489 = vunpack.c.h.b16 %v316
    %v1490 = vunpack.c.l.b16 %v317
    %v1491 = vunpack.c.h.b16 %v317
    %v1492 = vunpack.c.l.b16 %v318
    %v1493 = vunpack.c.h.b16 %v318
    %v1494 = vunpack.c.l.b16 %v319
    %v1495 = vunpack.c.h.b16 %v319
    %v1496 = vunpack.c.l.b16 %v320
    %v1497 = vunpack.c.h.b16 %v320
    %v1498 = vunpack.c.l.b16 %v321
    %v1499 = vunpack.c.h.b16 %v321
    %v1500 = vunpack.c.l.b16 %v322
    %v1501 = vunpack.c.h.b16 %v322
    %v1502 = vunpack.c.l.b16 %v323
    %v1503 = vunpack.c.h.b16 %v323
    %v1504 = vunpack.c.l.b16 %v324
    %v1505 = vunpack.c.h.b16 %v324
    %v1506 = vunpack.c.l.b16 %v325
    %v1507 = vunpack.c.h.b16 %v325
    %v1508 = vunpack.c.l.b16 %v326
    %v1509 = vunpack.c.h.b16 %v326
    %v1510 = vunpack.c.l.b16 %v327
    %v1511 = vunpack.c.h.b16 %v327
    %v1512 = vunpack.c.l.b16 %v328
    %v1513 = vunpack.c.h.b16 %v328
    %v1514 = vunpack.c.l.b16 %v329
    %v1515 = vunpack.c.h.b16 %v329
    %v1516 = vunpack.c.l.b16 %v330
    %v1517 = vunpack.c.h.b16 %v330
    %v1518 = vunpack.c.l.b16 %v331
    %v1519 = vunpack.c.h.b16 %v331
    %v1520 = vunpack.c.l.b16 %v332
    %v1521 = vunpack.c.h.b16 %v332
    %v1522 = vunpack.c.l.b16 %v333
    %v1523 = vunpack.c.h.b16 %v333
    %v1524 = vunpack.c.l.b16 %v334
    %v1525 = vunpack.c.h.b16 %v334
    %v1526 = vunpack.c.l.b16 %v335
    %v1527 = vunpack.c.h.b16 %v335
    %v1528 = vunpack.c.l.b16 %v336
    %v1529 = vunpack.c.h.b16 %v336
    %v1530 = vunpack.c.l.b16 %v337
    %v1531 = vunpack.c.h.b16 %v337
    %v1532 = vunpack.c.l.b16 %v338
    %v1533 = vunpack.c.h.b16 %v338
    %v1534 = vunpack.c.l.b16 %v339
    %v1535 = vunpack.c.h.b16 %v339
    %v1536 = vunpack.c.l.b16 %v340
    %v1537 = vunpack.c.h.b16 %v340
    %v1538 = vunpack.c.l.b16 %v341
    %v1539 = vunpack.c.h.b16 %v341
    %v1540 = vunpack.c.l.b16 %v342
    %v1541 = vunpack.c.h.b16 %v342
    %v1542 = vunpack.c.l.b16 %v343
    %v1543 = vunpack.c.h.b16 %v343
    %v1544 = vunpack.c.l.b16 %v344
    %v1545 = vunpack.c.h.b16 %v344
    %v1546 = vunpack.c.l.b16 %v345
    %v1547 = vunpack.c.h.b16 %v345
    %v1548 = vunpack.c.l.b16 %v346
    %v1549 = vunpack.c.h.b16 %v346
    %v1550 = vunpack.c.l.b16 %v347
    %v1551 = vunpack.c.h.b16 %v347
    %v1552 = vunpack.c.l.b16 %v348
    %v1553 = vunpack.c.h.b16 %v348
    %v1554 = vunpack.c.l.b16 %v349
    %v1555 = vunpack.c.h.b16 %v349
    %v1556 = vunpack.c.l.b16 %v350
    %v1557 = vunpack.c.h.b16 %v350
    %v1558 = vunpack.c.l.b16 %v351
    %v1559 = vunpack.c.h.b16 %v351
    %v1560 = vunpack.c.l.b16 %v352
    %v1561 = vunpack.c.h.b16 %v352
    %v1562 = vunpack.c.l.b16 %v353
    %v1563 = vunpack.c.h.b16 %v353
    %v1564 = vunpack.c.l.b16 %v354
    %v1565 = vunpack.c.h.b16 %v354
    %v1566 = vunpack.c.l.b16 %v355
    %v1567 = vunpack.c.h.b16 %v355
    %v1568 = vunpack.c.l.b16 %v356
    %v1569 = vunpack.c.h.b16 %v356
    %v1570 = vunpack.c.l.b16 %v357
    %v1571 = vunpack.c.h.b16 %v357
    %v1572 = vunpack.c.l.b16 %v358
    %v1573 = vunpack.c.h.b16 %v358
    %v1574 = vunpack.c.l.b16 %v359
    %v1575 = vunpack.c.h.b16 %v359
    %v1576 = vunpack.c.l.b16 %v360
    %v1577 = vunpack.c.h.b16 %v360
    %v1578 = vunpack.c.l.b16 %v361
    %v1579 = vunpack.c.h.b16 %v361
    %v1580 = vunpack.c.l.b16 %v362
    %v1581 = vunpack.c.h.b16 %v362
    %v1582 = vunpack.c.l.b16 %v363
    %v1583 = vunpack.c.h.b16 %v363
    %v1584 = vunpack.c.l.b16 %v364
    %v1585 = vunpack.c.h.b16 %v364
    %v1586 = vunpack.c.l.b16 %v365
    %v1587 = vunpack.c.h.b16 %v365
    %v1588 = vunpack.c.l.b16 %v366
    %v1589 = vunpack.c.h.b16 %v366
    %v1590 = vunpack.c.l.b16 %v367
    %v1591 = vunpack.c.h.b16 %v367
    %v1592 = vunpack.c.l.b16 %v368
    %v1593 = vunpack.c.h.b16 %v368
    %v1594 = vunpack.c.l.b16 %v369
    %v1595 = vunpack.c.h.b16 %v369
    %v1596 = vunpack.c.l.b16 %v370
    %v1597 = vunpack.c.h.b16 %v370
    %v1598 = vunpack.c.l.b16 %v371
    %v1599 = vunpack.c.h.b16 %v371
    %v1600 = vunpack.c.l.b16 %v372
    %v1601 = vunpack.c.h.b16 %v372
    %v1602 = vunpack.c.l.b16 %v373
    %v1603 = vunpack.c.h.b16 %v373
    %v1604 = vunpack.c.l.b16 %v374
    %v1605 = vunpack.c.h.b16 %v374
    %v1606 = vunpack.c.l.b16 %v375
    %v1607 = vunpack.c.h.b16 %v375
    %v1608 = vunpack.c.l.b16 %v376
    %v1609 = vunpack.c.h.b16 %v376
    %v1610 = vunpack.c.l.b16 %v377
    %v1611 = vunpack.c.h.b16 %v377
    %v1612 = vunpack.c.l.b16 %v378
    %v1613 = vunpack.c.h.b16 %v378
    %v1614 = vunpack.c.l.b16 %v379
    %v1615 = vunpack.c.h.b16 %v379
    %v1616 = vunpack.c.l.b16 %v380
    %v1617 = vunpack.c.h.b16 %v380
    %v1618 = vunpack.c.l.b16 %v381
    %v1619 = vunpack.c.h.b16 %v381
    %v1620 = vunpack.c.l.b16 %v382
    %v1621 = vunpack.c.h.b16 %v382
    %v1622 = vunpack.c.l.b16 %v383
    %v1623 = vunpack.c.h.b16 %v383
    %v1624 = vunpack.c.l.b16 %v384
    %v1625 = vunpack.c.h.b16 %v384
    %v1626 = vunpack.c.l.b16 %v385
    %v1627 = vunpack.c.h.b16 %v385
    %v1628 = vunpack.c.l.b16 %v386
    %v1629 = vunpack.c.h.b16 %v386
    %v1630 = vunpack.c.l.b16 %v387
    %v1631 = vunpack.c.h.b16 %v387
    %v1632 = vunpack.c.l.b16 %v388
    %v1633 = vunpack.c.h.b16 %v388
    %v1634 = vunpack.c.l.b16 %v389
    %v1635 = vunpack.c.h.b16 %v389
    %v1636 = vunpack.c.l.b16 %v390
    %v1637 = vunpack.c.h.b16 %v390
    %v1638 = vunpack.c.l.b16 %v391
    %v1639 = vunpack.c.h.b16 %v391
    %v1640 = vunpack.c.l.b16 %v392
    %v1641 = vunpack.c.h.b16 %v392
    %v1642 = vunpack.c.l.b16 %v393
    %v1643 = vunpack.c.h.b16 %v393
    %v1644 = vunpack.c.l.b16 %v394
    %v1645 = vunpack.c.h.b16 %v394
    %v1646 = vunpack.c.l.b16 %v395
    %v1647 = vunpack.c.h.b16 %v395
    %v1648 = vunpack.c.l.b16 %v396
    %v1649 = vunpack.c.h.b16 %v396
    %v1650 = vunpack.c.l.b16 %v397
    %v1651 = vunpack.c.h.b16 %v397
    %v1652 = vunpack.c.l.b16 %v398
    %v1653 = vunpack.c.h.b16 %v398
    %v1654 = vunpack.c.l.b16 %v399
    %v1655 = vunpack.c.h.b16 %v399
    %v1656 = vunpack.c.l.b16 %v400
    %v1657 = vunpack.c.h.b16 %v400
    %v1658 = vunpack.c.l.b16 %v401
    %v1659 = vunpack.c.h.b16 %v401
    %v1660 = vunpack.c.l.b16 %v402
    %v1661 = vunpack.c.h.b16 %v402
    %v1662 = vunpack.c.l.b16 %v403
    %v1663 = vunpack.c.h.b16 %v403
    %v1664 = vunpack.c.l.b16 %v404
    %v1665 = vunpack.c.h.b16 %v404
    %v1666 = vunpack.c.l.b16 %v405
    %v1667 = vunpack.c.h.b16 %v405
    %v1668 = vunpack.c.l.b16 %v406
    %v1669 = vunpack.c.h.b16 %v406
    %v1670 = vunpack.c.l.b16 %v407
    %v1671 = vunpack.c.h.b16 %v407
    %v1672 = vunpack.c.l.b16 %v408
    %v1673 = vunpack.c.h.b16 %v408
    %v1674 = vunpack.c.l.b16 %v409
    %v1675 = vunpack.c.h.b16 %v409
    %v1676 = vunpack.c.l.b16 %v410
    %v1677 = vunpack.c.h.b16 %v410
    %v1678 = vunpack.c.l.b16 %v411
    %v1679 = vunpack.c.h.b16 %v411
    %v1680 = vunpack.c.l.b16 %v412
    %v1681 = vunpack.c.h.b16 %v412
    %v1682 = vunpack.c.l.b16 %v413
    %v1683 = vunpack.c.h.b16 %v413
    %v1684 = vunpack.c.l.b16 %v414
    %v1685 = vunpack.c.h.b16 %v414
    %v1686 = vunpack.c.l.b16 %v415
    %v1687 = vunpack.c.h.b16 %v415
    %v1688 = vunpack.c.l.b16 %v416
    %v1689 = vunpack.c.h.b16 %v416
    %v1690 = vunpack.c.l.b16 %v417
    %v1691 = vunpack.c.h.b16 %v417
    %v1692 = vunpack.c.l.b16 %v418
    %v1693 = vunpack.c.h.b16 %v418
    %v1694 = vunpack.c.l.b16 %v419
    %v1695 = vunpack.c.h.b16 %v419
    %v1696 = vunpack.c.l.b16 %v420
    %v1697 = vunpack.c.h.b16 %v420
    %v1698 = vunpack.c.l.b16 %v421
    %v1699 = vunpack.c.h.b16 %v421
    %v1700 = vunpack.c.l.b16 %v422
    %v1701 = vunpack.c.h.b16 %v422
    %v1702 = vunpack.c.l.b16 %v423
    %v1703 = vunpack.c.h.b16 %v423
    %v1704 = vunpack.c.l.b16 %v424
    %v1705 = vunpack.c.h.b16 %v424
    %v1706 = vunpack.c.l.b16 %v425
    %v1707 = vunpack.c.h.b16 %v425
    %v1708 = vunpack.c.l.b16 %v426
    %v1709 = vunpack.c.h.b16 %v426
    %v1710 = vunpack.c.l.b16 %v427
    %v1711 = vunpack.c.h.b16 %v427
    %v1712 = vunpack.c.l.b16 %v428
    %v1713 = vunpack.c.h.b16 %v428
    %v1714 = vunpack.c.l.b16 %v429
    %v1715 = vunpack.c.h.b16 %v429
    %v1716 = vunpack.c.l.b16 %v430
    %v1717 = vunpack.c.h.b16 %v430
    %v1718 = vunpack.c.l.b16 %v431
    %v1719 = vunpack.c.h.b16 %v431
    %v1720 = vunpack.c.l.b16 %v432
    %v1721 = vunpack.c.h.b16 %v432
    %v1722 = vunpack.c.l.b16 %v433
    %v1723 = vunpack.c.h.b16 %v433
    %v1724 = vunpack.c.l.b16 %v434
    %v1725 = vunpack.c.h.b16 %v434
    %v1726 = vunpack.c.l.b16 %v435
    %v1727 = vunpack.c.h.b16 %v435
    %v1728 = vunpack.c.l.b16 %v436
    %v1729 = vunpack.c.h.b16 %v436
    %v1730 = vunpack.c.l.b16 %v437
    %v1731 = vunpack.c.h.b16 %v437
    %v1732 = vunpack.c.l.b16 %v438
    %v1733 = vunpack.c.h.b16 %v438
    %v1734 = vunpack.c.l.b16 %v439
    %v1735 = vunpack.c.h.b16 %v439
    %v1736 = vunpack.c.l.b16 %v440
    %v1737 = vunpack.c.h.b16 %v440
    %v1738 = vunpack.c.l.b16 %v441
    %v1739 = vunpack.c.h.b16 %v441
    %v1740 = vunpack.c.l.b16 %v442
    %v1741 = vunpack.c.h.b16 %v442
    %v1742 = vunpack.c.l.b16 %v443
    %v1743 = vunpack.c.h.b16 %v443
    %v1744 = vunpack.c.l.b16 %v444
    %v1745 = vunpack.c.h.b16 %v444
    %v1746 = vunpack.c.l.b16 %v445
    %v1747 = vunpack.c.h.b16 %v445
    %v1748 = vunpack.c.l.b16 %v446
    %v1749 = vunpack.c.h.b16 %v446
    %v1750 = vunpack.c.l.b16 %v447
    %v1751 = vunpack.c.h.b16 %v447
    %v1752 = vunpack.c.l.b16 %v448
    %v1753 = vunpack.c.h.b16 %v448
    %v1754 = vunpack.c.l.b16 %v449
    %v1755 = vunpack.c.h.b16 %v449
    %v1756 = vunpack.c.l.b16 %v450
    %v1757 = vunpack.c.h.b16 %v450
    %v1758 = vunpack.c.l.b16 %v451
    %v1759 = vunpack.c.h.b16 %v451
    %v1760 = vunpack.c.l.b16 %v452
    %v1761 = vunpack.c.h.b16 %v452
    %v1762 = vunpack.c.l.b16 %v453
    %v1763 = vunpack.c.h.b16 %v453
    %v1764 = vunpack.c.l.b16 %v454
    %v1765 = vunpack.c.h.b16 %v454
    %v1766 = vunpack.c.l.b16 %v455
    %v1767 = vunpack.c.h.b16 %v455
    %v1768 = vunpack.c.l.b16 %v456
    %v1769 = vunpack.c.h.b16 %v456
    %v1770 = vunpack.c.l.b16 %v457
    %v1771 = vunpack.c.h.b16 %v457
    %v1772 = vunpack.c.l.b16 %v458
    %v1773 = vunpack.c.h.b16 %v458
    %v1774 = vunpack.c.l.b16 %v459
    %v1775 = vunpack.c.h.b16 %v459
    %v1776 = vunpack.c.l.b16 %v460
    %v1777 = vunpack.c.h.b16 %v460
    %v1778 = vunpack.c.l.b16 %v461
    %v1779 = vunpack.c.h.b16 %v461
    %v1780 = vunpack.c.l.b16 %v462
    %v1781 = vunpack.c.h.b16 %v462
    %v1782 = vunpack.c.l.b16 %v463
    %v1783 = vunpack.c.h.b16 %v463
    %v1784 = vunpack.c.l.b16 %v464
    %v1785 = vunpack.c.h.b16 %v464
    %v1786 = vunpack.c.l.b16 %v465
    %v1787 = vunpack.c.h.b16 %v465
    %v1788 = vunpack.c.l.b16 %v466
    %v1789 = vunpack.c.h.b16 %v466
    %v1790 = vunpack.c.l.b16 %v467
    %v1791 = vunpack.c.h.b16 %v467
    %v1792 = vunpack.c.l.b16 %v468
    %v1793 = vunpack.c.h.b16 %v468
    %v1794 = vunpack.c.l.b16 %v469
    %v1795 = vunpack.c.h.b16 %v469
    %v1796 = vunpack.c.l.b16 %v470
    %v1797 = vunpack.c.h.b16 %v470
    %v1798 = vunpack.c.l.b16 %v471
    %v1799 = vunpack.c.h.b16 %v471
    %v1800 = vunpack.c.l.b16 %v472
    %v1801 = vunpack.c.h.b16 %v472
    %v1802 = vunpack.c.l.b16 %v473
    %v1803 = vunpack.c.h.b16 %v473
    %v1804 = vunpack.c.l.b16 %v474
    %v1805 = vunpack.c.h.b16 %v474
    %v1806 = vunpack.c.l.b16 %v475
    %v1807 = vunpack.c.h.b16 %v475
    %v1808 = vunpack.c.l.b16 %v476
    %v1809 = vunpack.c.h.b16 %v476
    %v1810 = vunpack.c.l.b16 %v477
    %v1811 = vunpack.c.h.b16 %v477
    %v1812 = vunpack.c.l.b16 %v478
    %v1813 = vunpack.c.h.b16 %v478
    %v1814 = vunpack.c.l.b16 %v479
    %v1815 = vunpack.c.h.b16 %v479
    %v1816 = vunpack.c.l.b16 %v480
    %v1817 = vunpack.c.h.b16 %v480
    %v1818 = vunpack.c.l.b16 %v481
    %v1819 = vunpack.c.h.b16 %v481
    %v1820 = vunpack.c.l.b16 %v482
    %v1821 = vunpack.c.h.b16 %v482
    %v1822 = vunpack.c.l.b16 %v483
    %v1823 = vunpack.c.h.b16 %v483
    %v1824 = vunpack.c.l.b16 %v484
    %v1825 = vunpack.c.h.b16 %v484
    %v1826 = vunpack.c.l.b16 %v485
    %v1827 = vunpack.c.h.b16 %v485
    %v1828 = vunpack.c.l.b16 %v486
    %v1829 = vunpack.c.h.b16 %v486
    %v1830 = vunpack.c.l.b16 %v487
    %v1831 = vunpack.c.h.b16 %v487
    %v1832 = vunpack.c.l.b16 %v488
    %v1833 = vunpack.c.h.b16 %v488
    %v1834 = vunpack.c.l.b16 %v489
    %v1835 = vunpack.c.h.b16 %v489
    %v1836 = vunpack.c.l.b16 %v490
    %v1837 = vunpack.c.h.b16 %v490
    %v1838 = vunpack.c.l.b16 %v491
    %v1839 = vunpack.c.h.b16 %v491
    %v1840 = vunpack.c.l.b16 %v492
    %v1841 = vunpack.c.h.b16 %v492
    %v1842 = vunpack.c.l.b16 %v493
    %v1843 = vunpack.c.h.b16 %v493
    %v1844 = vunpack.c.l.b16 %v494
    %v1845 = vunpack.c.h.b16 %v494
    %v1846 = vunpack.c.l.b16 %v495
    %v1847 = vunpack.c.h.b16 %v495
    %v1848 = vunpack.c.l.b16 %v496
    %v1849 = vunpack.c.h.b16 %v496
    %v1850 = vunpack.c.l.b16 %v497
    %v1851 = vunpack.c.h.b16 %v497
    %v1852 = vunpack.c.l.b16 %v498
    %v1853 = vunpack.c.h.b16 %v498
    %v1854 = vunpack.c.l.b16 %v499
    %v1855 = vunpack.c.h.b16 %v499
    %v1856 = vunpack.c.l.b16 %v500
    %v1857 = vunpack.c.h.b16 %v500
    %v1858 = vunpack.c.l.b16 %v501
    %v1859 = vunpack.c.h.b16 %v501
    %v1860 = vunpack.c.l.b16 %v502
    %v1861 = vunpack.c.h.b16 %v502
    %v1862 = vunpack.c.l.b16 %v503
    %v1863 = vunpack.c.h.b16 %v503
    %v1864 = vunpack.c.l.b16 %v504
    %v1865 = vunpack.c.h.b16 %v504
    %v1866 = vunpack.c.l.b16 %v505
    %v1867 = vunpack.c.h.b16 %v505
    %v1868 = vunpack.c.l.b16 %v506
    %v1869 = vunpack.c.h.b16 %v506
    %v1870 = vunpack.c.l.b16 %v507
    %v1871 = vunpack.c.h.b16 %v507
    %v1872 = vunpack.c.l.b16 %v508
    %v1873 = vunpack.c.h.b16 %v508
    %v1874 = vunpack.c.l.b16 %v509
    %v1875 = vunpack.c.h.b16 %v509
    %v1876 = vunpack.c.l.b16 %v510
    %v1877 = vunpack.c.h.b16 %v510
    %v1878 = vunpack.c.l.b16 %v511
    %v1879 = vunpack.c.h.b16 %v511
    %v1880 = vunpack.c.l.b16 %v512
    %v1881 = vunpack.c.h.b16 %v512
    %v1882 = vunpack.c.l.b16 %v513
    %v1883 = vunpack.c.h.b16 %v513
    %v1884 = vunpack.c.l.b16 %v514
    %v1885 = vunpack.c.h.b16 %v514
    %v1886 = vunpack.c.l.b16 %v515
    %v1887 = vunpack.c.h.b16 %v515
    %v1888 = vunpack.c.l.b16 %v516
    %v1889 = vunpack.c.h.b16 %v516
    %v1890 = vunpack.c.l.b16 %v517
    %v1891 = vunpack.c.h.b16 %v517
    %v1892 = vunpack.c.l.b16 %v518
    %v1893 = vunpack.c.h.b16 %v518
    %v1894 = vunpack.c.l.b16 %v519
    %v1895 = vunpack.c.h.b16 %v519
    %v1896 = vunpack.c.l.b16 %v520
    %v1897 = vunpack.c.h.b16 %v520
    %v1898 = vunpack.c.l.b16 %v521
    %v1899 = vunpack.c.h.b16 %v521
    %v1900 = vunpack.c.l.b16 %v522
    %v1901 = vunpack.c.h.b16 %v522
    %v1902 = vunpack.c.l.b16 %v523
    %v1903 = vunpack.c.h.b16 %v523
    %v1904 = vunpack.c.l.b16 %v524
    %v1905 = vunpack.c.h.b16 %v524
    %v1906 = vunpack.c.l.b16 %v525
    %v1907 = vunpack.c.h.b16 %v525
    %v1908 = vunpack.c.l.b16 %v526
    %v1909 = vunpack.c.h.b16 %v526
    %v1910 = vunpack.c.l.b16 %v527
    %v1911 = vunpack.c.h.b16 %v527
    %v1912 = vunpack.c.l.b16 %v528
    %v1913 = vunpack.c.h.b16 %v528
    %v1914 = vunpack.c.l.b16 %v529
    %v1915 = vunpack.c.h.b16 %v529
    %v1916 = vunpack.c.l.b16 %v530
    %v1917 = vunpack.c.h.b16 %v530
    %v1918 = vunpack.c.l.b16 %v531
    %v1919 = vunpack.c.h.b16 %v531
    %v1920 = vunpack.c.l.b16 %v532
    %v1921 = vunpack.c.h.b16 %v532
    %v1922 = vunpack.c.l.b16 %v533
    %v1923 = vunpack.c.h.b16 %v533
    %v1924 = vunpack.c.l.b16 %v534
    %v1925 = vunpack.c.h.b16 %v534
    %v1926 = vunpack.c.l.b16 %v535
    %v1927 = vunpack.c.h.b16 %v535
    %v1928 = vunpack.c.l.b16 %v536
    %v1929 = vunpack.c.h.b16 %v536
    %v1930 = vunpack.c.l.b16 %v537
    %v1931 = vunpack.c.h.b16 %v537
    %v1932 = vunpack.c.l.b16 %v538
    %v1933 = vunpack.c.h.b16 %v538
    %v1934 = vunpack.c.l.b16 %v539
    %v1935 = vunpack.c.h.b16 %v539
    %v1936 = vunpack.c.l.b16 %v540
    %v1937 = vunpack.c.h.b16 %v540
    %v1938 = vunpack.c.l.b16 %v541
    %v1939 = vunpack.c.h.b16 %v541
    %v1940 = vunpack.c.l.b16 %v542
    %v1941 = vunpack.c.h.b16 %v542
    %v1942 = vunpack.c.l.b16 %v543
    %v1943 = vunpack.c.h.b16 %v543
    %v1944 = vunpack.c.l.b16 %v544
    %v1945 = vunpack.c.h.b16 %v544
    %v1946 = vunpack.c.l.b16 %v545
    %v1947 = vunpack.c.h.b16 %v545
    %v1948 = vunpack.c.l.b16 %v546
    %v1949 = vunpack.c.h.b16 %v546
    %v1950 = vunpack.c.l.b16 %v547
    %v1951 = vunpack.c.h.b16 %v547
    %v1952 = vunpack.c.l.b16 %v548
    %v1953 = vunpack.c.h.b16 %v548
    %v1954 = vunpack.c.l.b16 %v549
    %v1955 = vunpack.c.h.b16 %v549
    %v1956 = vunpack.c.l.b16 %v550
    %v1957 = vunpack.c.h.b16 %v550
    %v1958 = vunpack.c.l.b16 %v551
    %v1959 = vunpack.c.h.b16 %v551
    %v1960 = vunpack.c.l.b16 %v552
    %v1961 = vunpack.c.h.b16 %v552
    %v1962 = vunpack.c.l.b16 %v553
    %v1963 = vunpack.c.h.b16 %v553
    %v1964 = vunpack.c.l.b16 %v554
    %v1965 = vunpack.c.h.b16 %v554
    %v1966 = vpack.c.b16 %v1078, %v1070
    %v1967 = vpack.c.b16 %v1079, %v1071
    %v1968 = vpack.c.b16 %v1080, %v1072
    %v1969 = vpack.c.b16 %v1081, %v1073
    %v1970 = vpack.c.b16 %v1082, %v1074
    %v1971 = vpack.c.b16 %v1083, %v1075
    %v1972 = vpack.c.b16 %v1084, %v1076
    %v1973 = vpack.c.b16 %v1085, %v1077
    %v1974 = vpack.c.b16 %v1094, %v1086
    %v1975 = vpack.c.b16 %v1095, %v1087
    %v1976 = vpack.c.b16 %v1096, %v1088
    %v1977 = vpack.c.b16 %v1097, %v1089
    %v1978 = vpack.c.b16 %v1098, %v1090
    %v1979 = vpack.c.b16 %v1099, %v1091
    %v1980 = vpack.c.b16 %v1100, %v1092
    %v1981 = vpack.c.b16 %v1101, %v1093
    %v1982 = vpack.c.b16 %v1110, %v1102
    %v1983 = vpack.c.b16 %v1111, %v1103
    %v1984 = vpack.c.b16 %v1112, %v1104
    %v1985 = vpack.c.b16 %v1113, %v1105
    %v1986 = vpack.c.b16 %v1114, %v1106
    %v1987 = vpack.c.b16 %v1115, %v1107
    %v1988 = vpack.c.b16 %v1116, %v1108
    %v1989 = vpack.c.b16 %v1117, %v1109
    %v1990 = vpack.c.b16 %v1126, %v1118
    %v1991 = vpack.c.b16 %v1127, %v1119
    %v1992 = vpack.c.b16 %v1128, %v1120
    %v1993 = vpack.c.b16 %v1129, %v1121
    %v1994 = vpack.c.b16 %v1130, %v1122
    %v1995 = vpack.c.b16 %v1131, %v1123
    %v1996 = vpack.c.b16 %v1132, %v1124
    %v1997 = vpack.c.b16 %v1133, %v1125
    %v1998 = vpack.c.b16 %v1142, %v1134
    %v1999 = vpack.c.b16 %v1143, %v1135
    %v2000 = vpack.c.b16 %v1144, %v1136
    %v2001 = vpack.c.b16 %v1145, %v1137
    %v2002 = vpack.c.b16 %v1146, %v1138
    %v2003 = vpack.c.b16 %v1147, %v1139
    %v2004 = vpack.c.b16 %v1148, %v1140
    %v2005 = vpack.c.b16 %v1149, %v1141
    %v2006 = vpack.c.b16 %v1158, %v1150
    %v2007 = vpack.c.b16 %v1159, %v1151
    %v2008 = vpack.c.b16 %v1160, %v1152
    %v2009 = vpack.c.b16 %v1161, %v1153
    %v2010 = vpack.c.b16 %v1162, %v1154
    %v2011 = vpack.c.b16 %v1163, %v1155
    %v2012 = vpack.c.b16 %v1164, %v1156
    %v2013 = vpack.c.b16 %v1165, %v1157
    %v2014 = vpack.c.b16 %v1174, %v1166
    %v2015 = vpack.c.b16 %v1175, %v1167
    %v2016 = vpack.c.b16 %v1176, %v1168
    %v2017 = vpack.c.b16 %v1177, %v1169
    %v2018 = vpack.c.b16 %v1178, %v1170
    %v2019 = vpack.c.b16 %v1179, %v1171
    %v2020 = vpack.c.b16 %v1180, %v1172
    %v2021 = vpack.c.b16 %v1181, %v1173
    %v2022 = vpack.c.b16 %v1190, %v1182
    %v2023 = vpack.c.b16 %v1191, %v1183
    %v2024 = vpack.c.b16 %v1192, %v1184
    %v2025 = vpack.c.b16 %v1193, %v1185
    %v2026 = vpack.c.b16 %v1194, %v1186
    %v2027 = vpack.c.b16 %v1195, %v1187
    %v2028 = vpack.c.b16 %v1196, %v1188
    %v2029 = vpack.c.b16 %v1197, %v1189
    %v2030 = vpack.c.b16 %v1206, %v1198
    %v2031 = vpack.c.b16 %v1207, %v1199
    %v2032 = vpack.c.b16 %v1208, %v1200
    %v2033 = vpack.c.b16 %v1209, %v1201
    %v2034 = vpack.c.b16 %v1210, %v1202
    %v2035 = vpack.c.b16 %v1211, %v1203
    %v2036 = vpack.c.b16 %v1212, %v1204
    %v2037 = vpack.c.b16 %v1213, %v1205
    %v2038 = vpack.c.b16 %v1222, %v1214
    %v2039 = vpack.c.b16 %v1223, %v1215
    %v2040 = vpack.c.b16 %v1224, %v1216
    %v2041 = vpack.c.b16 %v1225, %v1217
    %v2042 = vpack.c.b16 %v1226, %v1218
    %v2043 = vpack.c.b16 %v1227, %v1219
    %v2044 = vpack.c.b16 %v1228, %v1220
    %v2045 = vpack.c.b16 %v1229, %v1221
    %v2046 = vpack.c.b16 %v1238, %v1230
    %v2047 = vpack.c.b16 %v1239, %v1231
    %v2048 = vpack.c.b16 %v1240, %v1232
    %v2049 = vpack.c.b16 %v1241, %v1233
    %v2050 = vpack.c.b16 %v1242, %v1234
    %v2051 = vpack.c.b16 %v1243, %v1235
    %v2052 = vpack.c.b16 %v1244, %v1236
    %v2053 = vpack.c.b16 %v1245, %v1237
    %v2054 = vpack.c.b16 %v1254, %v1246
    %v2055 = vpack.c.b16 %v1255, %v1247
    %v2056 = vpack.c.b16 %v1256, %v1248
    %v2057 = vpack.c.b16 %v1257, %v1249
    %v2058 = vpack.c.b16 %v1258, %v1250
    %v2059 = vpack.c.b16 %v1259, %v1251
    %v2060 = vpack.c.b16 %v1260, %v1252
    %v2061 = vpack.c.b16 %v1261, %v1253
    %v2062 = vpack.c.b16 %v1270, %v1262
    %v2063 = vpack.c.b16 %v1271, %v1263
    %v2064 = vpack.c.b16 %v1272, %v1264
    %v2065 = vpack.c.b16 %v1273, %v1265
    %v2066 = vpack.c.b16 %v1274, %v1266
    %v2067 = vpack.c.b16 %v1275, %v1267
    %v2068 = vpack.c.b16 %v1276, %v1268
    %v2069 = vpack.c.b16 %v1277, %v1269
    %v2070 = vpack.c.b16 %v1286, %v1278
    %v2071 = vpack.c.b16 %v1287, %v1279
    %v2072 = vpack.c.b16 %v1288, %v1280
    %v2073 = vpack.c.b16 %v1289, %v1281
    %v2074 = vpack.c.b16 %v1290, %v1282
    %v2075 = vpack.c.b16 %v1291, %v1283
    %v2076 = vpack.c.b16 %v1292, %v1284
    %v2077 = vpack.c.b16 %v1293, %v1285
    %v2078 = vpack.c.b16 %v1302, %v1294
    %v2079 = vpack.c.b16 %v1303, %v1295
    %v2080 = vpack.c.b16 %v1304, %v1296
    %v2081 = vpack.c.b16 %v1305, %v1297
    %v2082 = vpack.c.b16 %v1306, %v1298
    %v2083 = vpack.c.b16 %v1307, %v1299
    %v2084 = vpack.c.b16 %v1308, %v1300
    %v2085 = vpack.c.b16 %v1309, %v1301
    %v2086 = vpack.c.b16 %v1318, %v1310
    %v2087 = vpack.c.b16 %v1319, %v1311
    %v2088 = vpack.c.b16 %v1320, %v1312
    %v2089 = vpack.c.b16 %v1321, %v1313
    %v2090 = vpack.c.b16 %v1322, %v1314
    %v2091 = vpack.c.b16 %v1323, %v1315
    %v2092 = vpack.c.b16 %v1324, %v1316
    %v2093 = vpack.c.b16 %v1325, %v1317
    %v2094 = vpack.c.b16 %v1334, %v1326
    %v2095 = vpack.c.b16 %v1335, %v1327
    %v2096 = vpack.c.b16 %v1336, %v1328
    %v2097 = vpack.c.b16 %v1337, %v1329
    %v2098 = vpack.c.b16 %v1338, %v1330
    %v2099 = vpack.c.b16 %v1339, %v1331
    %v2100 = vpack.c.b16 %v1340, %v1332
    %v2101 = vpack.c.b16 %v1341, %v1333
    %v2102 = vpack.c.b16 %v1350, %v1342
    %v2103 = vpack.c.b16 %v1351, %v1343
    %v2104 = vpack.c.b16 %v1352, %v1344
    %v2105 = vpack.c.b16 %v1353, %v1345
    %v2106 = vpack.c.b16 %v1354, %v1346
    %v2107 = vpack.c.b16 %v1355, %v1347
    %v2108 = vpack.c.b16 %v1356, %v1348
    %v2109 = vpack.c.b16 %v1357, %v1349
    %v2110 = vpack.c.b16 %v1366, %v1358
    %v2111 = vpack.c.b16 %v1367, %v1359
    %v2112 = vpack.c.b16 %v1368, %v1360
    %v2113 = vpack.c.b16 %v1369, %v1361
    %v2114 = vpack.c.b16 %v1370, %v1362
    %v2115 = vpack.c.b16 %v1371, %v1363
    %v2116 = vpack.c.b16 %v1372, %v1364
    %v2117 = vpack.c.b16 %v1373, %v1365
    %v2118 = vpack.c.b16 %v1382, %v1374
    %v2119 = vpack.c.b16 %v1383, %v1375
    %v2120 = vpack.c.b16 %v1384, %v1376
    %v2121 = vpack.c.b16 %v1385, %v1377
    %v2122 = vpack.c.b16 %v1386, %v1378
    %v2123 = vpack.c.b16 %v1387, %v1379
    %v2124 = vpack.c.b16 %v1388, %v1380
    %v2125 = vpack.c.b16 %v1389, %v1381
    %v2126 = vpack.c.b16 %v1398, %v1390
    %v2127 = vpack.c.b16 %v1399, %v1391
    %v2128 = vpack.c.b16 %v1400, %v1392
    %v2129 = vpack.c.b16 %v1401, %v1393
    %v2130 = vpack.c.b16 %v1402, %v1394
    %v2131 = vpack.c.b16 %v1403, %v1395
    %v2132 = vpack.c.b16 %v1404, %v1396
    %v2133 = vpack.c.b16 %v1405, %v1397
    %v2134 = vpack.c.b16 %v1414, %v1406
    %v2135 = vpack.c.b16 %v1415, %v1407
    %v2136 = vpack.c.b16 %v1416, %v1408
    %v2137 = vpack.c.b16 %v1417, %v1409
    %v2138 = vpack.c.b16 %v1418, %v1410
    %v2139 = vpack.c.b16 %v1419, %v1411
    %v2140 = vpack.c.b16 %v1420, %v1412
    %v2141 = vpack.c.b16 %v1421, %v1413
    %v2142 = vpack.c.b16 %v1430, %v1422
    %v2143 = vpack.c.b16 %v1431, %v1423
    %v2144 = vpack.c.b16 %v1432, %v1424
    %v2145 = vpack.c.b16 %v1433, %v1425
    %v2146 = vpack.c.b16 %v1434, %v1426
    %v2147 = vpack.c.b16 %v1435, %v1427
    %v2148 = vpack.c.b16 %v1436, %v1428
    %v2149 = vpack.c.b16 %v1437, %v1429
    %v2150 = vpack.c.b16 %v1446, %v1438
    %v2151 = vpack.c.b16 %v1447, %v1439
    %v2152 = vpack.c.b16 %v1448, %v1440
    %v2153 = vpack.c.b16 %v1449, %v1441
    %v2154 = vpack.c.b16 %v1450, %v1442
    %v2155 = vpack.c.b16 %v1451, %v1443
    %v2156 = vpack.c.b16 %v1452, %v1444
    %v2157 = vpack.c.b16 %v1453, %v1445
    %v2158 = vpack.c.b16 %v1462, %v1454
    %v2159 = vpack.c.b16 %v1463, %v1455
    %v2160 = vpack.c.b16 %v1464, %v1456
    %v2161 = vpack.c.b16 %v1465, %v1457
    %v2162 = vpack.c.b16 %v1466, %v1458
    %v2163 = vpack.c.b16 %v1467, %v1459
    %v2164 = vpack.c.b16 %v1468, %v1460
    %v2165 = vpack.c.b16 %v1469, %v1461
    %v2166 = vpack.c.b16 %v1478, %v1470
    %v2167 = vpack.c.b16 %v1479, %v1471
    %v2168 = vpack.c.b16 %v1480, %v1472
    %v2169 = vpack.c.b16 %v1481, %v1473
    %v2170 = vpack.c.b16 %v1482, %v1474
    %v2171 = vpack.c.b16 %v1483, %v1475
    %v2172 = vpack.c.b16 %v1484, %v1476
    %v2173 = vpack.c.b16 %v1485, %v1477
    %v2174 = vpack.c.b16 %v1494, %v1486
    %v2175 = vpack.c.b16 %v1495, %v1487
    %v2176 = vpack.c.b16 %v1496, %v1488
    %v2177 = vpack.c.b16 %v1497, %v1489
    %v2178 = vpack.c.b16 %v1498, %v1490
    %v2179 = vpack.c.b16 %v1499, %v1491
    %v2180 = vpack.c.b16 %v1500, %v1492
    %v2181 = vpack.c.b16 %v1501, %v1493
    %v2182 = vpack.c.b16 %v1510, %v1502
    %v2183 = vpack.c.b16 %v1511, %v1503
    %v2184 = vpack.c.b16 %v1512, %v1504
    %v2185 = vpack.c.b16 %v1513, %v1505
    %v2186 = vpack.c.b16 %v1514, %v1506
    %v2187 = vpack.c.b16 %v1515, %v1507
    %v2188 = vpack.c.b16 %v1516, %v1508
    %v2189 = vpack.c.b16 %v1517, %v1509
    %v2190 = vpack.c.b16 %v1526, %v1518
    %v2191 = vpack.c.b16 %v1527, %v1519
    %v2192 = vpack.c.b16 %v1528, %v1520
    %v2193 = vpack.c.b16 %v1529, %v1521
    %v2194 = vpack.c.b16 %v1530, %v1522
    %v2195 = vpack.c.b16 %v1531, %v1523
    %v2196 = vpack.c.b16 %v1532, %v1524
    %v2197 = vpack.c.b16 %v1533, %v1525
    %v2198 = vpack.c.b16 %v1542, %v1534
    %v2199 = vpack.c.b16 %v1543, %v1535
    %v2200 = vpack.c.b16 %v1544, %v1536
    %v2201 = vpack.c.b16 %v1545, %v1537
    %v2202 = vpack.c.b16 %v1546, %v1538
    %v2203 = vpack.c.b16 %v1547, %v1539
    %v2204 = vpack.c.b16 %v1548, %v1540
    %v2205 = vpack.c.b16 %v1549, %v1541
    %v2206 = vpack.c.b16 %v1558, %v1550
    %v2207 = vpack.c.b16 %v1559, %v1551
    %v2208 = vpack.c.b16 %v1560, %v1552
    %v2209 = vpack.c.b16 %v1561, %v1553
    %v2210 = vpack.c.b16 %v1562, %v1554
    %v2211 = vpack.c.b16 %v1563, %v1555
    %v2212 = vpack.c.b16 %v1564, %v1556
    %v2213 = vpack.c.b16 %v1565, %v1557
    %v2214 = vpack.c.b16 %v1574, %v1566
    %v2215 = vpack.c.b16 %v1575, %v1567
    %v2216 = vpack.c.b16 %v1576, %v1568
    %v2217 = vpack.c.b16 %v1577, %v1569
    %v2218 = vpack.c.b16 %v1578, %v1570
    %v2219 = vpack.c.b16 %v1579, %v1571
    %v2220 = vpack.c.b16 %v1580, %v1572
    %v2221 = vpack.c.b16 %v1581, %v1573
    %v2222 = vpack.c.b16 %v1590, %v1582
    %v2223 = vpack.c.b16 %v1591, %v1583
    %v2224 = vpack.c.b16 %v1592, %v1584
    %v2225 = vpack.c.b16 %v1593, %v1585
    %v2226 = vpack.c.b16 %v1594, %v1586
    %v2227 = vpack.c.b16 %v1595, %v1587
    %v2228 = vpack.c.b16 %v1596, %v1588
    %v2229 = vpack.c.b16 %v1597, %v1589
    %v2230 = vpack.c.b16 %v1606, %v1598
    %v2231 = vpack.c.b16 %v1607, %v1599
    %v2232 = vpack.c.b16 %v1608, %v1600
    %v2233 = vpack.c.b16 %v1609, %v1601
    %v2234 = vpack.c.b16 %v1610, %v1602
    %v2235 = vpack.c.b16 %v1611, %v1603
    %v2236 = vpack.c.b16 %v1612, %v1604
    %v2237 = vpack.c.b16 %v1613, %v1605
    %v2238 = vpack.c.b16 %v1622, %v1614
    %v2239 = vpack.c.b16 %v1623, %v1615
    %v2240 = vpack.c.b16 %v1624, %v1616
    %v2241 = vpack.c.b16 %v1625, %v1617
    %v2242 = vpack.c.b16 %v1626, %v1618
    %v2243 = vpack.c.b16 %v1627, %v1619
    %v2244 = vpack.c.b16 %v1628, %v1620
    %v2245 = vpack.c.b16 %v1629, %v1621
    %v2246 = vpack.c.b16 %v1638, %v1630
    %v2247 = vpack.c.b16 %v1639, %v1631
    %v2248 = vpack.c.b16 %v1640, %v1632
    %v2249 = vpack.c.b16 %v1641, %v1633
    %v2250 = vpack.c.b16 %v1642, %v1634
    %v2251 = vpack.c.b16 %v1643, %v1635
    %v2252 = vpack.c.b16 %v1644, %v1636
    %v2253 = vpack.c.b16 %v1645, %v1637
    %v2254 = vpack.c.b16 %v1654, %v1646
    %v2255 = vpack.c.b16 %v1655, %v1647
    %v2256 = vpack.c.b16 %v1656, %v1648
    %v2257 = vpack.c.b16 %v1657, %v1649
    %v2258 = vpack.c.b16 %v1658, %v1650
    %v2259 = vpack.c.b16 %v1659, %v1651
    %v2260 = vpack.c.b16 %v1660, %v1652
    %v2261 = vpack.c.b16 %v1661, %v1653
    %v2262 = vpack.c.b16 %v1670, %v1662
    %v2263 = vpack.c.b16 %v1671, %v1663
    %v2264 = vpack.c.b16 %v1672, %v1664
    %v2265 = vpack.c.b16 %v1673, %v1665
    %v2266 = vpack.c.b16 %v1674, %v1666
    %v2267 = vpack.c.b16 %v1675, %v1667
    %v2268 = vpack.c.b16 %v1676, %v1668
    %v2269 = vpack.c.b16 %v1677, %v1669
    %v2270 = vpack.c.b16 %v1686, %v1678
    %v2271 = vpack.c.b16 %v1687, %v1679
    %v2272 = vpack.c.b16 %v1688, %v1680
    %v2273 = vpack.c.b16 %v1689, %v1681
    %v2274 = vpack.c.b16 %v1690, %v1682
    %v2275 = vpack.c.b16 %v1691, %v1683
    %v2276 = vpack.c.b16 %v1692, %v1684
    %v2277 = vpack.c.b16 %v1693, %v1685
    %v2278 = vpack.c.b16 %v1702, %v1694
    %v2279 = vpack.c.b16 %v1703, %v1695
    %v2280 = vpack.c.b16 %v1704, %v1696
    %v2281 = vpack.c.b16 %v1705, %v1697
    %v2282 = vpack.c.b16 %v1706, %v1698
    %v2283 = vpack.c.b16 %v1707, %v1699
    %v2284 = vpack.c.b16 %v1708, %v1700
    %v2285 = vpack.c.b16 %v1709, %v1701
    %v2286 = vpack.c.b16 %v1718, %v1710
    %v2287 = vpack.c.b16 %v1719, %v1711
    %v2288 = vpack.c.b16 %v1720, %v1712
    %v2289 = vpack.c.b16 %v1721, %v1713
    %v2290 = vpack.c.b16 %v1722, %v1714
    %v2291 = vpack.c.b16 %v1723, %v1715
    %v2292 = vpack.c.b16 %v1724, %v1716
    %v2293 = vpack.c.b16 %v1725, %v1717
    %v2294 = vpack.c.b16 %v1734, %v1726
    %v2295 = vpack.c.b16 %v1735, %v1727
    %v2296 = vpack.c.b16 %v1736, %v1728
    %v2297 = vpack.c.b16 %v1737, %v1729
    %v2298 = vpack.c.b16 %v1738, %v1730
    %v2299 = vpack.c.b16 %v1739, %v1731
    %v2300 = vpack.c.b16 %v1740, %v1732
    %v2301 = vpack.c.b16 %v1741, %v1733
    %v2302 = vpack.c.b16 %v1750, %v1742
    %v2303 = vpack.c.b16 %v1751, %v1743
    %v2304 = vpack.c.b16 %v1752, %v1744
    %v2305 = vpack.c.b16 %v1753, %v1745
    %v2306 = vpack.c.b16 %v1754, %v1746
    %v2307 = vpack.c.b16 %v1755, %v1747
    %v2308 = vpack.c.b16 %v1756, %v1748
    %v2309 = vpack.c.b16 %v1757, %v1749
    %v2310 = vpack.c.b16 %v1766, %v1758
    %v2311 = vpack.c.b16 %v1767, %v1759
    %v2312 = vpack.c.b16 %v1768, %v1760
    %v2313 = vpack.c.b16 %v1769, %v1761
    %v2314 = vpack.c.b16 %v1770, %v1762
    %v2315 = vpack.c.b16 %v1771, %v1763
    %v2316 = vpack.c.b16 %v1772, %v1764
    %v2317 = vpack.c.b16 %v1773, %v1765
    %v2318 = vpack.c.b16 %v1782, %v1774
    %v2319 = vpack.c.b16 %v1783, %v1775
    %v2320 = vpack.c.b16 %v1784, %v1776
    %v2321 = vpack.c.b16 %v1785, %v1777
    %v2322 = vpack.c.b16 %v1786, %v1778
    %v2323 = vpack.c.b16 %v1787, %v1779
    %v2324 = vpack.c.b16 %v1788, %v1780
    %v2325 = vpack.c.b16 %v1789, %v1781
    %v2326 = vpack.c.b16 %v1798, %v1790
    %v2327 = vpack.c.b16 %v1799, %v1791
    %v2328 = vpack.c.b16 %v1800, %v1792
    %v2329 = vpack.c.b16 %v1801, %v1793
    %v2330 = vpack.c.b16 %v1802, %v1794
    %v2331 = vpack.c.b16 %v1803, %v1795
    %v2332 = vpack.c.b16 %v1804, %v1796
    %v2333 = vpack.c.b16 %v1805, %v1797
    %v2334 = vpack.c.b16 %v1814, %v1806
    %v2335 = vpack.c.b16 %v1815, %v1807
    %v2336 = vpack.c.b16 %v1816, %v1808
    %v2337 = vpack.c.b16 %v1817, %v1809
    %v2338 = vpack.c.b16 %v1818, %v1810
    %v2339 = vpack.c.b16 %v1819, %v1811
    %v2340 = vpack.c.b16 %v1820, %v1812
    %v2341 = vpack.c.b16 %v1821, %v1813
    %v2342 = vpack.c.b16 %v1830, %v1822
    %v2343 = vpack.c.b16 %v1831, %v1823
    %v2344 = vpack.c.b16 %v1832, %v1824
    %v2345 = vpack.c.b16 %v1833, %v1825
    %v2346 = vpack.c.b16 %v1834, %v1826
    %v2347 = vpack.c.b16 %v1835, %v1827
    %v2348 = vpack.c.b16 %v1836, %v1828
    %v2349 = vpack.c.b16 %v1837, %v1829
    %v2350 = vpack.c.b16 %v1846, %v1838
    %v2351 = vpack.c.b16 %v1847, %v1839
    %v2352 = vpack.c.b16 %v1848, %v1840
    %v2353 = vpack.c.b16 %v1849, %v1841
    %v2354 = vpack.c.b16 %v1850, %v1842
    %v2355 = vpack.c.b16 %v1851, %v1843
    %v2356 = vpack.c.b16 %v1852, %v1844
    %v2357 = vpack.c.b16 %v1853, %v1845
    %v2358 = vpack.c.b16 %v1862, %v1854
    %v2359 = vpack.c.b16 %v1863, %v1855
    %v2360 = vpack.c.b16 %v1864, %v1856
    %v2361 = vpack.c.b16 %v1865, %v1857
    %v2362 = vpack.c.b16 %v1866, %v1858
    %v2363 = vpack.c.b16 %v1867, %v1859
    %v2364 = vpack.c.b16 %v1868, %v1860
    %v2365 = vpack.c.b16 %v1869, %v1861
    %v2366 = vpack.c.b16 %v1878, %v1870
    %v2367 = vpack.c.b16 %v1879, %v1871
    %v2368 = vpack.c.b16 %v1880, %v1872
    %v2369 = vpack.c.b16 %v1881, %v1873
    %v2370 = vpack.c.b16 %v1882, %v1874
    %v2371 = vpack.c.b16 %v1883, %v1875
    %v2372 = vpack.c.b16 %v1884, %v1876
    %v2373 = vpack.c.b16 %v1885, %v1877
    %v2374 = vpack.c.b16 %v1894, %v1886
    %v2375 = vpack.c.b16 %v1895, %v1887
    %v2376 = vpack.c.b16 %v1896, %v1888
    %v2377 = vpack.c.b16 %v1897, %v1889
    %v2378 = vpack.c.b16 %v1898, %v1890
    %v2379 = vpack.c.b16 %v1899, %v1891
    %v2380 = vpack.c.b16 %v1900, %v1892
    %v2381 = vpack.c.b16 %v1901, %v1893
    %v2382 = vpack.c.b16 %v1910, %v1902
    %v2383 = vpack.c.b16 %v1911, %v1903
    %v2384 = vpack.c.b16 %v1912, %v1904
    %v2385 = vpack.c.b16 %v1913, %v1905
    %v2386 = vpack.c.b16 %v1914, %v1906
    %v2387 = vpack.c.b16 %v1915, %v1907
    %v2388 = vpack.c.b16 %v1916, %v1908
    %v2389 = vpack.c.b16 %v1917, %v1909
    %v2390 = vpack.c.b16 %v1926, %v1918
    %v2391 = vpack.c.b16 %v1927, %v1919
    %v2392 = vpack.c.b16 %v1928, %v1920
    %v2393 = vpack.c.b16 %v1929, %v1921
    %v2394 = vpack.c.b16 %v1930, %v1922
    %v2395 = vpack.c.b16 %v1931, %v1923
    %v2396 = vpack.c.b16 %v1932, %v1924
    %v2397 = vpack.c.b16 %v1933, %v1925
    %v2398 = vpack.c.b16 %v1942, %v1934
    %v2399 = vpack.c.b16 %v1943, %v1935
    %v2400 = vpack.c.b16 %v1944, %v1936
    %v2401 = vpack.c.b16 %v1945, %v1937
    %v2402 = vpack.c.b16 %v1946, %v1938
    %v2403 = vpack.c.b16 %v1947, %v1939
    %v2404 = vpack.c.b16 %v1948, %v1940
    %v2405 = vpack.c.b16 %v1949, %v1941
    %v2406 = vpack.c.b16 %v1958, %v1950
    %v2407 = vpack.c.b16 %v1959, %v1951
    %v2408 = vpack.c.b16 %v1960, %v1952
    %v2409 = vpack.c.b16 %v1961, %v1953
    %v2410 = vpack.c.b16 %v1962, %v1954
    %v2411 = vpack.c.b16 %v1963, %v1955
    %v2412 = vpack.c.b16 %v1964, %v1956
    %v2413 = vpack.c.b16 %v1965, %v1957
    %2862 = vmatprep.subr.bf16.mxu0 %v2023
    %2863 = vmatpush1.bf16.msra.mxu0 %v2022
    %2864 = vmatprep.subr.bf16.mxu0 %v2015
    %2865 = vmatpush1.bf16.msra.mxu0 %v2014
    %2866 = vmatprep.subr.bf16.mxu0 %v2007
    %2867 = vmatpush1.bf16.msra.mxu0 %v2006
    %2868 = vmatprep.subr.bf16.mxu0 %v1999
    %2869 = vmatpush1.bf16.msra.mxu0 %v1998
    %2870 = vmatprep.subr.bf16.mxu0 %v1991
    %2871 = vmatpush1.bf16.msra.mxu0 %v1990
    %2872 = vmatprep.subr.bf16.mxu0 %v1983
    %2873 = vmatpush1.bf16.msra.mxu0 %v1982
    %2874 = vmatprep.subr.bf16.mxu0 %v1975
    %2875 = vmatpush1.bf16.msra.mxu0 %v1974
    %2876 = vmatprep.subr.bf16.mxu0 %v1967
    %2877 = vmatpush1.bf16.msra.mxu0 %v1966
    %2878 = vmatprep.subr.bf16.mxu0 %v2087
    %2879 = vmatpush2.bf16.msra.mxu0 %v2086
    %2880 = vmatprep.subr.bf16.mxu0 %v2079
    %2881 = vmatpush2.bf16.msra.mxu0 %v2078
    %2882 = vmatprep.subr.bf16.mxu0 %v2071
    %2883 = vmatpush2.bf16.msra.mxu0 %v2070
    %2884 = vmatprep.subr.bf16.mxu0 %v2063
    %2885 = vmatpush2.bf16.msra.mxu0 %v2062
    %2886 = vmatprep.subr.bf16.mxu0 %v2055
    %2887 = vmatpush2.bf16.msra.mxu0 %v2054
    %2888 = vmatprep.subr.bf16.mxu0 %v2047
    %2889 = vmatpush2.bf16.msra.mxu0 %v2046
    %2890 = vmatprep.subr.bf16.mxu0 %v2039
    %2891 = vmatpush2.bf16.msra.mxu0 %v2038
    %2892 = vmatprep.subr.bf16.mxu0 %v2031
    %2893 = vmatpush2.bf16.msra.mxu0 %v2030
    %2894 = vmatprep.mubr.bf16.mxu0 %v609
    %2895 = vmatmul.mubr.bf16.gmra.mxu0 %v608
    %v2896 = vpop.f32.mrf.mxu0
    %v2897 = vadd.f32 %v560, %v2896
    %v2898 = vpop.f32.mrf.mxu0
    %v2899 = vadd.f32 %v564, %v2898
    %v2900 = vpop.f32.mrf.mxu0
    %v2901 = vpop.f32.mrf.mxu0
    %2902 = vdwg.mxu0
    %2903 = vmatprep.subr.bf16.mxu0 %v2151
    %2904 = vmatpush1.bf16.msra.mxu0 %v2150
    %2905 = vmatprep.subr.bf16.mxu0 %v2143
    %2906 = vmatpush1.bf16.msra.mxu0 %v2142
    %2907 = vmatprep.subr.bf16.mxu0 %v2135
    %2908 = vmatpush1.bf16.msra.mxu0 %v2134
    %2909 = vmatprep.subr.bf16.mxu0 %v2127
    %2910 = vmatpush1.bf16.msra.mxu0 %v2126
    %2911 = vmatprep.subr.bf16.mxu0 %v2119
    %2912 = vmatpush1.bf16.msra.mxu0 %v2118
    %2913 = vmatprep.subr.bf16.mxu0 %v2111
    %2914 = vmatpush1.bf16.msra.mxu0 %v2110
    %2915 = vmatprep.subr.bf16.mxu0 %v2103
    %2916 = vmatpush1.bf16.msra.mxu0 %v2102
    %2917 = vmatprep.subr.bf16.mxu0 %v2095
    %2918 = vmatpush1.bf16.msra.mxu0 %v2094
    %2919 = vmatprep.subr.bf16.mxu0 %v2215
    %2920 = vmatpush2.bf16.msra.mxu0 %v2214
    %2921 = vmatprep.subr.bf16.mxu0 %v2207
    %2922 = vmatpush2.bf16.msra.mxu0 %v2206
    %2923 = vmatprep.subr.bf16.mxu0 %v2199
    %2924 = vmatpush2.bf16.msra.mxu0 %v2198
    %2925 = vmatprep.subr.bf16.mxu0 %v2191
    %2926 = vmatpush2.bf16.msra.mxu0 %v2190
    %2927 = vmatprep.subr.bf16.mxu0 %v2183
    %2928 = vmatpush2.bf16.msra.mxu0 %v2182
    %2929 = vmatprep.subr.bf16.mxu0 %v2175
    %2930 = vmatpush2.bf16.msra.mxu0 %v2174
    %2931 = vmatprep.subr.bf16.mxu0 %v2167
    %2932 = vmatpush2.bf16.msra.mxu0 %v2166
    %2933 = vmatprep.subr.bf16.mxu0 %v2159
    %2934 = vmatpush2.bf16.msra.mxu0 %v2158
    %2935 = vmatprep.mubr.bf16.mxu0 %v611
    %2936 = vmatmul.mubr.bf16.gmra.mxu0 %v610
    %v2937 = vpop.f32.mrf.mxu0
    %v2938 = vadd.f32 %v2897, %v2937
    %v2939 = vpop.f32.mrf.mxu0
    %v2940 = vadd.f32 %v2899, %v2939
    %v2941 = vpop.f32.mrf.mxu0
    %v2942 = vpop.f32.mrf.mxu0
    %2943 = vdwg.mxu0
    %2944 = vmatprep.subr.bf16.mxu0 %v2279
    %2945 = vmatpush1.bf16.msra.mxu0 %v2278
    %2946 = vmatprep.subr.bf16.mxu0 %v2271
    %2947 = vmatpush1.bf16.msra.mxu0 %v2270
    %2948 = vmatprep.subr.bf16.mxu0 %v2263
    %2949 = vmatpush1.bf16.msra.mxu0 %v2262
    %2950 = vmatprep.subr.bf16.mxu0 %v2255
    %2951 = vmatpush1.bf16.msra.mxu0 %v2254
    %2952 = vmatprep.subr.bf16.mxu0 %v2247
    %2953 = vmatpush1.bf16.msra.mxu0 %v2246
    %2954 = vmatprep.subr.bf16.mxu0 %v2239
    %2955 = vmatpush1.bf16.msra.mxu0 %v2238
    %2956 = vmatprep.subr.bf16.mxu0 %v2231
    %2957 = vmatpush1.bf16.msra.mxu0 %v2230
    %2958 = vmatprep.subr.bf16.mxu0 %v2223
    %2959 = vmatpush1.bf16.msra.mxu0 %v2222
    %2960 = vmatprep.subr.bf16.mxu0 %v2343
    %2961 = vmatpush2.bf16.msra.mxu0 %v2342
    %2962 = vmatprep.subr.bf16.mxu0 %v2335
    %2963 = vmatpush2.bf16.msra.mxu0 %v2334
    %2964 = vmatprep.subr.bf16.mxu0 %v2327
    %2965 = vmatpush2.bf16.msra.mxu0 %v2326
    %2966 = vmatprep.subr.bf16.mxu0 %v2319
    %2967 = vmatpush2.bf16.msra.mxu0 %v2318
    %2968 = vmatprep.subr.bf16.mxu0 %v2311
    %2969 = vmatpush2.bf16.msra.mxu0 %v2310
    %2970 = vmatprep.subr.bf16.mxu0 %v2303
    %2971 = vmatpush2.bf16.msra.mxu0 %v2302
    %2972 = vmatprep.subr.bf16.mxu0 %v2295
    %2973 = vmatpush2.bf16.msra.mxu0 %v2294
    %2974 = vmatprep.subr.bf16.mxu0 %v2287
    %2975 = vmatpush2.bf16.msra.mxu0 %v2286
    %2976 = vmatprep.mubr.bf16.mxu0 %v613
    %2977 = vmatmul.mubr.bf16.gmra.mxu0 %v612
    %v2978 = vpop.f32.mrf.mxu0
    %v2979 = vadd.f32 %v2938, %v2978
    %v2980 = vpop.f32.mrf.mxu0
    %v2981 = vadd.f32 %v2940, %v2980
    %v2982 = vpop.f32.mrf.mxu0
    %v2983 = vpop.f32.mrf.mxu0
    %2984 = vdwg.mxu0
    %2985 = vmatprep.subr.bf16.mxu0 %v2407
    %2986 = vmatpush1.bf16.msra.mxu0 %v2406
    %2987 = vmatprep.subr.bf16.mxu0 %v2399
    %2988 = vmatpush1.bf16.msra.mxu0 %v2398
    %2989 = vmatprep.subr.bf16.mxu0 %v2391
    %2990 = vmatpush1.bf16.msra.mxu0 %v2390
    %2991 = vmatprep.subr.bf16.mxu0 %v2383
    %2992 = vmatpush1.bf16.msra.mxu0 %v2382
    %2993 = vmatprep.subr.bf16.mxu0 %v2375
    %2994 = vmatpush1.bf16.msra.mxu0 %v2374
    %2995 = vmatprep.subr.bf16.mxu0 %v2367
    %2996 = vmatpush1.bf16.msra.mxu0 %v2366
    %2997 = vmatprep.subr.bf16.mxu0 %v2359
    %2998 = vmatpush1.bf16.msra.mxu0 %v2358
    %2999 = vmatprep.subr.bf16.mxu0 %v2351
    %3000 = vmatpush1.bf16.msra.mxu0 %v2350
    %3001 = vmatprep.subr.bf16.mxu0 0
    %3002 = vmatpush2.bf16.msra.mxu0 0
    %3003 = vmatprep.subr.bf16.mxu0 0
    %3004 = vmatpush2.bf16.msra.mxu0 0
    %3005 = vmatprep.subr.bf16.mxu0 0
    %3006 = vmatpush2.bf16.msra.mxu0 0
    %3007 = vmatprep.subr.bf16.mxu0 0
    %3008 = vmatpush2.bf16.msra.mxu0 0
    %3009 = vmatprep.subr.bf16.mxu0 0
    %3010 = vmatpush2.bf16.msra.mxu0 0
    %3011 = vmatprep.subr.bf16.mxu0 0
    %3012 = vmatpush2.bf16.msra.mxu0 0
    %3013 = vmatprep.subr.bf16.mxu0 0
    %3014 = vmatpush2.bf16.msra.mxu0 0
    %3015 = vmatprep.subr.bf16.mxu0 0
    %3016 = vmatpush2.bf16.msra.mxu0 0
    %3017 = vmatprep.mubr.bf16.mxu0 0
    %3018 = vmatmul.mubr.bf16.gmra.mxu0 %v614
    %v3019 = vpop.f32.mrf.mxu0
    %v3020 = vadd.f32 %v2979, %v3019
    %v3021 = vpop.f32.mrf.mxu0
    %v3022 = vadd.f32 %v2981, %v3021
    %v3023 = vpop.f32.mrf.mxu0
    %v3024 = vpop.f32.mrf.mxu0
    %3025 = vdwg.mxu0
    %3026 = vmatprep.subr.bf16.mxu0 %v2025
    %3027 = vmatpush1.bf16.msra.mxu0 %v2024
    %3028 = vmatprep.subr.bf16.mxu0 %v2017
    %3029 = vmatpush1.bf16.msra.mxu0 %v2016
    %3030 = vmatprep.subr.bf16.mxu0 %v2009
    %3031 = vmatpush1.bf16.msra.mxu0 %v2008
    %3032 = vmatprep.subr.bf16.mxu0 %v2001
    %3033 = vmatpush1.bf16.msra.mxu0 %v2000
    %3034 = vmatprep.subr.bf16.mxu0 %v1993
    %3035 = vmatpush1.bf16.msra.mxu0 %v1992
    %3036 = vmatprep.subr.bf16.mxu0 %v1985
    %3037 = vmatpush1.bf16.msra.mxu0 %v1984
    %3038 = vmatprep.subr.bf16.mxu0 %v1977
    %3039 = vmatpush1.bf16.msra.mxu0 %v1976
    %3040 = vmatprep.subr.bf16.mxu0 %v1969
    %3041 = vmatpush1.bf16.msra.mxu0 %v1968
    %3042 = vmatprep.subr.bf16.mxu0 %v2089
    %3043 = vmatpush2.bf16.msra.mxu0 %v2088
    %3044 = vmatprep.subr.bf16.mxu0 %v2081
    %3045 = vmatpush2.bf16.msra.mxu0 %v2080
    %3046 = vmatprep.subr.bf16.mxu0 %v2073
    %3047 = vmatpush2.bf16.msra.mxu0 %v2072
    %3048 = vmatprep.subr.bf16.mxu0 %v2065
    %3049 = vmatpush2.bf16.msra.mxu0 %v2064
    %3050 = vmatprep.subr.bf16.mxu0 %v2057
    %3051 = vmatpush2.bf16.msra.mxu0 %v2056
    %3052 = vmatprep.subr.bf16.mxu0 %v2049
    %3053 = vmatpush2.bf16.msra.mxu0 %v2048
    %3054 = vmatprep.subr.bf16.mxu0 %v2041
    %3055 = vmatpush2.bf16.msra.mxu0 %v2040
    %3056 = vmatprep.subr.bf16.mxu0 %v2033
    %3057 = vmatpush2.bf16.msra.mxu0 %v2032
    %3058 = vmatprep.mubr.bf16.mxu0 %v609
    %3059 = vmatmul.mubr.bf16.gmra.mxu0 %v608
    %v3060 = vpop.f32.mrf.mxu0
    %v3061 = vadd.f32 %v568, %v3060
    %v3062 = vpop.f32.mrf.mxu0
    %v3063 = vadd.f32 %v572, %v3062
    %v3064 = vpop.f32.mrf.mxu0
    %v3065 = vpop.f32.mrf.mxu0
    %3066 = vdwg.mxu0
    %3067 = vmatprep.subr.bf16.mxu0 %v2153
    %3068 = vmatpush1.bf16.msra.mxu0 %v2152
    %3069 = vmatprep.subr.bf16.mxu0 %v2145
    %3070 = vmatpush1.bf16.msra.mxu0 %v2144
    %3071 = vmatprep.subr.bf16.mxu0 %v2137
    %3072 = vmatpush1.bf16.msra.mxu0 %v2136
    %3073 = vmatprep.subr.bf16.mxu0 %v2129
    %3074 = vmatpush1.bf16.msra.mxu0 %v2128
    %3075 = vmatprep.subr.bf16.mxu0 %v2121
    %3076 = vmatpush1.bf16.msra.mxu0 %v2120
    %3077 = vmatprep.subr.bf16.mxu0 %v2113
    %3078 = vmatpush1.bf16.msra.mxu0 %v2112
    %3079 = vmatprep.subr.bf16.mxu0 %v2105
    %3080 = vmatpush1.bf16.msra.mxu0 %v2104
    %3081 = vmatprep.subr.bf16.mxu0 %v2097
    %3082 = vmatpush1.bf16.msra.mxu0 %v2096
    %3083 = vmatprep.subr.bf16.mxu0 %v2217
    %3084 = vmatpush2.bf16.msra.mxu0 %v2216
    %3085 = vmatprep.subr.bf16.mxu0 %v2209
    %3086 = vmatpush2.bf16.msra.mxu0 %v2208
    %3087 = vmatprep.subr.bf16.mxu0 %v2201
    %3088 = vmatpush2.bf16.msra.mxu0 %v2200
    %3089 = vmatprep.subr.bf16.mxu0 %v2193
    %3090 = vmatpush2.bf16.msra.mxu0 %v2192
    %3091 = vmatprep.subr.bf16.mxu0 %v2185
    %3092 = vmatpush2.bf16.msra.mxu0 %v2184
    %3093 = vmatprep.subr.bf16.mxu0 %v2177
    %3094 = vmatpush2.bf16.msra.mxu0 %v2176
    %3095 = vmatprep.subr.bf16.mxu0 %v2169
    %3096 = vmatpush2.bf16.msra.mxu0 %v2168
    %3097 = vmatprep.subr.bf16.mxu0 %v2161
    %3098 = vmatpush2.bf16.msra.mxu0 %v2160
    %3099 = vmatprep.mubr.bf16.mxu0 %v611
    %3100 = vmatmul.mubr.bf16.gmra.mxu0 %v610
    %v3101 = vpop.f32.mrf.mxu0
    %v3102 = vadd.f32 %v3061, %v3101
    %v3103 = vpop.f32.mrf.mxu0
    %v3104 = vadd.f32 %v3063, %v3103
    %v3105 = vpop.f32.mrf.mxu0
    %v3106 = vpop.f32.mrf.mxu0
    %3107 = vdwg.mxu0
    %3108 = vmatprep.subr.bf16.mxu0 %v2281
    %3109 = vmatpush1.bf16.msra.mxu0 %v2280
    %3110 = vmatprep.subr.bf16.mxu0 %v2273
    %3111 = vmatpush1.bf16.msra.mxu0 %v2272
    %3112 = vmatprep.subr.bf16.mxu0 %v2265
    %3113 = vmatpush1.bf16.msra.mxu0 %v2264
    %3114 = vmatprep.subr.bf16.mxu0 %v2257
    %3115 = vmatpush1.bf16.msra.mxu0 %v2256
    %3116 = vmatprep.subr.bf16.mxu0 %v2249
    %3117 = vmatpush1.bf16.msra.mxu0 %v2248
    %3118 = vmatprep.subr.bf16.mxu0 %v2241
    %3119 = vmatpush1.bf16.msra.mxu0 %v2240
    %3120 = vmatprep.subr.bf16.mxu0 %v2233
    %3121 = vmatpush1.bf16.msra.mxu0 %v2232
    %3122 = vmatprep.subr.bf16.mxu0 %v2225
    %3123 = vmatpush1.bf16.msra.mxu0 %v2224
    %3124 = vmatprep.subr.bf16.mxu0 %v2345
    %3125 = vmatpush2.bf16.msra.mxu0 %v2344
    %3126 = vmatprep.subr.bf16.mxu0 %v2337
    %3127 = vmatpush2.bf16.msra.mxu0 %v2336
    %3128 = vmatprep.subr.bf16.mxu0 %v2329
    %3129 = vmatpush2.bf16.msra.mxu0 %v2328
    %3130 = vmatprep.subr.bf16.mxu0 %v2321
    %3131 = vmatpush2.bf16.msra.mxu0 %v2320
    %3132 = vmatprep.subr.bf16.mxu0 %v2313
    %3133 = vmatpush2.bf16.msra.mxu0 %v2312
    %3134 = vmatprep.subr.bf16.mxu0 %v2305
    %3135 = vmatpush2.bf16.msra.mxu0 %v2304
    %3136 = vmatprep.subr.bf16.mxu0 %v2297
    %3137 = vmatpush2.bf16.msra.mxu0 %v2296
    %3138 = vmatprep.subr.bf16.mxu0 %v2289
    %3139 = vmatpush2.bf16.msra.mxu0 %v2288
    %3140 = vmatprep.mubr.bf16.mxu0 %v613
    %3141 = vmatmul.mubr.bf16.gmra.mxu0 %v612
    %v3142 = vpop.f32.mrf.mxu0
    %v3143 = vadd.f32 %v3102, %v3142
    %v3144 = vpop.f32.mrf.mxu0
    %v3145 = vadd.f32 %v3104, %v3144
    %v3146 = vpop.f32.mrf.mxu0
    %v3147 = vpop.f32.mrf.mxu0
    %3148 = vdwg.mxu0
    %3149 = vmatprep.subr.bf16.mxu0 %v2409
    %3150 = vmatpush1.bf16.msra.mxu0 %v2408
    %3151 = vmatprep.subr.bf16.mxu0 %v2401
    %3152 = vmatpush1.bf16.msra.mxu0 %v2400
    %3153 = vmatprep.subr.bf16.mxu0 %v2393
    %3154 = vmatpush1.bf16.msra.mxu0 %v2392
    %3155 = vmatprep.subr.bf16.mxu0 %v2385
    %3156 = vmatpush1.bf16.msra.mxu0 %v2384
    %3157 = vmatprep.subr.bf16.mxu0 %v2377
    %3158 = vmatpush1.bf16.msra.mxu0 %v2376
    %3159 = vmatprep.subr.bf16.mxu0 %v2369
    %3160 = vmatpush1.bf16.msra.mxu0 %v2368
    %3161 = vmatprep.subr.bf16.mxu0 %v2361
    %3162 = vmatpush1.bf16.msra.mxu0 %v2360
    %3163 = vmatprep.subr.bf16.mxu0 %v2353
    %3164 = vmatpush1.bf16.msra.mxu0 %v2352
    %3165 = vmatprep.subr.bf16.mxu0 0
    %3166 = vmatpush2.bf16.msra.mxu0 0
    %3167 = vmatprep.subr.bf16.mxu0 0
    %3168 = vmatpush2.bf16.msra.mxu0 0
    %3169 = vmatprep.subr.bf16.mxu0 0
    %3170 = vmatpush2.bf16.msra.mxu0 0
    %3171 = vmatprep.subr.bf16.mxu0 0
    %3172 = vmatpush2.bf16.msra.mxu0 0
    %3173 = vmatprep.subr.bf16.mxu0 0
    %3174 = vmatpush2.bf16.msra.mxu0 0
    %3175 = vmatprep.subr.bf16.mxu0 0
    %3176 = vmatpush2.bf16.msra.mxu0 0
    %3177 = vmatprep.subr.bf16.mxu0 0
    %3178 = vmatpush2.bf16.msra.mxu0 0
    %3179 = vmatprep.subr.bf16.mxu0 0
    %3180 = vmatpush2.bf16.msra.mxu0 0
    %3181 = vmatprep.mubr.bf16.mxu0 0
    %3182 = vmatmul.mubr.bf16.gmra.mxu0 %v614
    %v3183 = vpop.f32.mrf.mxu0
    %v3184 = vadd.f32 %v3143, %v3183
    %v3185 = vpop.f32.mrf.mxu0
    %v3186 = vadd.f32 %v3145, %v3185
    %v3187 = vpop.f32.mrf.mxu0
    %v3188 = vpop.f32.mrf.mxu0
    %3189 = vdwg.mxu0
    %3190 = vmatprep.subr.bf16.mxu0 %v2027
    %3191 = vmatpush1.bf16.msra.mxu0 %v2026
    %3192 = vmatprep.subr.bf16.mxu0 %v2019
    %3193 = vmatpush1.bf16.msra.mxu0 %v2018
    %3194 = vmatprep.subr.bf16.mxu0 %v2011
    %3195 = vmatpush1.bf16.msra.mxu0 %v2010
    %3196 = vmatprep.subr.bf16.mxu0 %v2003
    %3197 = vmatpush1.bf16.msra.mxu0 %v2002
    %3198 = vmatprep.subr.bf16.mxu0 %v1995
    %3199 = vmatpush1.bf16.msra.mxu0 %v1994
    %3200 = vmatprep.subr.bf16.mxu0 %v1987
    %3201 = vmatpush1.bf16.msra.mxu0 %v1986
    %3202 = vmatprep.subr.bf16.mxu0 %v1979
    %3203 = vmatpush1.bf16.msra.mxu0 %v1978
    %3204 = vmatprep.subr.bf16.mxu0 %v1971
    %3205 = vmatpush1.bf16.msra.mxu0 %v1970
    %3206 = vmatprep.subr.bf16.mxu0 %v2091
    %3207 = vmatpush2.bf16.msra.mxu0 %v2090
    %3208 = vmatprep.subr.bf16.mxu0 %v2083
    %3209 = vmatpush2.bf16.msra.mxu0 %v2082
    %3210 = vmatprep.subr.bf16.mxu0 %v2075
    %3211 = vmatpush2.bf16.msra.mxu0 %v2074
    %3212 = vmatprep.subr.bf16.mxu0 %v2067
    %3213 = vmatpush2.bf16.msra.mxu0 %v2066
    %3214 = vmatprep.subr.bf16.mxu0 %v2059
    %3215 = vmatpush2.bf16.msra.mxu0 %v2058
    %3216 = vmatprep.subr.bf16.mxu0 %v2051
    %3217 = vmatpush2.bf16.msra.mxu0 %v2050
    %3218 = vmatprep.subr.bf16.mxu0 %v2043
    %3219 = vmatpush2.bf16.msra.mxu0 %v2042
    %3220 = vmatprep.subr.bf16.mxu0 %v2035
    %3221 = vmatpush2.bf16.msra.mxu0 %v2034
    %3222 = vmatprep.mubr.bf16.mxu0 %v609
    %3223 = vmatmul.mubr.bf16.gmra.mxu0 %v608
    %v3224 = vpop.f32.mrf.mxu0
    %v3225 = vadd.f32 %v576, %v3224
    %v3226 = vpop.f32.mrf.mxu0
    %v3227 = vadd.f32 %v580, %v3226
    %v3228 = vpop.f32.mrf.mxu0
    %v3229 = vpop.f32.mrf.mxu0
    %3230 = vdwg.mxu0
    %3231 = vmatprep.subr.bf16.mxu0 %v2155
    %3232 = vmatpush1.bf16.msra.mxu0 %v2154
    %3233 = vmatprep.subr.bf16.mxu0 %v2147
    %3234 = vmatpush1.bf16.msra.mxu0 %v2146
    %3235 = vmatprep.subr.bf16.mxu0 %v2139
    %3236 = vmatpush1.bf16.msra.mxu0 %v2138
    %3237 = vmatprep.subr.bf16.mxu0 %v2131
    %3238 = vmatpush1.bf16.msra.mxu0 %v2130
    %3239 = vmatprep.subr.bf16.mxu0 %v2123
    %3240 = vmatpush1.bf16.msra.mxu0 %v2122
    %3241 = vmatprep.subr.bf16.mxu0 %v2115
    %3242 = vmatpush1.bf16.msra.mxu0 %v2114
    %3243 = vmatprep.subr.bf16.mxu0 %v2107
    %3244 = vmatpush1.bf16.msra.mxu0 %v2106
    %3245 = vmatprep.subr.bf16.mxu0 %v2099
    %3246 = vmatpush1.bf16.msra.mxu0 %v2098
    %3247 = vmatprep.subr.bf16.mxu0 %v2219
    %3248 = vmatpush2.bf16.msra.mxu0 %v2218
    %3249 = vmatprep.subr.bf16.mxu0 %v2211
    %3250 = vmatpush2.bf16.msra.mxu0 %v2210
    %3251 = vmatprep.subr.bf16.mxu0 %v2203
    %3252 = vmatpush2.bf16.msra.mxu0 %v2202
    %3253 = vmatprep.subr.bf16.mxu0 %v2195
    %3254 = vmatpush2.bf16.msra.mxu0 %v2194
    %3255 = vmatprep.subr.bf16.mxu0 %v2187
    %3256 = vmatpush2.bf16.msra.mxu0 %v2186
    %3257 = vmatprep.subr.bf16.mxu0 %v2179
    %3258 = vmatpush2.bf16.msra.mxu0 %v2178
    %3259 = vmatprep.subr.bf16.mxu0 %v2171
    %3260 = vmatpush2.bf16.msra.mxu0 %v2170
    %3261 = vmatprep.subr.bf16.mxu0 %v2163
    %3262 = vmatpush2.bf16.msra.mxu0 %v2162
    %3263 = vmatprep.mubr.bf16.mxu0 %v611
    %3264 = vmatmul.mubr.bf16.gmra.mxu0 %v610
    %v3265 = vpop.f32.mrf.mxu0
    %v3266 = vadd.f32 %v3225, %v3265
    %v3267 = vpop.f32.mrf.mxu0
    %v3268 = vadd.f32 %v3227, %v3267
    %v3269 = vpop.f32.mrf.mxu0
    %v3270 = vpop.f32.mrf.mxu0
    %3271 = vdwg.mxu0
    %3272 = vmatprep.subr.bf16.mxu0 %v2283
    %3273 = vmatpush1.bf16.msra.mxu0 %v2282
    %3274 = vmatprep.subr.bf16.mxu0 %v2275
    %3275 = vmatpush1.bf16.msra.mxu0 %v2274
    %3276 = vmatprep.subr.bf16.mxu0 %v2267
    %3277 = vmatpush1.bf16.msra.mxu0 %v2266
    %3278 = vmatprep.subr.bf16.mxu0 %v2259
    %3279 = vmatpush1.bf16.msra.mxu0 %v2258
    %3280 = vmatprep.subr.bf16.mxu0 %v2251
    %3281 = vmatpush1.bf16.msra.mxu0 %v2250
    %3282 = vmatprep.subr.bf16.mxu0 %v2243
    %3283 = vmatpush1.bf16.msra.mxu0 %v2242
    %3284 = vmatprep.subr.bf16.mxu0 %v2235
    %3285 = vmatpush1.bf16.msra.mxu0 %v2234
    %3286 = vmatprep.subr.bf16.mxu0 %v2227
    %3287 = vmatpush1.bf16.msra.mxu0 %v2226
    %3288 = vmatprep.subr.bf16.mxu0 %v2347
    %3289 = vmatpush2.bf16.msra.mxu0 %v2346
    %3290 = vmatprep.subr.bf16.mxu0 %v2339
    %3291 = vmatpush2.bf16.msra.mxu0 %v2338
    %3292 = vmatprep.subr.bf16.mxu0 %v2331
    %3293 = vmatpush2.bf16.msra.mxu0 %v2330
    %3294 = vmatprep.subr.bf16.mxu0 %v2323
    %3295 = vmatpush2.bf16.msra.mxu0 %v2322
    %3296 = vmatprep.subr.bf16.mxu0 %v2315
    %3297 = vmatpush2.bf16.msra.mxu0 %v2314
    %3298 = vmatprep.subr.bf16.mxu0 %v2307
    %3299 = vmatpush2.bf16.msra.mxu0 %v2306
    %3300 = vmatprep.subr.bf16.mxu0 %v2299
    %3301 = vmatpush2.bf16.msra.mxu0 %v2298
    %3302 = vmatprep.subr.bf16.mxu0 %v2291
    %3303 = vmatpush2.bf16.msra.mxu0 %v2290
    %3304 = vmatprep.mubr.bf16.mxu0 %v613
    %3305 = vmatmul.mubr.bf16.gmra.mxu0 %v612
    %v3306 = vpop.f32.mrf.mxu0
    %v3307 = vadd.f32 %v3266, %v3306
    %v3308 = vpop.f32.mrf.mxu0
    %v3309 = vadd.f32 %v3268, %v3308
    %v3310 = vpop.f32.mrf.mxu0
    %v3311 = vpop.f32.mrf.mxu0
    %3312 = vdwg.mxu0
    %3313 = vmatprep.subr.bf16.mxu0 %v2411
    %3314 = vmatpush1.bf16.msra.mxu0 %v2410
    %3315 = vmatprep.subr.bf16.mxu0 %v2403
    %3316 = vmatpush1.bf16.msra.mxu0 %v2402
    %3317 = vmatprep.subr.bf16.mxu0 %v2395
    %3318 = vmatpush1.bf16.msra.mxu0 %v2394
    %3319 = vmatprep.subr.bf16.mxu0 %v2387
    %3320 = vmatpush1.bf16.msra.mxu0 %v2386
    %3321 = vmatprep.subr.bf16.mxu0 %v2379
    %3322 = vmatpush1.bf16.msra.mxu0 %v2378
    %3323 = vmatprep.subr.bf16.mxu0 %v2371
    %3324 = vmatpush1.bf16.msra.mxu0 %v2370
    %3325 = vmatprep.subr.bf16.mxu0 %v2363
    %3326 = vmatpush1.bf16.msra.mxu0 %v2362
    %3327 = vmatprep.subr.bf16.mxu0 %v2355
    %3328 = vmatpush1.bf16.msra.mxu0 %v2354
    %3329 = vmatprep.subr.bf16.mxu0 0
    %3330 = vmatpush2.bf16.msra.mxu0 0
    %3331 = vmatprep.subr.bf16.mxu0 0
    %3332 = vmatpush2.bf16.msra.mxu0 0
    %3333 = vmatprep.subr.bf16.mxu0 0
    %3334 = vmatpush2.bf16.msra.mxu0 0
    %3335 = vmatprep.subr.bf16.mxu0 0
    %3336 = vmatpush2.bf16.msra.mxu0 0
    %3337 = vmatprep.subr.bf16.mxu0 0
    %3338 = vmatpush2.bf16.msra.mxu0 0
    %3339 = vmatprep.subr.bf16.mxu0 0
    %3340 = vmatpush2.bf16.msra.mxu0 0
    %3341 = vmatprep.subr.bf16.mxu0 0
    %3342 = vmatpush2.bf16.msra.mxu0 0
    %3343 = vmatprep.subr.bf16.mxu0 0
    %3344 = vmatpush2.bf16.msra.mxu0 0
    %3345 = vmatprep.mubr.bf16.mxu0 0
    %3346 = vmatmul.mubr.bf16.gmra.mxu0 %v614
    %v3347 = vpop.f32.mrf.mxu0
    %v3348 = vadd.f32 %v3307, %v3347
    %v3349 = vpop.f32.mrf.mxu0
    %v3350 = vadd.f32 %v3309, %v3349
    %v3351 = vpop.f32.mrf.mxu0
    %v3352 = vpop.f32.mrf.mxu0
    %3353 = vdwg.mxu0
    %3354 = vmatprep.subr.bf16.mxu0 %v2029
    %3355 = vmatpush1.bf16.msra.mxu0 %v2028
    %3356 = vmatprep.subr.bf16.mxu0 %v2021
    %3357 = vmatpush1.bf16.msra.mxu0 %v2020
    %3358 = vmatprep.subr.bf16.mxu0 %v2013
    %3359 = vmatpush1.bf16.msra.mxu0 %v2012
    %3360 = vmatprep.subr.bf16.mxu0 %v2005
    %3361 = vmatpush1.bf16.msra.mxu0 %v2004
    %3362 = vmatprep.subr.bf16.mxu0 %v1997
    %3363 = vmatpush1.bf16.msra.mxu0 %v1996
    %3364 = vmatprep.subr.bf16.mxu0 %v1989
    %3365 = vmatpush1.bf16.msra.mxu0 %v1988
    %3366 = vmatprep.subr.bf16.mxu0 %v1981
    %3367 = vmatpush1.bf16.msra.mxu0 %v1980
    %3368 = vmatprep.subr.bf16.mxu0 %v1973
    %3369 = vmatpush1.bf16.msra.mxu0 %v1972
    %3370 = vmatprep.subr.bf16.mxu0 %v2093
    %3371 = vmatpush2.bf16.msra.mxu0 %v2092
    %3372 = vmatprep.subr.bf16.mxu0 %v2085
    %3373 = vmatpush2.bf16.msra.mxu0 %v2084
    %3374 = vmatprep.subr.bf16.mxu0 %v2077
    %3375 = vmatpush2.bf16.msra.mxu0 %v2076
    %3376 = vmatprep.subr.bf16.mxu0 %v2069
    %3377 = vmatpush2.bf16.msra.mxu0 %v2068
    %3378 = vmatprep.subr.bf16.mxu0 %v2061
    %3379 = vmatpush2.bf16.msra.mxu0 %v2060
    %3380 = vmatprep.subr.bf16.mxu0 %v2053
    %3381 = vmatpush2.bf16.msra.mxu0 %v2052
    %3382 = vmatprep.subr.bf16.mxu0 %v2045
    %3383 = vmatpush2.bf16.msra.mxu0 %v2044
    %3384 = vmatprep.subr.bf16.mxu0 %v2037
    %3385 = vmatpush2.bf16.msra.mxu0 %v2036
    %3386 = vmatprep.mubr.bf16.mxu0 %v609
    %3387 = vmatmul.mubr.bf16.gmra.mxu0 %v608
    %v3388 = vpop.f32.mrf.mxu0
    %v3389 = vadd.f32 %v584, %v3388
    %v3390 = vpop.f32.mrf.mxu0
    %v3391 = vadd.f32 %v588, %v3390
    %v3392 = vpop.f32.mrf.mxu0
    %v3393 = vpop.f32.mrf.mxu0
    %3394 = vdwg.mxu0
    %3395 = vmatprep.subr.bf16.mxu0 %v2157
    %3396 = vmatpush1.bf16.msra.mxu0 %v2156
    %3397 = vmatprep.subr.bf16.mxu0 %v2149
    %3398 = vmatpush1.bf16.msra.mxu0 %v2148
    %3399 = vmatprep.subr.bf16.mxu0 %v2141
    %3400 = vmatpush1.bf16.msra.mxu0 %v2140
    %3401 = vmatprep.subr.bf16.mxu0 %v2133
    %3402 = vmatpush1.bf16.msra.mxu0 %v2132
    %3403 = vmatprep.subr.bf16.mxu0 %v2125
    %3404 = vmatpush1.bf16.msra.mxu0 %v2124
    %3405 = vmatprep.subr.bf16.mxu0 %v2117
    %3406 = vmatpush1.bf16.msra.mxu0 %v2116
    %3407 = vmatprep.subr.bf16.mxu0 %v2109
    %3408 = vmatpush1.bf16.msra.mxu0 %v2108
    %3409 = vmatprep.subr.bf16.mxu0 %v2101
    %3410 = vmatpush1.bf16.msra.mxu0 %v2100
    %3411 = vmatprep.subr.bf16.mxu0 %v2221
    %3412 = vmatpush2.bf16.msra.mxu0 %v2220
    %3413 = vmatprep.subr.bf16.mxu0 %v2213
    %3414 = vmatpush2.bf16.msra.mxu0 %v2212
    %3415 = vmatprep.subr.bf16.mxu0 %v2205
    %3416 = vmatpush2.bf16.msra.mxu0 %v2204
    %3417 = vmatprep.subr.bf16.mxu0 %v2197
    %3418 = vmatpush2.bf16.msra.mxu0 %v2196
    %3419 = vmatprep.subr.bf16.mxu0 %v2189
    %3420 = vmatpush2.bf16.msra.mxu0 %v2188
    %3421 = vmatprep.subr.bf16.mxu0 %v2181
    %3422 = vmatpush2.bf16.msra.mxu0 %v2180
    %3423 = vmatprep.subr.bf16.mxu0 %v2173
    %3424 = vmatpush2.bf16.msra.mxu0 %v2172
    %3425 = vmatprep.subr.bf16.mxu0 %v2165
    %3426 = vmatpush2.bf16.msra.mxu0 %v2164
    %3427 = vmatprep.mubr.bf16.mxu0 %v611
    %3428 = vmatmul.mubr.bf16.gmra.mxu0 %v610
    %v3429 = vpop.f32.mrf.mxu0
    %v3430 = vadd.f32 %v3389, %v3429
    %v3431 = vpop.f32.mrf.mxu0
    %v3432 = vadd.f32 %v3391, %v3431
    %v3433 = vpop.f32.mrf.mxu0
    %v3434 = vpop.f32.mrf.mxu0
    %3435 = vdwg.mxu0
    %3436 = vmatprep.subr.bf16.mxu0 %v2285
    %3437 = vmatpush1.bf16.msra.mxu0 %v2284
    %3438 = vmatprep.subr.bf16.mxu0 %v2277
    %3439 = vmatpush1.bf16.msra.mxu0 %v2276
    %3440 = vmatprep.subr.bf16.mxu0 %v2269
    %3441 = vmatpush1.bf16.msra.mxu0 %v2268
    %3442 = vmatprep.subr.bf16.mxu0 %v2261
    %3443 = vmatpush1.bf16.msra.mxu0 %v2260
    %3444 = vmatprep.subr.bf16.mxu0 %v2253
    %3445 = vmatpush1.bf16.msra.mxu0 %v2252
    %3446 = vmatprep.subr.bf16.mxu0 %v2245
    %3447 = vmatpush1.bf16.msra.mxu0 %v2244
    %3448 = vmatprep.subr.bf16.mxu0 %v2237
    %3449 = vmatpush1.bf16.msra.mxu0 %v2236
    %3450 = vmatprep.subr.bf16.mxu0 %v2229
    %3451 = vmatpush1.bf16.msra.mxu0 %v2228
    %3452 = vmatprep.subr.bf16.mxu0 %v2349
    %3453 = vmatpush2.bf16.msra.mxu0 %v2348
    %3454 = vmatprep.subr.bf16.mxu0 %v2341
    %3455 = vmatpush2.bf16.msra.mxu0 %v2340
    %3456 = vmatprep.subr.bf16.mxu0 %v2333
    %3457 = vmatpush2.bf16.msra.mxu0 %v2332
    %3458 = vmatprep.subr.bf16.mxu0 %v2325
    %3459 = vmatpush2.bf16.msra.mxu0 %v2324
    %3460 = vmatprep.subr.bf16.mxu0 %v2317
    %3461 = vmatpush2.bf16.msra.mxu0 %v2316
    %3462 = vmatprep.subr.bf16.mxu0 %v2309
    %3463 = vmatpush2.bf16.msra.mxu0 %v2308
    %3464 = vmatprep.subr.bf16.mxu0 %v2301
    %3465 = vmatpush2.bf16.msra.mxu0 %v2300
    %3466 = vmatprep.subr.bf16.mxu0 %v2293
    %3467 = vmatpush2.bf16.msra.mxu0 %v2292
    %3468 = vmatprep.mubr.bf16.mxu0 %v613
    %3469 = vmatmul.mubr.bf16.gmra.mxu0 %v612
    %v3470 = vpop.f32.mrf.mxu0
    %v3471 = vadd.f32 %v3430, %v3470
    %v3472 = vpop.f32.mrf.mxu0
    %v3473 = vadd.f32 %v3432, %v3472
    %v3474 = vpop.f32.mrf.mxu0
    %v3475 = vpop.f32.mrf.mxu0
    %3476 = vdwg.mxu0
    %3477 = vmatprep.subr.bf16.mxu0 %v2413
    %3478 = vmatpush1.bf16.msra.mxu0 %v2412
    %3479 = vmatprep.subr.bf16.mxu0 %v2405
    %3480 = vmatpush1.bf16.msra.mxu0 %v2404
    %3481 = vmatprep.subr.bf16.mxu0 %v2397
    %3482 = vmatpush1.bf16.msra.mxu0 %v2396
    %3483 = vmatprep.subr.bf16.mxu0 %v2389
    %3484 = vmatpush1.bf16.msra.mxu0 %v2388
    %3485 = vmatprep.subr.bf16.mxu0 %v2381
    %3486 = vmatpush1.bf16.msra.mxu0 %v2380
    %3487 = vmatprep.subr.bf16.mxu0 %v2373
    %3488 = vmatpush1.bf16.msra.mxu0 %v2372
    %3489 = vmatprep.subr.bf16.mxu0 %v2365
    %3490 = vmatpush1.bf16.msra.mxu0 %v2364
    %3491 = vmatprep.subr.bf16.mxu0 %v2357
    %3492 = vmatpush1.bf16.msra.mxu0 %v2356
    %3493 = vmatprep.subr.bf16.mxu0 0
    %3494 = vmatpush2.bf16.msra.mxu0 0
    %3495 = vmatprep.subr.bf16.mxu0 0
    %3496 = vmatpush2.bf16.msra.mxu0 0
    %3497 = vmatprep.subr.bf16.mxu0 0
    %3498 = vmatpush2.bf16.msra.mxu0 0
    %3499 = vmatprep.subr.bf16.mxu0 0
    %3500 = vmatpush2.bf16.msra.mxu0 0
    %3501 = vmatprep.subr.bf16.mxu0 0
    %3502 = vmatpush2.bf16.msra.mxu0 0
    %3503 = vmatprep.subr.bf16.mxu0 0
    %3504 = vmatpush2.bf16.msra.mxu0 0
    %3505 = vmatprep.subr.bf16.mxu0 0
    %3506 = vmatpush2.bf16.msra.mxu0 0
    %3507 = vmatprep.subr.bf16.mxu0 0
    %3508 = vmatpush2.bf16.msra.mxu0 0
    %3509 = vmatprep.mubr.bf16.mxu0 0
    %3510 = vmatmul.mubr.bf16.gmra.mxu0 %v614
    %v3511 = vpop.f32.mrf.mxu0
    %v3512 = vadd.f32 %v3471, %v3511
    %v3513 = vpop.f32.mrf.mxu0
    %v3514 = vadd.f32 %v3473, %v3513
    %v3515 = vpop.f32.mrf.mxu0
    %v3516 = vpop.f32.mrf.mxu0
    %3517 = vdwg.mxu0
    %v3518 = vmul.f32 %v3020, 0.2
    %v3519 = vmul.f32 %v3022, 0.2
    %v3520 = vmul.f32 %v3184, 0.2
    %v3521 = vmul.f32 %v3186, 0.2
    %v3522 = vmul.f32 %v3348, 0.2
    %v3523 = vmul.f32 %v3350, 0.2
    %v3524 = vmul.f32 %v3512, 0.2
    %v3525 = vmul.f32 %v3514, 0.2
    %v3526 = vmax.f32 %v3020, %v3518
    %v3527 = vmax.f32 %v3022, %v3519
    %v3528 = vmax.f32 %v3184, %v3520
    %v3529 = vmax.f32 %v3186, %v3521
    %v3530 = vmax.f32 %v3348, %v3522
    %v3531 = vmax.f32 %v3350, %v3523
    %v3532 = vmax.f32 %v3512, %v3524
    %v3533 = vmax.f32 %v3514, %v3525
    %v3534 = vpack.c.bf16 %v3526, %v3526
    %v3535 = vpack.c.bf16 %v3527, %v3527
    %v3536 = vpack.c.bf16 %v3528, %v3528
    %v3537 = vpack.c.bf16 %v3529, %v3529
    %v3538 = vpack.c.bf16 %v3530, %v3530
    %v3539 = vpack.c.bf16 %v3531, %v3531
    %v3540 = vpack.c.bf16 %v3532, %v3532
    %v3541 = vpack.c.bf16 %v3533, %v3533
    %v3542 = vld [vmem:[#allocation6] sm:$0xff]
    %v3543 = vld [vmem:[#allocation6 + $0x8] sm:$0xff]
    %v3544 = vld [vmem:[#allocation6 + $0x10] sm:$0xff]
    %v3545 = vld [vmem:[#allocation6 + $0x18] sm:$0xff]
    %v3546 = vld [vmem:[#allocation6 + $0x20] sm:$0xff]
    %v3547 = vld [vmem:[#allocation6 + $0x28] sm:$0xff]
    %v3548 = vld [vmem:[#allocation6 + $0x30] sm:$0xff]
    %v3549 = vld [vmem:[#allocation6 + $0x38] sm:$0xff]
    %v3550 = vld [vmem:[#allocation6 + $0x40] sm:$0xff]
    %v3551 = vld [vmem:[#allocation6 + $0x48] sm:$0xff]
    %v3552 = vld [vmem:[#allocation6 + $0x50] sm:$0xff]
    %v3553 = vld [vmem:[#allocation6 + $0x58] sm:$0xff]
    %v3554 = vld [vmem:[#allocation6 + $0x60] sm:$0xff]
    %v3555 = vld [vmem:[#allocation6 + $0x68] sm:$0xff]
    %v3556 = vld [vmem:[#allocation6 + $0x70] sm:$0xff]
    %v3557 = vld [vmem:[#allocation6 + $0x78] sm:$0xff]
    %v3558 = vld [vmem:[#allocation6 + $0x80] sm:$0xff]
    %v3559 = vld [vmem:[#allocation6 + $0x88] sm:$0xff]
    %v3560 = vld [vmem:[#allocation6 + $0x90] sm:$0xff]
    %v3561 = vld [vmem:[#allocation6 + $0x98] sm:$0xff]
    %v3562 = vld [vmem:[#allocation6 + $0xa0] sm:$0xff]
    %v3563 = vld [vmem:[#allocation6 + $0xa8] sm:$0xff]
    %v3564 = vld [vmem:[#allocation6 + $0xb0] sm:$0xff]
    %v3565 = vld [vmem:[#allocation6 + $0xb8] sm:$0xff]
    %v3566 = vld [vmem:[#allocation6 + $0xc0] sm:$0xff]
    %v3567 = vld [vmem:[#allocation6 + $0xc8] sm:$0xff]
    %v3568 = vld [vmem:[#allocation6 + $0xd0] sm:$0xff]
    %v3569 = vld [vmem:[#allocation6 + $0xd8] sm:$0xff]
    %v3570 = vld [vmem:[#allocation6 + $0xe0] sm:$0xff]
    %v3571 = vld [vmem:[#allocation6 + $0xe8] sm:$0xff]
    %v3572 = vld [vmem:[#allocation6 + $0xf0] sm:$0xff]
    %v3573 = vld [vmem:[#allocation6 + $0xf8] sm:$0xff]
    %v3574 = vld [vmem:[#allocation6 + $0x100] sm:$0xff]
    %v3575 = vld [vmem:[#allocation6 + $0x108] sm:$0xff]
    %v3576 = vld [vmem:[#allocation6 + $0x110] sm:$0xff]
    %v3577 = vld [vmem:[#allocation6 + $0x118] sm:$0xff]
    %v3578 = vld [vmem:[#allocation6 + $0x120] sm:$0xff]
    %v3579 = vld [vmem:[#allocation6 + $0x128] sm:$0xff]
    %v3580 = vld [vmem:[#allocation6 + $0x130] sm:$0xff]
    %v3581 = vld [vmem:[#allocation6 + $0x138] sm:$0xff]
    %v3582 = vld [vmem:[#allocation6 + $0x140] sm:$0xff]
    %v3583 = vld [vmem:[#allocation6 + $0x148] sm:$0xff]
    %v3584 = vld [vmem:[#allocation6 + $0x150] sm:$0xff]
    %v3585 = vld [vmem:[#allocation6 + $0x158] sm:$0xff]
    %v3586 = vld [vmem:[#allocation6 + $0x160] sm:$0xff]
    %v3587 = vld [vmem:[#allocation6 + $0x168] sm:$0xff]
    %v3588 = vld [vmem:[#allocation6 + $0x170] sm:$0xff]
    %v3589 = vld [vmem:[#allocation6 + $0x178] sm:$0xff]
    %v3590 = vld [vmem:[#allocation6 + $0x180] sm:$0xff]
    %v3591 = vld [vmem:[#allocation6 + $0x188] sm:$0xff]
    %v3592 = vld [vmem:[#allocation6 + $0x190] sm:$0xff]
    %v3593 = vld [vmem:[#allocation6 + $0x198] sm:$0xff]
    %v3594 = vld [vmem:[#allocation6 + $0x1a0] sm:$0xff]
    %v3595 = vld [vmem:[#allocation6 + $0x1a8] sm:$0xff]
    %v3596 = vld [vmem:[#allocation6 + $0x1b0] sm:$0xff]
    %v3597 = vld [vmem:[#allocation6 + $0x1b8] sm:$0xff]
    %v3598 = vld [vmem:[#allocation6 + $0x1c0] sm:$0xff]
    %v3599 = vld [vmem:[#allocation6 + $0x1c8] sm:$0xff]
    %v3600 = vld [vmem:[#allocation6 + $0x1d0] sm:$0xff]
    %v3601 = vld [vmem:[#allocation6 + $0x1d8] sm:$0xff]
    %v3602 = vld [vmem:[#allocation6 + $0x1e0] sm:$0xff]
    %v3603 = vld [vmem:[#allocation6 + $0x1e8] sm:$0xff]
    %v3604 = vld [vmem:[#allocation6 + $0x1f0] sm:$0xff]
    %v3605 = vld [vmem:[#allocation6 + $0x1f8] sm:$0xff]
    %v3606 = vld [vmem:[#allocation6 + $0x200] sm:$0xff]
    %v3607 = vld [vmem:[#allocation6 + $0x208] sm:$0xff]
    %v3608 = vld [vmem:[#allocation6 + $0x210] sm:$0xff]
    %v3609 = vld [vmem:[#allocation6 + $0x218] sm:$0xff]
    %v3610 = vld [vmem:[#allocation6 + $0x220] sm:$0xff]
    %v3611 = vld [vmem:[#allocation6 + $0x228] sm:$0xff]
    %v3612 = vld [vmem:[#allocation6 + $0x230] sm:$0xff]
    %v3613 = vld [vmem:[#allocation6 + $0x238] sm:$0xff]
    %v3614 = vld [vmem:[#allocation6 + $0x240] sm:$0xff]
    %v3615 = vld [vmem:[#allocation6 + $0x248] sm:$0xff]
    %v3616 = vld [vmem:[#allocation6 + $0x250] sm:$0xff]
    %v3617 = vld [vmem:[#allocation6 + $0x258] sm:$0xff]
    %v3618 = vld [vmem:[#allocation6 + $0x260] sm:$0xff]
    %v3619 = vld [vmem:[#allocation6 + $0x268] sm:$0xff]
    %v3620 = vld [vmem:[#allocation6 + $0x270] sm:$0xff]
    %v3621 = vld [vmem:[#allocation6 + $0x278] sm:$0xff]
    %v3622 = vld [vmem:[#allocation6 + $0x280] sm:$0xff]
    %v3623 = vld [vmem:[#allocation6 + $0x288] sm:$0xff]
    %v3624 = vld [vmem:[#allocation6 + $0x290] sm:$0xff]
    %v3625 = vld [vmem:[#allocation6 + $0x298] sm:$0xff]
    %v3626 = vld [vmem:[#allocation6 + $0x2a0] sm:$0xff]
    %v3627 = vld [vmem:[#allocation6 + $0x2a8] sm:$0xff]
    %v3628 = vld [vmem:[#allocation6 + $0x2b0] sm:$0xff]
    %v3629 = vld [vmem:[#allocation6 + $0x2b8] sm:$0xff]
    %v3630 = vld [vmem:[#allocation6 + $0x2c0] sm:$0xff]
    %v3631 = vld [vmem:[#allocation6 + $0x2c8] sm:$0xff]
    %v3632 = vld [vmem:[#allocation6 + $0x2d0] sm:$0xff]
    %v3633 = vld [vmem:[#allocation6 + $0x2d8] sm:$0xff]
    %v3634 = vld [vmem:[#allocation6 + $0x2e0] sm:$0xff]
    %v3635 = vld [vmem:[#allocation6 + $0x2e8] sm:$0xff]
    %v3636 = vld [vmem:[#allocation6 + $0x2f0] sm:$0xff]
    %v3637 = vld [vmem:[#allocation6 + $0x2f8] sm:$0xff]
    %v3638 = vld [vmem:[#allocation6 + $0x300] sm:$0xff]
    %v3639 = vld [vmem:[#allocation6 + $0x308] sm:$0xff]
    %v3640 = vld [vmem:[#allocation6 + $0x310] sm:$0xff]
    %v3641 = vld [vmem:[#allocation6 + $0x318] sm:$0xff]
    %v3642 = vld [vmem:[#allocation6 + $0x320] sm:$0xff]
    %v3643 = vld [vmem:[#allocation6 + $0x328] sm:$0xff]
    %v3644 = vld [vmem:[#allocation6 + $0x330] sm:$0xff]
    %v3645 = vld [vmem:[#allocation6 + $0x338] sm:$0xff]
    %v3646 = vld [vmem:[#allocation6 + $0x340] sm:$0xff]
    %v3647 = vld [vmem:[#allocation6 + $0x348] sm:$0xff]
    %v3648 = vld [vmem:[#allocation6 + $0x350] sm:$0xff]
    %v3649 = vld [vmem:[#allocation6 + $0x358] sm:$0xff]
    %v3650 = vld [vmem:[#allocation6 + $0x360] sm:$0xff]
    %v3651 = vld [vmem:[#allocation6 + $0x368] sm:$0xff]
    %v3652 = vld [vmem:[#allocation6 + $0x370] sm:$0xff]
    %v3653 = vld [vmem:[#allocation6 + $0x378] sm:$0xff]
    %v3654 = vld [vmem:[#allocation6 + $0x380] sm:$0xff]
    %v3655 = vld [vmem:[#allocation6 + $0x388] sm:$0xff]
    %v3656 = vld [vmem:[#allocation6 + $0x390] sm:$0xff]
    %v3657 = vld [vmem:[#allocation6 + $0x398] sm:$0xff]
    %v3658 = vld [vmem:[#allocation6 + $0x3a0] sm:$0xff]
    %v3659 = vld [vmem:[#allocation6 + $0x3a8] sm:$0xff]
    %v3660 = vld [vmem:[#allocation6 + $0x3b0] sm:$0xff]
    %v3661 = vld [vmem:[#allocation6 + $0x3b8] sm:$0xff]
    %v3662 = vld [vmem:[#allocation6 + $0x3c0] sm:$0xff]
    %v3663 = vld [vmem:[#allocation6 + $0x3c8] sm:$0xff]
    %v3664 = vld [vmem:[#allocation6 + $0x3d0] sm:$0xff]
    %v3665 = vld [vmem:[#allocation6 + $0x3d8] sm:$0xff]
    %v3666 = vld [vmem:[#allocation6 + $0x3e0] sm:$0xff]
    %v3667 = vld [vmem:[#allocation6 + $0x3e8] sm:$0xff]
    %v3668 = vld [vmem:[#allocation6 + $0x3f0] sm:$0xff]
    %v3669 = vld [vmem:[#allocation6 + $0x3f8] sm:$0xff]
    %v3670 = vld [vmem:[#allocation7] sm:$0x3]
    %v3672 = vlaneseq
    %v3673 = vshrl.u32 %v3672, 7
    %v3674 = vsub.s32 0, %v3673
    %v3675 = vrot.slane %v3670, %v3674
    %v3676 = vlaneseq
    %v3677 = vshrl.u32 %v3676, 7
    %v3678 = vsub.s32 1, %v3677
    %v3679 = vrot.slane %v3670, %v3678
    %v3810 = vunpack.c.l.b16 %v3542
    %v3811 = vunpack.c.h.b16 %v3542
    %v3812 = vunpack.c.l.b16 %v3543
    %v3813 = vunpack.c.h.b16 %v3543
    %v3814 = vunpack.c.l.b16 %v3544
    %v3815 = vunpack.c.h.b16 %v3544
    %v3816 = vunpack.c.l.b16 %v3545
    %v3817 = vunpack.c.h.b16 %v3545
    %v3818 = vunpack.c.l.b16 %v3546
    %v3819 = vunpack.c.h.b16 %v3546
    %v3820 = vunpack.c.l.b16 %v3547
    %v3821 = vunpack.c.h.b16 %v3547
    %v3822 = vunpack.c.l.b16 %v3548
    %v3823 = vunpack.c.h.b16 %v3548
    %v3824 = vunpack.c.l.b16 %v3549
    %v3825 = vunpack.c.h.b16 %v3549
    %v3826 = vunpack.c.l.b16 %v3550
    %v3827 = vunpack.c.h.b16 %v3550
    %v3828 = vunpack.c.l.b16 %v3551
    %v3829 = vunpack.c.h.b16 %v3551
    %v3830 = vunpack.c.l.b16 %v3552
    %v3831 = vunpack.c.h.b16 %v3552
    %v3832 = vunpack.c.l.b16 %v3553
    %v3833 = vunpack.c.h.b16 %v3553
    %v3834 = vunpack.c.l.b16 %v3554
    %v3835 = vunpack.c.h.b16 %v3554
    %v3836 = vunpack.c.l.b16 %v3555
    %v3837 = vunpack.c.h.b16 %v3555
    %v3838 = vunpack.c.l.b16 %v3556
    %v3839 = vunpack.c.h.b16 %v3556
    %v3840 = vunpack.c.l.b16 %v3557
    %v3841 = vunpack.c.h.b16 %v3557
    %v3842 = vunpack.c.l.b16 %v3558
    %v3843 = vunpack.c.h.b16 %v3558
    %v3844 = vunpack.c.l.b16 %v3559
    %v3845 = vunpack.c.h.b16 %v3559
    %v3846 = vunpack.c.l.b16 %v3560
    %v3847 = vunpack.c.h.b16 %v3560
    %v3848 = vunpack.c.l.b16 %v3561
    %v3849 = vunpack.c.h.b16 %v3561
    %v3850 = vunpack.c.l.b16 %v3562
    %v3851 = vunpack.c.h.b16 %v3562
    %v3852 = vunpack.c.l.b16 %v3563
    %v3853 = vunpack.c.h.b16 %v3563
    %v3854 = vunpack.c.l.b16 %v3564
    %v3855 = vunpack.c.h.b16 %v3564
    %v3856 = vunpack.c.l.b16 %v3565
    %v3857 = vunpack.c.h.b16 %v3565
    %v3858 = vunpack.c.l.b16 %v3566
    %v3859 = vunpack.c.h.b16 %v3566
    %v3860 = vunpack.c.l.b16 %v3567
    %v3861 = vunpack.c.h.b16 %v3567
    %v3862 = vunpack.c.l.b16 %v3568
    %v3863 = vunpack.c.h.b16 %v3568
    %v3864 = vunpack.c.l.b16 %v3569
    %v3865 = vunpack.c.h.b16 %v3569
    %v3866 = vunpack.c.l.b16 %v3570
    %v3867 = vunpack.c.h.b16 %v3570
    %v3868 = vunpack.c.l.b16 %v3571
    %v3869 = vunpack.c.h.b16 %v3571
    %v3870 = vunpack.c.l.b16 %v3572
    %v3871 = vunpack.c.h.b16 %v3572
    %v3872 = vunpack.c.l.b16 %v3573
    %v3873 = vunpack.c.h.b16 %v3573
    %v3874 = vunpack.c.l.b16 %v3574
    %v3875 = vunpack.c.h.b16 %v3574
    %v3876 = vunpack.c.l.b16 %v3575
    %v3877 = vunpack.c.h.b16 %v3575
    %v3878 = vunpack.c.l.b16 %v3576
    %v3879 = vunpack.c.h.b16 %v3576
    %v3880 = vunpack.c.l.b16 %v3577
    %v3881 = vunpack.c.h.b16 %v3577
    %v3882 = vunpack.c.l.b16 %v3578
    %v3883 = vunpack.c.h.b16 %v3578
    %v3884 = vunpack.c.l.b16 %v3579
    %v3885 = vunpack.c.h.b16 %v3579
    %v3886 = vunpack.c.l.b16 %v3580
    %v3887 = vunpack.c.h.b16 %v3580
    %v3888 = vunpack.c.l.b16 %v3581
    %v3889 = vunpack.c.h.b16 %v3581
    %v3890 = vunpack.c.l.b16 %v3582
    %v3891 = vunpack.c.h.b16 %v3582
    %v3892 = vunpack.c.l.b16 %v3583
    %v3893 = vunpack.c.h.b16 %v3583
    %v3894 = vunpack.c.l.b16 %v3584
    %v3895 = vunpack.c.h.b16 %v3584
    %v3896 = vunpack.c.l.b16 %v3585
    %v3897 = vunpack.c.h.b16 %v3585
    %v3898 = vunpack.c.l.b16 %v3586
    %v3899 = vunpack.c.h.b16 %v3586
    %v3900 = vunpack.c.l.b16 %v3587
    %v3901 = vunpack.c.h.b16 %v3587
    %v3902 = vunpack.c.l.b16 %v3588
    %v3903 = vunpack.c.h.b16 %v3588
    %v3904 = vunpack.c.l.b16 %v3589
    %v3905 = vunpack.c.h.b16 %v3589
    %v3906 = vunpack.c.l.b16 %v3590
    %v3907 = vunpack.c.h.b16 %v3590
    %v3908 = vunpack.c.l.b16 %v3591
    %v3909 = vunpack.c.h.b16 %v3591
    %v3910 = vunpack.c.l.b16 %v3592
    %v3911 = vunpack.c.h.b16 %v3592
    %v3912 = vunpack.c.l.b16 %v3593
    %v3913 = vunpack.c.h.b16 %v3593
    %v3914 = vunpack.c.l.b16 %v3594
    %v3915 = vunpack.c.h.b16 %v3594
    %v3916 = vunpack.c.l.b16 %v3595
    %v3917 = vunpack.c.h.b16 %v3595
    %v3918 = vunpack.c.l.b16 %v3596
    %v3919 = vunpack.c.h.b16 %v3596
    %v3920 = vunpack.c.l.b16 %v3597
    %v3921 = vunpack.c.h.b16 %v3597
    %v3922 = vunpack.c.l.b16 %v3598
    %v3923 = vunpack.c.h.b16 %v3598
    %v3924 = vunpack.c.l.b16 %v3599
    %v3925 = vunpack.c.h.b16 %v3599
    %v3926 = vunpack.c.l.b16 %v3600
    %v3927 = vunpack.c.h.b16 %v3600
    %v3928 = vunpack.c.l.b16 %v3601
    %v3929 = vunpack.c.h.b16 %v3601
    %v3930 = vunpack.c.l.b16 %v3602
    %v3931 = vunpack.c.h.b16 %v3602
    %v3932 = vunpack.c.l.b16 %v3603
    %v3933 = vunpack.c.h.b16 %v3603
    %v3934 = vunpack.c.l.b16 %v3604
    %v3935 = vunpack.c.h.b16 %v3604
    %v3936 = vunpack.c.l.b16 %v3605
    %v3937 = vunpack.c.h.b16 %v3605
    %v3938 = vunpack.c.l.b16 %v3606
    %v3939 = vunpack.c.h.b16 %v3606
    %v3940 = vunpack.c.l.b16 %v3607
    %v3941 = vunpack.c.h.b16 %v3607
    %v3942 = vunpack.c.l.b16 %v3608
    %v3943 = vunpack.c.h.b16 %v3608
    %v3944 = vunpack.c.l.b16 %v3609
    %v3945 = vunpack.c.h.b16 %v3609
    %v3946 = vunpack.c.l.b16 %v3610
    %v3947 = vunpack.c.h.b16 %v3610
    %v3948 = vunpack.c.l.b16 %v3611
    %v3949 = vunpack.c.h.b16 %v3611
    %v3950 = vunpack.c.l.b16 %v3612
    %v3951 = vunpack.c.h.b16 %v3612
    %v3952 = vunpack.c.l.b16 %v3613
    %v3953 = vunpack.c.h.b16 %v3613
    %v3954 = vunpack.c.l.b16 %v3614
    %v3955 = vunpack.c.h.b16 %v3614
    %v3956 = vunpack.c.l.b16 %v3615
    %v3957 = vunpack.c.h.b16 %v3615
    %v3958 = vunpack.c.l.b16 %v3616
    %v3959 = vunpack.c.h.b16 %v3616
    %v3960 = vunpack.c.l.b16 %v3617
    %v3961 = vunpack.c.h.b16 %v3617
    %v3962 = vunpack.c.l.b16 %v3618
    %v3963 = vunpack.c.h.b16 %v3618
    %v3964 = vunpack.c.l.b16 %v3619
    %v3965 = vunpack.c.h.b16 %v3619
    %v3966 = vunpack.c.l.b16 %v3620
    %v3967 = vunpack.c.h.b16 %v3620
    %v3968 = vunpack.c.l.b16 %v3621
    %v3969 = vunpack.c.h.b16 %v3621
    %v3970 = vunpack.c.l.b16 %v3622
    %v3971 = vunpack.c.h.b16 %v3622
    %v3972 = vunpack.c.l.b16 %v3623
    %v3973 = vunpack.c.h.b16 %v3623
    %v3974 = vunpack.c.l.b16 %v3624
    %v3975 = vunpack.c.h.b16 %v3624
    %v3976 = vunpack.c.l.b16 %v3625
    %v3977 = vunpack.c.h.b16 %v3625
    %v3978 = vunpack.c.l.b16 %v3626
    %v3979 = vunpack.c.h.b16 %v3626
    %v3980 = vunpack.c.l.b16 %v3627
    %v3981 = vunpack.c.h.b16 %v3627
    %v3982 = vunpack.c.l.b16 %v3628
    %v3983 = vunpack.c.h.b16 %v3628
    %v3984 = vunpack.c.l.b16 %v3629
    %v3985 = vunpack.c.h.b16 %v3629
    %v3986 = vunpack.c.l.b16 %v3630
    %v3987 = vunpack.c.h.b16 %v3630
    %v3988 = vunpack.c.l.b16 %v3631
    %v3989 = vunpack.c.h.b16 %v3631
    %v3990 = vunpack.c.l.b16 %v3632
    %v3991 = vunpack.c.h.b16 %v3632
    %v3992 = vunpack.c.l.b16 %v3633
    %v3993 = vunpack.c.h.b16 %v3633
    %v3994 = vunpack.c.l.b16 %v3634
    %v3995 = vunpack.c.h.b16 %v3634
    %v3996 = vunpack.c.l.b16 %v3635
    %v3997 = vunpack.c.h.b16 %v3635
    %v3998 = vunpack.c.l.b16 %v3636
    %v3999 = vunpack.c.h.b16 %v3636
    %v4000 = vunpack.c.l.b16 %v3637
    %v4001 = vunpack.c.h.b16 %v3637
    %v4002 = vunpack.c.l.b16 %v3638
    %v4003 = vunpack.c.h.b16 %v3638
    %v4004 = vunpack.c.l.b16 %v3639
    %v4005 = vunpack.c.h.b16 %v3639
    %v4006 = vunpack.c.l.b16 %v3640
    %v4007 = vunpack.c.h.b16 %v3640
    %v4008 = vunpack.c.l.b16 %v3641
    %v4009 = vunpack.c.h.b16 %v3641
    %v4010 = vunpack.c.l.b16 %v3642
    %v4011 = vunpack.c.h.b16 %v3642
    %v4012 = vunpack.c.l.b16 %v3643
    %v4013 = vunpack.c.h.b16 %v3643
    %v4014 = vunpack.c.l.b16 %v3644
    %v4015 = vunpack.c.h.b16 %v3644
    %v4016 = vunpack.c.l.b16 %v3645
    %v4017 = vunpack.c.h.b16 %v3645
    %v4018 = vunpack.c.l.b16 %v3646
    %v4019 = vunpack.c.h.b16 %v3646
    %v4020 = vunpack.c.l.b16 %v3647
    %v4021 = vunpack.c.h.b16 %v3647
    %v4022 = vunpack.c.l.b16 %v3648
    %v4023 = vunpack.c.h.b16 %v3648
    %v4024 = vunpack.c.l.b16 %v3649
    %v4025 = vunpack.c.h.b16 %v3649
    %v4026 = vunpack.c.l.b16 %v3650
    %v4027 = vunpack.c.h.b16 %v3650
    %v4028 = vunpack.c.l.b16 %v3651
    %v4029 = vunpack.c.h.b16 %v3651
    %v4030 = vunpack.c.l.b16 %v3652
    %v4031 = vunpack.c.h.b16 %v3652
    %v4032 = vunpack.c.l.b16 %v3653
    %v4033 = vunpack.c.h.b16 %v3653
    %v4034 = vunpack.c.l.b16 %v3654
    %v4035 = vunpack.c.h.b16 %v3654
    %v4036 = vunpack.c.l.b16 %v3655
    %v4037 = vunpack.c.h.b16 %v3655
    %v4038 = vunpack.c.l.b16 %v3656
    %v4039 = vunpack.c.h.b16 %v3656
    %v4040 = vunpack.c.l.b16 %v3657
    %v4041 = vunpack.c.h.b16 %v3657
    %v4042 = vunpack.c.l.b16 %v3658
    %v4043 = vunpack.c.h.b16 %v3658
    %v4044 = vunpack.c.l.b16 %v3659
    %v4045 = vunpack.c.h.b16 %v3659
    %v4046 = vunpack.c.l.b16 %v3660
    %v4047 = vunpack.c.h.b16 %v3660
    %v4048 = vunpack.c.l.b16 %v3661
    %v4049 = vunpack.c.h.b16 %v3661
    %v4050 = vunpack.c.l.b16 %v3662
    %v4051 = vunpack.c.h.b16 %v3662
    %v4052 = vunpack.c.l.b16 %v3663
    %v4053 = vunpack.c.h.b16 %v3663
    %v4054 = vunpack.c.l.b16 %v3664
    %v4055 = vunpack.c.h.b16 %v3664
    %v4056 = vunpack.c.l.b16 %v3665
    %v4057 = vunpack.c.h.b16 %v3665
    %v4058 = vunpack.c.l.b16 %v3666
    %v4059 = vunpack.c.h.b16 %v3666
    %v4060 = vunpack.c.l.b16 %v3667
    %v4061 = vunpack.c.h.b16 %v3667
    %v4062 = vunpack.c.l.b16 %v3668
    %v4063 = vunpack.c.h.b16 %v3668
    %v4064 = vunpack.c.l.b16 %v3669
    %v4065 = vunpack.c.h.b16 %v3669
    %v4066 = vpack.c.b16 %v3812, %v3810
    %v4067 = vpack.c.b16 %v3813, %v3811
    %v4068 = vpack.c.b16 %v3816, %v3814
    %v4069 = vpack.c.b16 %v3817, %v3815
    %v4070 = vpack.c.b16 %v3820, %v3818
    %v4071 = vpack.c.b16 %v3821, %v3819
    %v4072 = vpack.c.b16 %v3824, %v3822
    %v4073 = vpack.c.b16 %v3825, %v3823
    %v4074 = vpack.c.b16 %v3828, %v3826
    %v4075 = vpack.c.b16 %v3829, %v3827
    %v4076 = vpack.c.b16 %v3832, %v3830
    %v4077 = vpack.c.b16 %v3833, %v3831
    %v4078 = vpack.c.b16 %v3836, %v3834
    %v4079 = vpack.c.b16 %v3837, %v3835
    %v4080 = vpack.c.b16 %v3840, %v3838
    %v4081 = vpack.c.b16 %v3841, %v3839
    %v4082 = vpack.c.b16 %v3844, %v3842
    %v4083 = vpack.c.b16 %v3845, %v3843
    %v4084 = vpack.c.b16 %v3848, %v3846
    %v4085 = vpack.c.b16 %v3849, %v3847
    %v4086 = vpack.c.b16 %v3852, %v3850
    %v4087 = vpack.c.b16 %v3853, %v3851
    %v4088 = vpack.c.b16 %v3856, %v3854
    %v4089 = vpack.c.b16 %v3857, %v3855
    %v4090 = vpack.c.b16 %v3860, %v3858
    %v4091 = vpack.c.b16 %v3861, %v3859
    %v4092 = vpack.c.b16 %v3864, %v3862
    %v4093 = vpack.c.b16 %v3865, %v3863
    %v4094 = vpack.c.b16 %v3868, %v3866
    %v4095 = vpack.c.b16 %v3869, %v3867
    %v4096 = vpack.c.b16 %v3872, %v3870
    %v4097 = vpack.c.b16 %v3873, %v3871
    %v4098 = vpack.c.b16 %v3876, %v3874
    %v4099 = vpack.c.b16 %v3877, %v3875
    %v4100 = vpack.c.b16 %v3880, %v3878
    %v4101 = vpack.c.b16 %v3881, %v3879
    %v4102 = vpack.c.b16 %v3884, %v3882
    %v4103 = vpack.c.b16 %v3885, %v3883
    %v4104 = vpack.c.b16 %v3888, %v3886
    %v4105 = vpack.c.b16 %v3889, %v3887
    %v4106 = vpack.c.b16 %v3892, %v3890
    %v4107 = vpack.c.b16 %v3893, %v3891
    %v4108 = vpack.c.b16 %v3896, %v3894
    %v4109 = vpack.c.b16 %v3897, %v3895
    %v4110 = vpack.c.b16 %v3900, %v3898
    %v4111 = vpack.c.b16 %v3901, %v3899
    %v4112 = vpack.c.b16 %v3904, %v3902
    %v4113 = vpack.c.b16 %v3905, %v3903
    %v4114 = vpack.c.b16 %v3908, %v3906
    %v4115 = vpack.c.b16 %v3909, %v3907
    %v4116 = vpack.c.b16 %v3912, %v3910
    %v4117 = vpack.c.b16 %v3913, %v3911
    %v4118 = vpack.c.b16 %v3916, %v3914
    %v4119 = vpack.c.b16 %v3917, %v3915
    %v4120 = vpack.c.b16 %v3920, %v3918
    %v4121 = vpack.c.b16 %v3921, %v3919
    %v4122 = vpack.c.b16 %v3924, %v3922
    %v4123 = vpack.c.b16 %v3925, %v3923
    %v4124 = vpack.c.b16 %v3928, %v3926
    %v4125 = vpack.c.b16 %v3929, %v3927
    %v4126 = vpack.c.b16 %v3932, %v3930
    %v4127 = vpack.c.b16 %v3933, %v3931
    %v4128 = vpack.c.b16 %v3936, %v3934
    %v4129 = vpack.c.b16 %v3937, %v3935
    %v4130 = vpack.c.b16 %v3940, %v3938
    %v4131 = vpack.c.b16 %v3941, %v3939
    %v4132 = vpack.c.b16 %v3944, %v3942
    %v4133 = vpack.c.b16 %v3945, %v3943
    %v4134 = vpack.c.b16 %v3948, %v3946
    %v4135 = vpack.c.b16 %v3949, %v3947
    %v4136 = vpack.c.b16 %v3952, %v3950
    %v4137 = vpack.c.b16 %v3953, %v3951
    %v4138 = vpack.c.b16 %v3956, %v3954
    %v4139 = vpack.c.b16 %v3957, %v3955
    %v4140 = vpack.c.b16 %v3960, %v3958
    %v4141 = vpack.c.b16 %v3961, %v3959
    %v4142 = vpack.c.b16 %v3964, %v3962
    %v4143 = vpack.c.b16 %v3965, %v3963
    %v4144 = vpack.c.b16 %v3968, %v3966
    %v4145 = vpack.c.b16 %v3969, %v3967
    %v4146 = vpack.c.b16 %v3972, %v3970
    %v4147 = vpack.c.b16 %v3973, %v3971
    %v4148 = vpack.c.b16 %v3976, %v3974
    %v4149 = vpack.c.b16 %v3977, %v3975
    %v4150 = vpack.c.b16 %v3980, %v3978
    %v4151 = vpack.c.b16 %v3981, %v3979
    %v4152 = vpack.c.b16 %v3984, %v3982
    %v4153 = vpack.c.b16 %v3985, %v3983
    %v4154 = vpack.c.b16 %v3988, %v3986
    %v4155 = vpack.c.b16 %v3989, %v3987
    %v4156 = vpack.c.b16 %v3992, %v3990
    %v4157 = vpack.c.b16 %v3993, %v3991
    %v4158 = vpack.c.b16 %v3996, %v3994
    %v4159 = vpack.c.b16 %v3997, %v3995
    %v4160 = vpack.c.b16 %v4000, %v3998
    %v4161 = vpack.c.b16 %v4001, %v3999
    %v4162 = vpack.c.b16 %v4004, %v4002
    %v4163 = vpack.c.b16 %v4005, %v4003
    %v4164 = vpack.c.b16 %v4008, %v4006
    %v4165 = vpack.c.b16 %v4009, %v4007
    %v4166 = vpack.c.b16 %v4012, %v4010
    %v4167 = vpack.c.b16 %v4013, %v4011
    %v4168 = vpack.c.b16 %v4016, %v4014
    %v4169 = vpack.c.b16 %v4017, %v4015
    %v4170 = vpack.c.b16 %v4020, %v4018
    %v4171 = vpack.c.b16 %v4021, %v4019
    %v4172 = vpack.c.b16 %v4024, %v4022
    %v4173 = vpack.c.b16 %v4025, %v4023
    %v4174 = vpack.c.b16 %v4028, %v4026
    %v4175 = vpack.c.b16 %v4029, %v4027
    %v4176 = vpack.c.b16 %v4032, %v4030
    %v4177 = vpack.c.b16 %v4033, %v4031
    %v4178 = vpack.c.b16 %v4036, %v4034
    %v4179 = vpack.c.b16 %v4037, %v4035
    %v4180 = vpack.c.b16 %v4040, %v4038
    %v4181 = vpack.c.b16 %v4041, %v4039
    %v4182 = vpack.c.b16 %v4044, %v4042
    %v4183 = vpack.c.b16 %v4045, %v4043
    %v4184 = vpack.c.b16 %v4048, %v4046
    %v4185 = vpack.c.b16 %v4049, %v4047
    %v4186 = vpack.c.b16 %v4052, %v4050
    %v4187 = vpack.c.b16 %v4053, %v4051
    %v4188 = vpack.c.b16 %v4056, %v4054
    %v4189 = vpack.c.b16 %v4057, %v4055
    %v4190 = vpack.c.b16 %v4060, %v4058
    %v4191 = vpack.c.b16 %v4061, %v4059
    %v4192 = vpack.c.b16 %v4064, %v4062
    %v4193 = vpack.c.b16 %v4065, %v4063
    %4322 = vmatprep.subr.bf16.mxu0 %v4081
    %4323 = vmatpush1.bf16.msra.mxu0 %v4080
    %4324 = vmatprep.subr.bf16.mxu0 %v4079
    %4325 = vmatpush1.bf16.msra.mxu0 %v4078
    %4326 = vmatprep.subr.bf16.mxu0 %v4077
    %4327 = vmatpush1.bf16.msra.mxu0 %v4076
    %4328 = vmatprep.subr.bf16.mxu0 %v4075
    %4329 = vmatpush1.bf16.msra.mxu0 %v4074
    %4330 = vmatprep.subr.bf16.mxu0 %v4073
    %4331 = vmatpush1.bf16.msra.mxu0 %v4072
    %4332 = vmatprep.subr.bf16.mxu0 %v4071
    %4333 = vmatpush1.bf16.msra.mxu0 %v4070
    %4334 = vmatprep.subr.bf16.mxu0 %v4069
    %4335 = vmatpush1.bf16.msra.mxu0 %v4068
    %4336 = vmatprep.subr.bf16.mxu0 %v4067
    %4337 = vmatpush1.bf16.msra.mxu0 %v4066
    %4338 = vmatprep.subr.bf16.mxu0 %v4097
    %4339 = vmatpush2.bf16.msra.mxu0 %v4096
    %4340 = vmatprep.subr.bf16.mxu0 %v4095
    %4341 = vmatpush2.bf16.msra.mxu0 %v4094
    %4342 = vmatprep.subr.bf16.mxu0 %v4093
    %4343 = vmatpush2.bf16.msra.mxu0 %v4092
    %4344 = vmatprep.subr.bf16.mxu0 %v4091
    %4345 = vmatpush2.bf16.msra.mxu0 %v4090
    %4346 = vmatprep.subr.bf16.mxu0 %v4089
    %4347 = vmatpush2.bf16.msra.mxu0 %v4088
    %4348 = vmatprep.subr.bf16.mxu0 %v4087
    %4349 = vmatpush2.bf16.msra.mxu0 %v4086
    %4350 = vmatprep.subr.bf16.mxu0 %v4085
    %4351 = vmatpush2.bf16.msra.mxu0 %v4084
    %4352 = vmatprep.subr.bf16.mxu0 %v4083
    %4353 = vmatpush2.bf16.msra.mxu0 %v4082
    %4354 = vmatprep.mubr.bf16.mxu0 %v3535
    %4355 = vmatmul.mubr.bf16.gmra.mxu0 %v3534
    %v4356 = vpop.f32.mrf.mxu0
    %v4357 = vadd.f32 %v3675, %v4356
    %v4358 = vpop.f32.mrf.mxu0
    %v4359 = vadd.f32 %v3679, %v4358
    %v4360 = vpop.f32.mrf.mxu0
    %v4361 = vpop.f32.mrf.mxu0
    %4362 = vdwg.mxu0
    %4363 = vmatprep.subr.bf16.mxu0 %v4113
    %4364 = vmatpush1.bf16.msra.mxu0 %v4112
    %4365 = vmatprep.subr.bf16.mxu0 %v4111
    %4366 = vmatpush1.bf16.msra.mxu0 %v4110
    %4367 = vmatprep.subr.bf16.mxu0 %v4109
    %4368 = vmatpush1.bf16.msra.mxu0 %v4108
    %4369 = vmatprep.subr.bf16.mxu0 %v4107
    %4370 = vmatpush1.bf16.msra.mxu0 %v4106
    %4371 = vmatprep.subr.bf16.mxu0 %v4105
    %4372 = vmatpush1.bf16.msra.mxu0 %v4104
    %4373 = vmatprep.subr.bf16.mxu0 %v4103
    %4374 = vmatpush1.bf16.msra.mxu0 %v4102
    %4375 = vmatprep.subr.bf16.mxu0 %v4101
    %4376 = vmatpush1.bf16.msra.mxu0 %v4100
    %4377 = vmatprep.subr.bf16.mxu0 %v4099
    %4378 = vmatpush1.bf16.msra.mxu0 %v4098
    %4379 = vmatprep.subr.bf16.mxu0 %v4129
    %4380 = vmatpush2.bf16.msra.mxu0 %v4128
    %4381 = vmatprep.subr.bf16.mxu0 %v4127
    %4382 = vmatpush2.bf16.msra.mxu0 %v4126
    %4383 = vmatprep.subr.bf16.mxu0 %v4125
    %4384 = vmatpush2.bf16.msra.mxu0 %v4124
    %4385 = vmatprep.subr.bf16.mxu0 %v4123
    %4386 = vmatpush2.bf16.msra.mxu0 %v4122
    %4387 = vmatprep.subr.bf16.mxu0 %v4121
    %4388 = vmatpush2.bf16.msra.mxu0 %v4120
    %4389 = vmatprep.subr.bf16.mxu0 %v4119
    %4390 = vmatpush2.bf16.msra.mxu0 %v4118
    %4391 = vmatprep.subr.bf16.mxu0 %v4117
    %4392 = vmatpush2.bf16.msra.mxu0 %v4116
    %4393 = vmatprep.subr.bf16.mxu0 %v4115
    %4394 = vmatpush2.bf16.msra.mxu0 %v4114
    %4395 = vmatprep.mubr.bf16.mxu0 %v3537
    %4396 = vmatmul.mubr.bf16.gmra.mxu0 %v3536
    %v4397 = vpop.f32.mrf.mxu0
    %v4398 = vadd.f32 %v4357, %v4397
    %v4399 = vpop.f32.mrf.mxu0
    %v4400 = vadd.f32 %v4359, %v4399
    %v4401 = vpop.f32.mrf.mxu0
    %v4402 = vpop.f32.mrf.mxu0
    %4403 = vdwg.mxu0
    %4404 = vmatprep.subr.bf16.mxu0 %v4145
    %4405 = vmatpush1.bf16.msra.mxu0 %v4144
    %4406 = vmatprep.subr.bf16.mxu0 %v4143
    %4407 = vmatpush1.bf16.msra.mxu0 %v4142
    %4408 = vmatprep.subr.bf16.mxu0 %v4141
    %4409 = vmatpush1.bf16.msra.mxu0 %v4140
    %4410 = vmatprep.subr.bf16.mxu0 %v4139
    %4411 = vmatpush1.bf16.msra.mxu0 %v4138
    %4412 = vmatprep.subr.bf16.mxu0 %v4137
    %4413 = vmatpush1.bf16.msra.mxu0 %v4136
    %4414 = vmatprep.subr.bf16.mxu0 %v4135
    %4415 = vmatpush1.bf16.msra.mxu0 %v4134
    %4416 = vmatprep.subr.bf16.mxu0 %v4133
    %4417 = vmatpush1.bf16.msra.mxu0 %v4132
    %4418 = vmatprep.subr.bf16.mxu0 %v4131
    %4419 = vmatpush1.bf16.msra.mxu0 %v4130
    %4420 = vmatprep.subr.bf16.mxu0 %v4161
    %4421 = vmatpush2.bf16.msra.mxu0 %v4160
    %4422 = vmatprep.subr.bf16.mxu0 %v4159
    %4423 = vmatpush2.bf16.msra.mxu0 %v4158
    %4424 = vmatprep.subr.bf16.mxu0 %v4157
    %4425 = vmatpush2.bf16.msra.mxu0 %v4156
    %4426 = vmatprep.subr.bf16.mxu0 %v4155
    %4427 = vmatpush2.bf16.msra.mxu0 %v4154
    %4428 = vmatprep.subr.bf16.mxu0 %v4153
    %4429 = vmatpush2.bf16.msra.mxu0 %v4152
    %4430 = vmatprep.subr.bf16.mxu0 %v4151
    %4431 = vmatpush2.bf16.msra.mxu0 %v4150
    %4432 = vmatprep.subr.bf16.mxu0 %v4149
    %4433 = vmatpush2.bf16.msra.mxu0 %v4148
    %4434 = vmatprep.subr.bf16.mxu0 %v4147
    %4435 = vmatpush2.bf16.msra.mxu0 %v4146
    %4436 = vmatprep.mubr.bf16.mxu0 %v3539
    %4437 = vmatmul.mubr.bf16.gmra.mxu0 %v3538
    %v4438 = vpop.f32.mrf.mxu0
    %v4439 = vadd.f32 %v4398, %v4438
    %v4440 = vpop.f32.mrf.mxu0
    %v4441 = vadd.f32 %v4400, %v4440
    %v4442 = vpop.f32.mrf.mxu0
    %v4443 = vpop.f32.mrf.mxu0
    %4444 = vdwg.mxu0
    %4445 = vmatprep.subr.bf16.mxu0 %v4177
    %4446 = vmatpush1.bf16.msra.mxu0 %v4176
    %4447 = vmatprep.subr.bf16.mxu0 %v4175
    %4448 = vmatpush1.bf16.msra.mxu0 %v4174
    %4449 = vmatprep.subr.bf16.mxu0 %v4173
    %4450 = vmatpush1.bf16.msra.mxu0 %v4172
    %4451 = vmatprep.subr.bf16.mxu0 %v4171
    %4452 = vmatpush1.bf16.msra.mxu0 %v4170
    %4453 = vmatprep.subr.bf16.mxu0 %v4169
    %4454 = vmatpush1.bf16.msra.mxu0 %v4168
    %4455 = vmatprep.subr.bf16.mxu0 %v4167
    %4456 = vmatpush1.bf16.msra.mxu0 %v4166
    %4457 = vmatprep.subr.bf16.mxu0 %v4165
    %4458 = vmatpush1.bf16.msra.mxu0 %v4164
    %4459 = vmatprep.subr.bf16.mxu0 %v4163
    %4460 = vmatpush1.bf16.msra.mxu0 %v4162
    %4461 = vmatprep.subr.bf16.mxu0 %v4193
    %4462 = vmatpush2.bf16.msra.mxu0 %v4192
    %4463 = vmatprep.subr.bf16.mxu0 %v4191
    %4464 = vmatpush2.bf16.msra.mxu0 %v4190
    %4465 = vmatprep.subr.bf16.mxu0 %v4189
    %4466 = vmatpush2.bf16.msra.mxu0 %v4188
    %4467 = vmatprep.subr.bf16.mxu0 %v4187
    %4468 = vmatpush2.bf16.msra.mxu0 %v4186
    %4469 = vmatprep.subr.bf16.mxu0 %v4185
    %4470 = vmatpush2.bf16.msra.mxu0 %v4184
    %4471 = vmatprep.subr.bf16.mxu0 %v4183
    %4472 = vmatpush2.bf16.msra.mxu0 %v4182
    %4473 = vmatprep.subr.bf16.mxu0 %v4181
    %4474 = vmatpush2.bf16.msra.mxu0 %v4180
    %4475 = vmatprep.subr.bf16.mxu0 %v4179
    %4476 = vmatpush2.bf16.msra.mxu0 %v4178
    %4477 = vmatprep.mubr.bf16.mxu0 %v3541
    %4478 = vmatmul.mubr.bf16.gmra.mxu0 %v3540
    %v4479 = vpop.f32.mrf.mxu0
    %v4480 = vadd.f32 %v4439, %v4479
    %v4481 = vpop.f32.mrf.mxu0
    %v4482 = vadd.f32 %v4441, %v4481
    %v4483 = vpop.f32.mrf.mxu0
    %v4484 = vpop.f32.mrf.mxu0
    %4485 = vdwg.mxu0
    %v4486 = vmul.f32 %v4480, 0.2
    %v4487 = vmul.f32 %v4482, 0.2
    %v4488 = vmax.f32 %v4480, %v4486
    %v4489 = vmax.f32 %v4482, %v4487
    %v4490 = vpack.c.bf16 %v4488, %v4488
    %v4491 = vpack.c.bf16 %v4489, %v4489
    %v4492 = vld [vmem:[#allocation9] sm:$0xf]
    %v4493 = vld [vmem:[#allocation9 + $0x4] sm:$0xf]
    %v4494 = vld [vmem:[#allocation9 + $0x8] sm:$0xf]
    %v4495 = vld [vmem:[#allocation9 + $0xc] sm:$0xf]
    %v4496 = vld [vmem:[#allocation9 + $0x10] sm:$0xf]
    %v4497 = vld [vmem:[#allocation9 + $0x14] sm:$0xf]
    %v4498 = vld [vmem:[#allocation9 + $0x18] sm:$0xf]
    %v4499 = vld [vmem:[#allocation9 + $0x1c] sm:$0xf]
    %v4500 = vld [vmem:[#allocation9 + $0x20] sm:$0xf]
    %v4501 = vld [vmem:[#allocation9 + $0x24] sm:$0xf]
    %v4502 = vld [vmem:[#allocation9 + $0x28] sm:$0xf]
    %v4503 = vld [vmem:[#allocation9 + $0x2c] sm:$0xf]
    %v4504 = vld [vmem:[#allocation9 + $0x30] sm:$0xf]
    %v4505 = vld [vmem:[#allocation9 + $0x34] sm:$0xf]
    %v4506 = vld [vmem:[#allocation9 + $0x38] sm:$0xf]
    %v4507 = vld [vmem:[#allocation9 + $0x3c] sm:$0xf]
    %v4508 = vld [vmem:[#allocation9 + $0x40] sm:$0xf]
    %v4509 = vld [vmem:[#allocation9 + $0x44] sm:$0xf]
    %v4510 = vld [vmem:[#allocation9 + $0x48] sm:$0xf]
    %v4511 = vld [vmem:[#allocation9 + $0x4c] sm:$0xf]
    %v4512 = vld [vmem:[#allocation9 + $0x50] sm:$0xf]
    %v4513 = vld [vmem:[#allocation9 + $0x54] sm:$0xf]
    %v4514 = vld [vmem:[#allocation9 + $0x58] sm:$0xf]
    %v4515 = vld [vmem:[#allocation9 + $0x5c] sm:$0xf]
    %v4516 = vld [vmem:[#allocation9 + $0x60] sm:$0xf]
    %v4517 = vld [vmem:[#allocation9 + $0x64] sm:$0xf]
    %v4518 = vld [vmem:[#allocation9 + $0x68] sm:$0xf]
    %v4519 = vld [vmem:[#allocation9 + $0x6c] sm:$0xf]
    %v4520 = vld [vmem:[#allocation9 + $0x70] sm:$0xf]
    %v4521 = vld [vmem:[#allocation9 + $0x74] sm:$0xf]
    %v4522 = vld [vmem:[#allocation9 + $0x78] sm:$0xf]
    %v4523 = vld [vmem:[#allocation9 + $0x7c] sm:$0xf]
    %v4524 = vld [vmem:[#allocation10] sm:$0x1]
    %v4526 = vlaneseq
    %v4527 = vshrl.u32 %v4526, 7
    %v4528 = vsub.s32 0, %v4527
    %v4529 = vrot.slane %v4524, %v4528
    %v4563 = vunpack.c.l.b16 %v4492
    %v4564 = vunpack.c.l.b16 %v4493
    %v4565 = vunpack.c.l.b16 %v4494
    %v4566 = vunpack.c.l.b16 %v4495
    %v4567 = vunpack.c.l.b16 %v4496
    %v4568 = vunpack.c.l.b16 %v4497
    %v4569 = vunpack.c.l.b16 %v4498
    %v4570 = vunpack.c.l.b16 %v4499
    %v4571 = vunpack.c.l.b16 %v4500
    %v4572 = vunpack.c.l.b16 %v4501
    %v4573 = vunpack.c.l.b16 %v4502
    %v4574 = vunpack.c.l.b16 %v4503
    %v4575 = vunpack.c.l.b16 %v4504
    %v4576 = vunpack.c.l.b16 %v4505
    %v4577 = vunpack.c.l.b16 %v4506
    %v4578 = vunpack.c.l.b16 %v4507
    %v4579 = vunpack.c.l.b16 %v4508
    %v4580 = vunpack.c.l.b16 %v4509
    %v4581 = vunpack.c.l.b16 %v4510
    %v4582 = vunpack.c.l.b16 %v4511
    %v4583 = vunpack.c.l.b16 %v4512
    %v4584 = vunpack.c.l.b16 %v4513
    %v4585 = vunpack.c.l.b16 %v4514
    %v4586 = vunpack.c.l.b16 %v4515
    %v4587 = vunpack.c.l.b16 %v4516
    %v4588 = vunpack.c.l.b16 %v4517
    %v4589 = vunpack.c.l.b16 %v4518
    %v4590 = vunpack.c.l.b16 %v4519
    %v4591 = vunpack.c.l.b16 %v4520
    %v4592 = vunpack.c.l.b16 %v4521
    %v4593 = vunpack.c.l.b16 %v4522
    %v4594 = vunpack.c.l.b16 %v4523
    %v4595 = vpack.c.b16 %v4564, %v4563
    %v4596 = vpack.c.b16 %v4566, %v4565
    %v4597 = vpack.c.b16 %v4568, %v4567
    %v4598 = vpack.c.b16 %v4570, %v4569
    %v4599 = vpack.c.b16 %v4572, %v4571
    %v4600 = vpack.c.b16 %v4574, %v4573
    %v4601 = vpack.c.b16 %v4576, %v4575
    %v4602 = vpack.c.b16 %v4578, %v4577
    %v4603 = vpack.c.b16 %v4580, %v4579
    %v4604 = vpack.c.b16 %v4582, %v4581
    %v4605 = vpack.c.b16 %v4584, %v4583
    %v4606 = vpack.c.b16 %v4586, %v4585
    %v4607 = vpack.c.b16 %v4588, %v4587
    %v4608 = vpack.c.b16 %v4590, %v4589
    %v4609 = vpack.c.b16 %v4592, %v4591
    %v4610 = vpack.c.b16 %v4594, %v4593
    %4627 = vmatprep.subr.bf16.mxu0 0
    %4628 = vmatpush1.bf16.msra.mxu0 %v4602
    %4629 = vmatprep.subr.bf16.mxu0 0
    %4630 = vmatpush1.bf16.msra.mxu0 %v4601
    %4631 = vmatprep.subr.bf16.mxu0 0
    %4632 = vmatpush1.bf16.msra.mxu0 %v4600
    %4633 = vmatprep.subr.bf16.mxu0 0
    %4634 = vmatpush1.bf16.msra.mxu0 %v4599
    %4635 = vmatprep.subr.bf16.mxu0 0
    %4636 = vmatpush1.bf16.msra.mxu0 %v4598
    %4637 = vmatprep.subr.bf16.mxu0 0
    %4638 = vmatpush1.bf16.msra.mxu0 %v4597
    %4639 = vmatprep.subr.bf16.mxu0 0
    %4640 = vmatpush1.bf16.msra.mxu0 %v4596
    %4641 = vmatprep.subr.bf16.mxu0 0
    %4642 = vmatpush1.bf16.msra.mxu0 %v4595
    %4643 = vmatprep.subr.bf16.mxu0 0
    %4644 = vmatpush2.bf16.msra.mxu0 %v4610
    %4645 = vmatprep.subr.bf16.mxu0 0
    %4646 = vmatpush2.bf16.msra.mxu0 %v4609
    %4647 = vmatprep.subr.bf16.mxu0 0
    %4648 = vmatpush2.bf16.msra.mxu0 %v4608
    %4649 = vmatprep.subr.bf16.mxu0 0
    %4650 = vmatpush2.bf16.msra.mxu0 %v4607
    %4651 = vmatprep.subr.bf16.mxu0 0
    %4652 = vmatpush2.bf16.msra.mxu0 %v4606
    %4653 = vmatprep.subr.bf16.mxu0 0
    %4654 = vmatpush2.bf16.msra.mxu0 %v4605
    %4655 = vmatprep.subr.bf16.mxu0 0
    %4656 = vmatpush2.bf16.msra.mxu0 %v4604
    %4657 = vmatprep.subr.bf16.mxu0 0
    %4658 = vmatpush2.bf16.msra.mxu0 %v4603
    %4659 = vmatprep.mubr.bf16.mxu0 %v4491
    %4660 = vmatmul.mubr.bf16.gmra.mxu0 %v4490
    %v4661 = vpop.f32.mrf.mxu0
    %v4662 = vadd.f32 %v4529, %v4661
    %v4663 = vpop.f32.mrf.mxu0
    %v4664 = vpop.f32.mrf.mxu0
    %v4665 = vpop.f32.mrf.mxu0
    %4666 = vdwg.mxu0
    %4667 = vst [vmem:[%s7] sm:$0xff] %v4662
    // Predicated region
    $region54: #{discriminator_forward.1} parent=1 // pred_check
      _
    $region55: #{discriminator_forward.1} parent=1 // pred_check_branch
      %4669 = sbr.rel (0) target = $region57
    $region56: #{discriminator_forward.1} parent=1 // pred_region
      _
    $region57: #{discriminator_forward.1} parent=1 // pred_fallthru
      _
    // Predicated region
    $region58: #{discriminator_forward.1} parent=1 // pred_check
      _
    $region59: #{discriminator_forward.1} parent=1 // pred_check_branch
      %4671 = sbr.rel (0) target = $region61
    $region60: #{discriminator_forward.1} parent=1 // pred_region
      _
    $region61: #{discriminator_forward.1} parent=1 // pred_fallthru
      _
    %4672 = vsyncpa [#allocation3], 1
    %4673 = vsyncpa [#allocation5], 1
    %4674 = vsyncpa [#allocation8], 1
    %4675 = vsyncpa [#allocation11], 1

</llo_original>
